<compile_context>
chip_gen: v7x
topology: tpu7x:2x2x1
jax: 0.10.0
libtpu: 0.0.40
codegen_flags: <defaults>
</compile_context>

<pallas_src>
import functools

import jax
import jax.numpy as jnp
from jax.experimental import pallas as pl
from jax.experimental.pallas import tpu as pltpu

CIN_PAD = 8          # input channels 3 -> 8 (sublane pad, free in tiled layout)
FC_OUT_PAD = 128     # STN fc3 output 9 -> 128 (lane-dense store)
ENC_OUT_PAD = 128    # encoder conv3 output 100 -> 128 (lane-dense store)


# ----------------------------------------------------------------------------
# Shared body: 3-layer pointwise MLP (conv1 on the VPU, conv2/conv3 on the MXU)
# with a running max over the points axis.  Grid = (B, N // TN).
# ----------------------------------------------------------------------------
def _mlp_max_body(x_ref, b1_ref, w2_ref, b2_ref, w3_ref, b3_ref, acc_ref,
                  w1_row, d_real, relu_last):
    @pl.when(pl.program_id(1) == 0)
    def _():
        acc_ref[...] = jnp.full_like(acc_ref, -jnp.inf)

    # x block is (8, TN) f32 (channels on sublanes, points on lanes); transpose on the
    # XLU so the 64/128/1024-wide layers see points on sublanes, channels on lanes.
    x_t = jnp.transpose(x_ref[0])                          # (TN, 8) f32

    # conv1 + bn1 on the VPU: only d_real (=3) input channels are real, so a K=8 MXU
    # matmul would run at <1% utilization.  Do broadcast multiply-adds instead.
    h = b1_ref[...]                                        # (1, 64) f32, broadcasts below
    for c in range(d_real):
        h = h + x_t[:, c:c + 1] * w1_row(c)                # (TN,1)*(1,64) -> (TN,64)
    h = jnp.maximum(h, 0.0)

    h = jnp.dot(h.astype(jnp.bfloat16), w2_ref[...],
                preferred_element_type=jnp.float32) + b2_ref[...]
    h = jnp.maximum(h, 0.0)
    h = jnp.dot(h.astype(jnp.bfloat16), w3_ref[...],
                preferred_element_type=jnp.float32) + b3_ref[...]
    if relu_last:
        h = jnp.maximum(h, 0.0)

    acc_ref[...] = jnp.maximum(acc_ref[...], jnp.max(h, axis=0, keepdims=True))


# ----------------------------------------------------------------------------
# Kernel 1: STN3d.  Conv stack + max, then the fc head (fc1+bn4+relu, fc2+bn5+relu,
# fc3 with the 3x3 identity folded into its bias) fused into the last grid step.
# ----------------------------------------------------------------------------
def _stn_kernel(x_ref, w1_ref, b1_ref, w2_ref, b2_ref, w3_ref, b3_ref,
                fw1_ref, fb1_ref, fw2_ref, fb2_ref, fw3_ref, fb3_ref,
                out_ref, acc_ref, *, d_real):
    _mlp_max_body(x_ref, b1_ref, w2_ref, b2_ref, w3_ref, b3_ref, acc_ref,
                  w1_row=lambda c: w1_ref[c:c + 1, :], d_real=d_real,
                  relu_last=True)

    @pl.when(pl.program_id(1) == pl.num_programs(1) - 1)
    def _():
        g = acc_ref[...].astype(jnp.bfloat16)              # (1, 1024)
        h = jnp.dot(g, fw1_ref[...],
                    preferred_element_type=jnp.float32) + fb1_ref[...]
        h = jnp.maximum(h, 0.0)
        h = jnp.dot(h.astype(jnp.bfloat16), fw2_ref[...],
                    preferred_element_type=jnp.float32) + fb2_ref[...]
        h = jnp.maximum(h, 0.0)
        out_ref[0] = (jnp.dot(h.astype(jnp.bfloat16), fw3_ref[...],
                              preferred_element_type=jnp.float32) + fb3_ref[...])


# ----------------------------------------------------------------------------
# Kernel 2: Encoder conv stack.  The (3,3) STN transform (read straight from the
# padded STN output block) is folded into the conv1 rows per batch on the VPU.
# ----------------------------------------------------------------------------
def _enc_kernel(x_ref, t_ref, w1_ref, b1_ref, w2_ref, b2_ref, w3_ref, b3_ref,
                out_ref, acc_ref, *, d_real):
    t = t_ref[0]                                           # (1, 128); trans flat in cols 0..8

    def w1_row(c):
        if c < 3:
            # row_c of (trans @ W1): sum_j trans[c, j] * W1[j, :]
            row = t[:, 3 * c:3 * c + 1] * w1_ref[0:1, :]
            row = row + t[:, 3 * c + 1:3 * c + 2] * w1_ref[1:2, :]
            row = row + t[:, 3 * c + 2:3 * c + 3] * w1_ref[2:3, :]
            return row
        return w1_ref[c:c + 1, :]                          # extra feature channels (D > 3)

    _mlp_max_body(x_ref, b1_ref, w2_ref, b2_ref, w3_ref, b3_ref, acc_ref,
                  w1_row=w1_row, d_real=d_real, relu_last=False)

    @pl.when(pl.program_id(1) == pl.num_programs(1) - 1)
    def _():
        out_ref[0] = acc_ref[...]


# ----------------------------------------------------------------------------
# pallas_call wrappers.
# ----------------------------------------------------------------------------
def _stn_call(x, p, *, d_real, tn):
    B, _, n_pad = x.shape
    (w1, b1, w2, b2, w3, b3, fw1, fb1, fw2, fb2, fw3, fb3) = p
    const = lambda b, n: (0, 0)
    flops = (2 * B * n_pad * (d_real * 64 + 64 * 128 + 128 * 1024)
             + 2 * B * (1024 * 512 + 512 * 256 + 256 * FC_OUT_PAD))
    bytes_accessed = int(x.size * 4 + sum(a.size * a.dtype.itemsize for a in p)
                         + B * FC_OUT_PAD * 4)
    return pl.pallas_call(
        functools.partial(_stn_kernel, d_real=d_real),
        out_shape=jax.ShapeDtypeStruct((B, 1, FC_OUT_PAD), jnp.float32),
        grid=(B, n_pad // tn),
        in_specs=[
            pl.BlockSpec((1, CIN_PAD, tn), lambda b, n: (b, 0, n)),
            pl.BlockSpec(w1.shape, const), pl.BlockSpec(b1.shape, const),
            pl.BlockSpec(w2.shape, const), pl.BlockSpec(b2.shape, const),
            pl.BlockSpec(w3.shape, const), pl.BlockSpec(b3.shape, const),
            pl.BlockSpec(fw1.shape, const), pl.BlockSpec(fb1.shape, const),
            pl.BlockSpec(fw2.shape, const), pl.BlockSpec(fb2.shape, const),
            pl.BlockSpec(fw3.shape, const), pl.BlockSpec(fb3.shape, const),
        ],
        out_specs=pl.BlockSpec((1, 1, FC_OUT_PAD), lambda b, n: (b, 0, 0)),
        scratch_shapes=[pltpu.VMEM((1, 1024), jnp.float32)],
        compiler_params=pltpu.CompilerParams(
            dimension_semantics=("parallel", "arbitrary"),
            vmem_limit_bytes=32 * 1024 * 1024),
        cost_estimate=pl.CostEstimate(flops=flops, transcendentals=0,
                                      bytes_accessed=bytes_accessed),
    )(x, *p)


def _enc_call(x, t_pad, p, *, d_real, tn):
    B, _, n_pad = x.shape
    (w1, b1, w2, b2, w3, b3) = p
    const = lambda b, n: (0, 0)
    flops = 2 * B * n_pad * (d_real * 64 + 64 * 128 + 128 * ENC_OUT_PAD)
    bytes_accessed = int(x.size * 4 + t_pad.size * 4
                         + sum(a.size * a.dtype.itemsize for a in p)
                         + B * ENC_OUT_PAD * 4)
    return pl.pallas_call(
        functools.partial(_enc_kernel, d_real=d_real),
        out_shape=jax.ShapeDtypeStruct((B, 1, ENC_OUT_PAD), jnp.float32),
        grid=(B, n_pad // tn),
        in_specs=[
            pl.BlockSpec((1, CIN_PAD, tn), lambda b, n: (b, 0, n)),
            pl.BlockSpec((1, 1, FC_OUT_PAD), lambda b, n: (b, 0, 0)),
            pl.BlockSpec(w1.shape, const), pl.BlockSpec(b1.shape, const),
            pl.BlockSpec(w2.shape, const), pl.BlockSpec(b2.shape, const),
            pl.BlockSpec(w3.shape, const), pl.BlockSpec(b3.shape, const),
        ],
        out_specs=pl.BlockSpec((1, 1, ENC_OUT_PAD), lambda b, n: (b, 0, 0)),
        scratch_shapes=[pltpu.VMEM((1, ENC_OUT_PAD), jnp.float32)],
        compiler_params=pltpu.CompilerParams(
            dimension_semantics=("parallel", "arbitrary"),
            vmem_limit_bytes=32 * 1024 * 1024),
        cost_estimate=pl.CostEstimate(flops=flops, transcendentals=0,
                                      bytes_accessed=bytes_accessed),
    )(x, t_pad, *p)


# ----------------------------------------------------------------------------
# Parameter construction (deterministic, synthetic) + BN folding.
# ----------------------------------------------------------------------------
def _fold_bn(w, b, gamma, beta, mean, var, eps=1e-5):
    scale = gamma / jnp.sqrt(var + eps)
    w_eff = w * scale[None, :]
    b_eff = b * scale + (beta - mean * scale)
    return w_eff, b_eff


def make_params(key, channel=3):
    keys = iter(jax.random.split(key, 64))

    def nrm(shape, s=0.1):
        return s * jax.random.normal(next(keys), shape, jnp.float32)

    def linear(cin, cout):
        return nrm((cin, cout)), nrm((cout,), 0.05)

    def bn(c):
        gamma = 1.0 + nrm((c,), 0.05)
        beta = nrm((c,), 0.05)
        mean = nrm((c,), 0.05)
        var = 1.0 + jnp.abs(nrm((c,), 0.05))
        return gamma, beta, mean, var

    def conv_bn(cin, cout):
        w, b = linear(cin, cout)
        w, b = _fold_bn(w, b, *bn(cout))
        return w, b.reshape(1, cout)

    def pad_rows(w, rows):
        return jnp.pad(w, ((0, rows - w.shape[0]), (0, 0)))

    def pad_cols(a, cols):
        return jnp.pad(a, ((0, 0), (0, cols - a.shape[1])))

    # ---- STN3d: conv stack channel->64->128->1024 (BN+ReLU each), max over N ----
    s_w1, s_b1 = conv_bn(channel, 64)
    s_w2, s_b2 = conv_bn(64, 128)
    s_w3, s_b3 = conv_bn(128, 1024)
    # ---- STN3d: fc stack 1024->512->256->9 (bn4/bn5 folded, identity into fc3 bias) ----
    f_w1, f_b1 = linear(1024, 512)
    f_w1, f_b1 = _fold_bn(f_w1, f_b1, *bn(512))
    f_w2, f_b2 = linear(512, 256)
    f_w2, f_b2 = _fold_bn(f_w2, f_b2, *bn(256))
    f_w3, f_b3 = linear(256, 9)
    f_b3 = f_b3 + jnp.eye(3, dtype=jnp.float32).reshape(9)

    stn = (
        pad_rows(s_w1, CIN_PAD), s_b1,                       # conv1: f32 (VPU path)
        s_w2.astype(jnp.bfloat16), s_b2,
        s_w3.astype(jnp.bfloat16), s_b3,
        f_w1.astype(jnp.bfloat16), f_b1.reshape(1, 512),
        f_w2.astype(jnp.bfloat16), f_b2.reshape(1, 256),
        pad_cols(f_w3, FC_OUT_PAD).astype(jnp.bfloat16),
        pad_cols(f_b3.reshape(1, 9), FC_OUT_PAD),
    )

    # ---- Encoder: conv stack channel->64->128->100 (BN each, last conv no ReLU) ----
    e_w1, e_b1 = conv_bn(channel, 64)
    e_w2, e_b2 = conv_bn(64, 128)
    e_w3, e_b3 = conv_bn(128, 100)
    enc = (
        pad_rows(e_w1, CIN_PAD), e_b1,                       # conv1: f32, trans folded in-kernel
        e_w2.astype(jnp.bfloat16), e_b2,
        pad_cols(e_w3, ENC_OUT_PAD).astype(jnp.bfloat16),
        pad_cols(e_b3, ENC_OUT_PAD),
    )
    return {"stn": stn, "enc": enc}


# ----------------------------------------------------------------------------
# Point-tile selection and full forward pass (global_feat=True).
# ----------------------------------------------------------------------------
def _choose_point_tiles(n):
    enc_tn = 2048
    while enc_tn > 128:
        n_pad = -(-n // enc_tn) * enc_tn
        if n_pad - n <= max(n // 8, 64):       # cap edge-replication waste at ~12.5%
            break
        enc_tn //= 2
    stn_tn = min(enc_tn, 1024)                 # keep the (TN, 1024) STN tile VMEM-friendly
    return stn_tn, enc_tn


def pointnet_encoder(x_bcn, params):
    B, D, N = x_bcn.shape
    assert D <= CIN_PAD

    stn_tn, enc_tn = _choose_point_tiles(N)
    n_pad = -(-N // enc_tn) * enc_tn           # stn_tn divides enc_tn, so one padding serves both

    # Native (B, C, N) layout: pad points by edge replication (max-invariant) and the
    # channel axis 3 -> 8 (sublane pad only).  No transpose, no lane-padded HBM copy.
    x = x_bcn
    if n_pad != N:
        x = jnp.pad(x, ((0, 0), (0, 0), (0, n_pad - N)), mode="edge")
    if D != CIN_PAD:
        x = jnp.pad(x, ((0, 0), (0, CIN_PAD - D), (0, 0)))

    # STN3d -> (B, 1, 128) with the identity-folded 3x3 transform in columns 0..8.
    t_pad = _stn_call(x, params["stn"], d_real=D, tn=stn_tn)

    # Encoder: consumes x and the padded STN output directly (trans folded into conv1).
    feat_pad = _enc_call(x, t_pad, params["enc"], d_real=D, tn=enc_tn)

    trans = t_pad[:, 0, :9].reshape(B, 3, 3)
    feat = feat_pad[:, 0, :100]
    trans_feat = None                           # feature_transform=False
    return feat, trans, trans_feat


if __name__ == "__main__":
    B, C, N = 2, 3, 128
    key = jax.random.PRNGKey(0)
    k_param, k_x = jax.random.split(key)
    params = make_params(k_param, channel=C)
    x = jax.random.normal(k_x, (B, C, N), jnp.float32)      # PyTorch NCW layout

    feat, trans, trans_feat = pointnet_encoder(x, params)
    jax.block_until_ready((feat, trans))

    assert feat.shape == (B, 100)
    assert trans.shape == (B, 3, 3)
    assert trans_feat is None
    print("KERNEL_OK")
</pallas_src>

<mosaic_0001>
module attributes {stable_mosaic.version = 11 : i64} {
  func.func @_stn_kernel(%arg0: i32, %arg1: i32, %arg2: memref<1x8x128xf32, #tpu.memory_space<vmem>>, %arg3: memref<8x64xf32, #tpu.memory_space<vmem>>, %arg4: memref<1x64xf32, #tpu.memory_space<vmem>>, %arg5: memref<64x128xbf16, #tpu.memory_space<vmem>>, %arg6: memref<1x128xf32, #tpu.memory_space<vmem>>, %arg7: memref<128x1024xbf16, #tpu.memory_space<vmem>>, %arg8: memref<1x1024xf32, #tpu.memory_space<vmem>>, %arg9: memref<1024x512xbf16, #tpu.memory_space<vmem>>, %arg10: memref<1x512xf32, #tpu.memory_space<vmem>>, %arg11: memref<512x256xbf16, #tpu.memory_space<vmem>>, %arg12: memref<1x256xf32, #tpu.memory_space<vmem>>, %arg13: memref<256x128xbf16, #tpu.memory_space<vmem>>, %arg14: memref<1x128xf32, #tpu.memory_space<vmem>>, %arg15: memref<1x1x128xf32, #tpu.memory_space<vmem>>, %arg16: memref<1x1024xf32, #tpu.memory_space<vmem>>) attributes {dimension_semantics = [#tpu.dimension_semantics<parallel>, #tpu.dimension_semantics<arbitrary>], iteration_bounds = array<i64: 2, 1>, scalar_prefetch = 0 : i64, scratch_operands = 1 : i64, tpu.core_type = #tpu.core_type<tc>, window_params = [{transform_indices = @transform_0, window_bounds = array<i64: 1, 8, 128>}, {pipeline_mode = #tpu.pipeline_mode<synchronous>, transform_indices = @transform_1, window_bounds = array<i64: 8, 64>}, {pipeline_mode = #tpu.pipeline_mode<synchronous>, transform_indices = @transform_2, window_bounds = array<i64: 1, 64>}, {pipeline_mode = #tpu.pipeline_mode<synchronous>, transform_indices = @transform_3, window_bounds = array<i64: 64, 128>}, {pipeline_mode = #tpu.pipeline_mode<synchronous>, transform_indices = @transform_4, window_bounds = array<i64: 1, 128>}, {pipeline_mode = #tpu.pipeline_mode<synchronous>, transform_indices = @transform_5, window_bounds = array<i64: 128, 1024>}, {pipeline_mode = #tpu.pipeline_mode<synchronous>, transform_indices = @transform_6, window_bounds = array<i64: 1, 1024>}, {pipeline_mode = #tpu.pipeline_mode<synchronous>, transform_indices = @transform_7, window_bounds = array<i64: 1024, 512>}, {pipeline_mode = #tpu.pipeline_mode<synchronous>, transform_indices = @transform_8, window_bounds = array<i64: 1, 512>}, {pipeline_mode = #tpu.pipeline_mode<synchronous>, transform_indices = @transform_9, window_bounds = array<i64: 512, 256>}, {pipeline_mode = #tpu.pipeline_mode<synchronous>, transform_indices = @transform_10, window_bounds = array<i64: 1, 256>}, {pipeline_mode = #tpu.pipeline_mode<synchronous>, transform_indices = @transform_11, window_bounds = array<i64: 256, 128>}, {pipeline_mode = #tpu.pipeline_mode<synchronous>, transform_indices = @transform_12, window_bounds = array<i64: 1, 128>}, {transform_indices = @transform_13, window_bounds = array<i64: 1, 1, 128>}]} {
    %c0_i32 = arith.constant 0 : i32
    %0 = arith.cmpi eq, %arg1, %c0_i32 : i32
    %1 = arith.extui %0 : i1 to i32
    %c0_i32_0 = arith.constant 0 : i32
    %2 = arith.cmpi ne, %1, %c0_i32_0 : i32
    scf.if %2 {
      %cst_28 = arith.constant 0xFF800000 : f32
      %52 = vector.broadcast %cst_28 : f32 to vector<1x1024xf32>
      %c0_29 = arith.constant 0 : index
      %c0_30 = arith.constant 0 : index
      %53 = vector.load %arg16[%c0_29, %c0_30] : memref<1x1024xf32, #tpu.memory_space<vmem>>, vector<1x1024xf32>
      tpu.vector_store %arg16[%c0_29, %c0_30], %52 {strides = array<i32>} : memref<1x1024xf32, #tpu.memory_space<vmem>>, vector<1x1024xf32>,
    } else {
    }
    %c0 = arith.constant 0 : index
    %c0_1 = arith.constant 0 : index
    %c0_2 = arith.constant 0 : index
    %3 = vector.load %arg2[%c0, %c0_1, %c0_2] : memref<1x8x128xf32, #tpu.memory_space<vmem>>, vector<1x8x128xf32>
    %4 = vector.shape_cast %3 : vector<1x8x128xf32> to vector<8x128xf32>
    %5 = tpu.transpose %4, [1, 0] : vector<8x128xf32> -> vector<128x8xf32>
    %c0_3 = arith.constant 0 : index
    %c0_4 = arith.constant 0 : index
    %6 = vector.load %arg4[%c0_3, %c0_4] : memref<1x64xf32, #tpu.memory_space<vmem>>, vector<1x64xf32>
    %7 = vector.extract_strided_slice %5 {offsets = [0, 0], sizes = [128, 1], strides = [1, 1]} : vector<128x8xf32> to vector<128x1xf32>
    %c0_5 = arith.constant 0 : index
    %c0_6 = arith.constant 0 : index
    %8 = vector.load %arg3[%c0_5, %c0_6] : memref<8x64xf32, #tpu.memory_space<vmem>>, vector<1x64xf32>
    %9 = vector.broadcast %7 : vector<128x1xf32> to vector<128x64xf32>
    %10 = vector.broadcast %8 : vector<1x64xf32> to vector<128x64xf32>
    %11 = arith.mulf %9, %10 : vector<128x64xf32>
    %12 = vector.broadcast %6 : vector<1x64xf32> to vector<128x64xf32>
    %13 = arith.addf %12, %11 : vector<128x64xf32>
    %14 = vector.extract_strided_slice %5 {offsets = [0, 1], sizes = [128, 1], strides = [1, 1]} : vector<128x8xf32> to vector<128x1xf32>
    %c1 = arith.constant 1 : index
    %c0_7 = arith.constant 0 : index
    %15 = vector.load %arg3[%c1, %c0_7] : memref<8x64xf32, #tpu.memory_space<vmem>>, vector<1x64xf32>
    %16 = vector.broadcast %14 : vector<128x1xf32> to vector<128x64xf32>
    %17 = vector.broadcast %15 : vector<1x64xf32> to vector<128x64xf32>
    %18 = arith.mulf %16, %17 : vector<128x64xf32>
    %19 = arith.addf %13, %18 : vector<128x64xf32>
    %20 = vector.extract_strided_slice %5 {offsets = [0, 2], sizes = [128, 1], strides = [1, 1]} : vector<128x8xf32> to vector<128x1xf32>
    %c2 = arith.constant 2 : index
    %c0_8 = arith.constant 0 : index
    %21 = vector.load %arg3[%c2, %c0_8] : memref<8x64xf32, #tpu.memory_space<vmem>>, vector<1x64xf32>
    %22 = vector.broadcast %20 : vector<128x1xf32> to vector<128x64xf32>
    %23 = vector.broadcast %21 : vector<1x64xf32> to vector<128x64xf32>
    %24 = arith.mulf %22, %23 : vector<128x64xf32>
    %25 = arith.addf %19, %24 : vector<128x64xf32>
    %cst = arith.constant 0.000000e+00 : f32
    %26 = vector.broadcast %cst : f32 to vector<128x64xf32>
    %27 = arith.maximumf %25, %26 : vector<128x64xf32>
    %28 = arith.truncf %27 : vector<128x64xf32> to vector<128x64xbf16>
    %c0_9 = arith.constant 0 : index
    %c0_10 = arith.constant 0 : index
    %29 = vector.load %arg5[%c0_9, %c0_10] : memref<64x128xbf16, #tpu.memory_space<vmem>>, vector<64x128xbf16>
    %cst_11 = arith.constant dense<0.000000e+00> : vector<128x128xf32>
    %30 = tpu.matmul %28, %29, %cst_11 {dimension_numbers = #tpu.dot_dimension_numbers<[1], [0], [0], [1], [0, 0, 1, 1], [], []>} : vector<128x64xbf16>, vector<64x128xbf16>, vector<128x128xf32> -> vector<128x128xf32>
    %c0_12 = arith.constant 0 : index
    %c0_13 = arith.constant 0 : index
    %31 = vector.load %arg6[%c0_12, %c0_13] : memref<1x128xf32, #tpu.memory_space<vmem>>, vector<1x128xf32>
    %32 = vector.broadcast %31 : vector<1x128xf32> to vector<128x128xf32>
    %33 = arith.addf %30, %32 : vector<128x128xf32>
    %cst_14 = arith.constant 0.000000e+00 : f32
    %34 = vector.broadcast %cst_14 : f32 to vector<128x128xf32>
    %35 = arith.maximumf %33, %34 : vector<128x128xf32>
    %36 = arith.truncf %35 : vector<128x128xf32> to vector<128x128xbf16>
    %c0_15 = arith.constant 0 : index
    %c0_16 = arith.constant 0 : index
    %37 = vector.load %arg7[%c0_15, %c0_16] : memref<128x1024xbf16, #tpu.memory_space<vmem>>, vector<128x1024xbf16>
    %cst_17 = arith.constant dense<0.000000e+00> : vector<128x1024xf32>
    %38 = tpu.matmul %36, %37, %cst_17 {dimension_numbers = #tpu.dot_dimension_numbers<[1], [0], [0], [1], [0, 0, 1, 1], [], []>} : vector<128x128xbf16>, vector<128x1024xbf16>, vector<128x1024xf32> -> vector<128x1024xf32>
    %c0_18 = arith.constant 0 : index
    %c0_19 = arith.constant 0 : index
    %39 = vector.load %arg8[%c0_18, %c0_19] : memref<1x1024xf32, #tpu.memory_space<vmem>>, vector<1x1024xf32>
    %40 = vector.broadcast %39 : vector<1x1024xf32> to vector<128x1024xf32>
    %41 = arith.addf %38, %40 : vector<128x1024xf32>
    %cst_20 = arith.constant 0.000000e+00 : f32
    %42 = vector.broadcast %cst_20 : f32 to vector<128x1024xf32>
    %43 = arith.maximumf %41, %42 : vector<128x1024xf32>
    %c0_21 = arith.constant 0 : index
    %c0_22 = arith.constant 0 : index
    %44 = vector.load %arg16[%c0_21, %c0_22] : memref<1x1024xf32, #tpu.memory_space<vmem>>, vector<1x1024xf32>
    %cst_23 = arith.constant dense<0xFF800000> : vector<1024xf32>
    %45 = vector.multi_reduction <maximumf>, %43, %cst_23 [0] : vector<128x1024xf32> to vector<1024xf32>
    %46 = vector.shape_cast %45 : vector<1024xf32> to vector<1x1024xf32>
    %47 = arith.maximumf %44, %46 : vector<1x1024xf32>
    %c0_24 = arith.constant 0 : index
    %c0_25 = arith.constant 0 : index
    %48 = vector.load %arg16[%c0_24, %c0_25] : memref<1x1024xf32, #tpu.memory_space<vmem>>, vector<1x1024xf32>
    tpu.vector_store %arg16[%c0_24, %c0_25], %47 {strides = array<i32>} : memref<1x1024xf32, #tpu.memory_space<vmem>>, vector<1x1024xf32>,
    %c0_i32_26 = arith.constant 0 : i32
    %49 = arith.cmpi eq, %arg1, %c0_i32_26 : i32
    %50 = arith.extui %49 : i1 to i32
    %c0_i32_27 = arith.constant 0 : i32
    %51 = arith.cmpi ne, %50, %c0_i32_27 : i32
    scf.if %51 {
      %c0_28 = arith.constant 0 : index
      %c0_29 = arith.constant 0 : index
      %52 = vector.load %arg16[%c0_28, %c0_29] : memref<1x1024xf32, #tpu.memory_space<vmem>>, vector<1x1024xf32>
      %53 = arith.truncf %52 : vector<1x1024xf32> to vector<1x1024xbf16>
      %c0_30 = arith.constant 0 : index
      %c0_31 = arith.constant 0 : index
      %54 = vector.load %arg9[%c0_30, %c0_31] : memref<1024x512xbf16, #tpu.memory_space<vmem>>, vector<1024x512xbf16>
      %cst_32 = arith.constant dense<0.000000e+00> : vector<1x512xf32>
      %55 = tpu.matmul %53, %54, %cst_32 {dimension_numbers = #tpu.dot_dimension_numbers<[1], [0], [0], [1], [0, 0, 1, 1], [], []>} : vector<1x1024xbf16>, vector<1024x512xbf16>, vector<1x512xf32> -> vector<1x512xf32>
      %c0_33 = arith.constant 0 : index
      %c0_34 = arith.constant 0 : index
      %56 = vector.load %arg10[%c0_33, %c0_34] : memref<1x512xf32, #tpu.memory_space<vmem>>, vector<1x512xf32>
      %57 = arith.addf %55, %56 : vector<1x512xf32>
      %cst_35 = arith.constant 0.000000e+00 : f32
      %58 = vector.broadcast %cst_35 : f32 to vector<1x512xf32>
      %59 = arith.maximumf %57, %58 : vector<1x512xf32>
      %60 = arith.truncf %59 : vector<1x512xf32> to vector<1x512xbf16>
      %c0_36 = arith.constant 0 : index
      %c0_37 = arith.constant 0 : index
      %61 = vector.load %arg11[%c0_36, %c0_37] : memref<512x256xbf16, #tpu.memory_space<vmem>>, vector<512x256xbf16>
      %cst_38 = arith.constant dense<0.000000e+00> : vector<1x256xf32>
      %62 = tpu.matmul %60, %61, %cst_38 {dimension_numbers = #tpu.dot_dimension_numbers<[1], [0], [0], [1], [0, 0, 1, 1], [], []>} : vector<1x512xbf16>, vector<512x256xbf16>, vector<1x256xf32> -> vector<1x256xf32>
      %c0_39 = arith.constant 0 : index
      %c0_40 = arith.constant 0 : index
      %63 = vector.load %arg12[%c0_39, %c0_40] : memref<1x256xf32, #tpu.memory_space<vmem>>, vector<1x256xf32>
      %64 = arith.addf %62, %63 : vector<1x256xf32>
      %cst_41 = arith.constant 0.000000e+00 : f32
      %65 = vector.broadcast %cst_41 : f32 to vector<1x256xf32>
      %66 = arith.maximumf %64, %65 : vector<1x256xf32>
      %67 = arith.truncf %66 : vector<1x256xf32> to vector<1x256xbf16>
      %c0_42 = arith.constant 0 : index
      %c0_43 = arith.constant 0 : index
      %68 = vector.load %arg13[%c0_42, %c0_43] : memref<256x128xbf16, #tpu.memory_space<vmem>>, vector<256x128xbf16>
      %cst_44 = arith.constant dense<0.000000e+00> : vector<1x128xf32>
      %69 = tpu.matmul %67, %68, %cst_44 {dimension_numbers = #tpu.dot_dimension_numbers<[1], [0], [0], [1], [0, 0, 1, 1], [], []>} : vector<1x256xbf16>, vector<256x128xbf16>, vector<1x128xf32> -> vector<1x128xf32>
      %c0_45 = arith.constant 0 : index
      %c0_46 = arith.constant 0 : index
      %70 = vector.load %arg14[%c0_45, %c0_46] : memref<1x128xf32, #tpu.memory_space<vmem>>, vector<1x128xf32>
      %71 = arith.addf %69, %70 : vector<1x128xf32>
      %c0_47 = arith.constant 0 : index
      %c0_48 = arith.constant 0 : index
      %c0_49 = arith.constant 0 : index
      %72 = vector.load %arg15[%c0_47, %c0_48, %c0_49] : memref<1x1x128xf32, #tpu.memory_space<vmem>>, vector<1x1x128xf32>
      %73 = vector.shape_cast %72 : vector<1x1x128xf32> to vector<1x128xf32>
      %74 = vector.shape_cast %71 : vector<1x128xf32> to vector<1x1x128xf32>
      tpu.vector_store %arg15[%c0_47, %c0_48, %c0_49], %74 {strides = array<i32>} : memref<1x1x128xf32, #tpu.memory_space<vmem>>, vector<1x1x128xf32>,
    } else {
    }
    return
  }
  func.func @transform_0(%arg0: i32, %arg1: i32) -> (i32, i32, i32) {
    %c0_i32 = arith.constant 0 : i32
    %c0_i32_0 = arith.constant 0 : i32
    return %arg0, %c0_i32, %arg1 : i32, i32, i32
  }
  func.func @transform_1(%arg0: i32, %arg1: i32) -> (i32, i32) {
    %c0_i32 = arith.constant 0 : i32
    %c0_i32_0 = arith.constant 0 : i32
    %c0_i32_1 = arith.constant 0 : i32
    return %c0_i32, %c0_i32_0 : i32, i32
  }
  func.func @transform_2(%arg0: i32, %arg1: i32) -> (i32, i32) {
    %c0_i32 = arith.constant 0 : i32
    %c0_i32_0 = arith.constant 0 : i32
    %c0_i32_1 = arith.constant 0 : i32
    return %c0_i32, %c0_i32_0 : i32, i32
  }
  func.func @transform_3(%arg0: i32, %arg1: i32) -> (i32, i32) {
    %c0_i32 = arith.constant 0 : i32
    %c0_i32_0 = arith.constant 0 : i32
    %c0_i32_1 = arith.constant 0 : i32
    return %c0_i32, %c0_i32_0 : i32, i32
  }
  func.func @transform_4(%arg0: i32, %arg1: i32) -> (i32, i32) {
    %c0_i32 = arith.constant 0 : i32
    %c0_i32_0 = arith.constant 0 : i32
    %c0_i32_1 = arith.constant 0 : i32
    return %c0_i32, %c0_i32_0 : i32, i32
  }
  func.func @transform_5(%arg0: i32, %arg1: i32) -> (i32, i32) {
    %c0_i32 = arith.constant 0 : i32
    %c0_i32_0 = arith.constant 0 : i32
    %c0_i32_1 = arith.constant 0 : i32
    return %c0_i32, %c0_i32_0 : i32, i32
  }
  func.func @transform_6(%arg0: i32, %arg1: i32) -> (i32, i32) {
    %c0_i32 = arith.constant 0 : i32
    %c0_i32_0 = arith.constant 0 : i32
    %c0_i32_1 = arith.constant 0 : i32
    return %c0_i32, %c0_i32_0 : i32, i32
  }
  func.func @transform_7(%arg0: i32, %arg1: i32) -> (i32, i32) {
    %c0_i32 = arith.constant 0 : i32
    %c0_i32_0 = arith.constant 0 : i32
    %c0_i32_1 = arith.constant 0 : i32
    return %c0_i32, %c0_i32_0 : i32, i32
  }
  func.func @transform_8(%arg0: i32, %arg1: i32) -> (i32, i32) {
    %c0_i32 = arith.constant 0 : i32
    %c0_i32_0 = arith.constant 0 : i32
    %c0_i32_1 = arith.constant 0 : i32
    return %c0_i32, %c0_i32_0 : i32, i32
  }
  func.func @transform_9(%arg0: i32, %arg1: i32) -> (i32, i32) {
    %c0_i32 = arith.constant 0 : i32
    %c0_i32_0 = arith.constant 0 : i32
    %c0_i32_1 = arith.constant 0 : i32
    return %c0_i32, %c0_i32_0 : i32, i32
  }
  func.func @transform_10(%arg0: i32, %arg1: i32) -> (i32, i32) {
    %c0_i32 = arith.constant 0 : i32
    %c0_i32_0 = arith.constant 0 : i32
    %c0_i32_1 = arith.constant 0 : i32
    return %c0_i32, %c0_i32_0 : i32, i32
  }
  func.func @transform_11(%arg0: i32, %arg1: i32) -> (i32, i32) {
    %c0_i32 = arith.constant 0 : i32
    %c0_i32_0 = arith.constant 0 : i32
    %c0_i32_1 = arith.constant 0 : i32
    return %c0_i32, %c0_i32_0 : i32, i32
  }
  func.func @transform_12(%arg0: i32, %arg1: i32) -> (i32, i32) {
    %c0_i32 = arith.constant 0 : i32
    %c0_i32_0 = arith.constant 0 : i32
    %c0_i32_1 = arith.constant 0 : i32
    return %c0_i32, %c0_i32_0 : i32, i32
  }
  func.func @transform_13(%arg0: i32, %arg1: i32) -> (i32, i32, i32) {
    %c0_i32 = arith.constant 0 : i32
    %c0_i32_0 = arith.constant 0 : i32
    %c0_i32_1 = arith.constant 0 : i32
    return %arg0, %c0_i32, %c0_i32_0 : i32, i32, i32
  }
}

</mosaic_0001>

<llo_original>
// kernel: tpu_custom_call.1
$region0: #{tpu_custom_call.1}
  #allocation0 [shape = 'u32[]', space=smem, size = 0x4, offset = 0x4, fixed_abs, tag = 'smem constant byte address 0x4 - core index']
  #allocation1 [shape = 'u32[144,128]{1,0:T(1,128)}', space=vmem, size = 0x12000, scoped, tag = 'internal scratch']
  #allocation2 [shape = 'f32[1,1024]{1,0:T(1,128)}', space=vmem, size = 0x1000, scoped, tag = 'scratch operand']
  %s0 = inlined_call_operand.hbm [shape: f32[2,8,128], index: 0, kind: input, shape index: {}]
  %s1 = inlined_call_operand.hbm [shape: f32[8,64], index: 1, kind: input, shape index: {}]
  %s2 = inlined_call_operand.vmem [shape: f32[1,64], index: 2, kind: input, shape index: {}]
  %s3 = inlined_call_operand.hbm [shape: bf16[64,128], index: 3, kind: input, shape index: {}]
  %s4 = inlined_call_operand.hbm [shape: f32[1,128], index: 4, kind: input, shape index: {}]
  %s5 = inlined_call_operand.hbm [shape: bf16[128,1024], index: 5, kind: input, shape index: {}]
  %s6 = inlined_call_operand.vmem [shape: f32[1,1024], index: 6, kind: input, shape index: {}]
  %s7 = inlined_call_operand.hbm [shape: bf16[1024,512], index: 7, kind: input, shape index: {}]
  %s8 = inlined_call_operand.vmem [shape: f32[1,512], index: 8, kind: input, shape index: {}]
  %s9 = inlined_call_operand.hbm [shape: bf16[512,256], index: 9, kind: input, shape index: {}]
  %s10 = inlined_call_operand.vmem [shape: f32[1,256], index: 10, kind: input, shape index: {}]
  %s11 = inlined_call_operand.hbm [shape: bf16[256,128], index: 11, kind: input, shape index: {}]
  %s12 = inlined_call_operand.vmem [shape: f32[1,128], index: 12, kind: input, shape index: {}]
  %s13 = inlined_call_operand.hbm [shape: f32[2,1,128], index: 13, kind: output, shape index: {}]
  %s14 = sld [smem:[#allocation0]]
  $region125: #{tpu_custom_call.1} parent=0
    _
  %s16 = ssub.s32 1, %s14
  %s17 = scalar_select 0, %s16, %s14
  $region1: #{tpu_custom_call.1} parent=0
    #allocation3 [shape = 'u8[8192]{0}', space=vmem, size = 0x2000, scoped, tag = 'input window, operand 0']
    #allocation4 [shape = 's32[2]{0}', space=sflag, size = 0x8, scoped, tag = 'scoped memory for tpu_custom_call.1']
    #allocation5 [shape = 's32[2]{0}', space=sflag, size = 0x8, scoped, tag = 'scoped memory for tpu_custom_call.1']
    #allocation6 [shape = 'u8[4096]{0}', space=vmem, size = 0x1000, scoped, tag = 'input window, operand 1, single buffered']
    #allocation7 [shape = 's32[1]{0}', space=sflag, size = 0x4, scoped, tag = 'scoped memory for tpu_custom_call.1']
    #allocation8 [shape = 'u8[16384]{0}', space=vmem, size = 0x4000, scoped, tag = 'input window, operand 3, single buffered']
    #allocation9 [shape = 'u8[512]{0}', space=vmem, size = 0x400, scoped, tag = 'input window, operand 4, single buffered']
    #allocation10 [shape = 's32[1]{0}', space=sflag, size = 0x4, scoped, tag = 'scoped memory for tpu_custom_call.1']
    #allocation11 [shape = 'u8[262144]{0}', space=vmem, size = 0x40000, scoped, tag = 'input window, operand 5, single buffered']
    #allocation12 [shape = 'u8[1048576]{0}', space=vmem, size = 0x100000, scoped, tag = 'input window, operand 7, single buffered']
    #allocation13 [shape = 's32[1]{0}', space=sflag, size = 0x4, scoped, tag = 'scoped memory for tpu_custom_call.1']
    #allocation14 [shape = 'u8[262144]{0}', space=vmem, size = 0x40000, scoped, tag = 'input window, operand 9, single buffered']
    #allocation15 [shape = 'u8[65536]{0}', space=vmem, size = 0x10000, scoped, tag = 'input window, operand 11, single buffered']
    #allocation16 [shape = 's32[1]{0}', space=sflag, size = 0x4, scoped, tag = 'scoped memory for tpu_custom_call.1']
    #allocation17 [shape = 'u8[1024]{0}', space=vmem, size = 0x400, scoped, tag = 'output window, operand 0']
    %18 = vsyncpa [#allocation4], 0
    %s19 = scalar_lea.sflag [#allocation4], 1
    %20 = vsyncpa %s19, 0
    %21 = vsyncpa [#allocation7], 0
    %22 = vsyncpa [#allocation10], 0
    %23 = vsyncpa [#allocation13], 0
    %24 = vsyncpa [#allocation16], 0
    %25 = vsyncpa [#allocation5], 0
    %s26 = scalar_lea.sflag [#allocation5], 1
    %27 = vsyncpa %s26, 0
    loop: start=0, step=1, limit=4
    $region2: #{tpu_custom_call.1} parent=1 // loop_pre_header
      _
    $region3: #{tpu_custom_call.1} parent=1 // loop_header
      %s29 = sphi 0, %s33
      %p30 = scmp.ge.s32.totalorder %s29, 4
      %s36 = sphi 0, %s48
      %s37 = sphi 0, %s44
      %s38 = sphi 0, %s36
      %s39 = sphi 0, %s37
      %s40 = sphi 0, %s38
      %s41 = sphi 0, %s39
      %s53 = sphi 0, %s55
      %s56 = sphi 0, %s53
      %s57 = sphi 0, %s56
      %s73 = sphi 0, %s57
      %s77 = sphi 0, %s77
      %s79 = sphi 0, %s77
      %s80 = sphi 0, %s79
      %s94 = sphi 0, %s80
      %s98 = sphi 0, %s98
      %s100 = sphi 0, %s98
      %s101 = sphi 0, %s100
      %s115 = sphi 0, %s101
      %s119 = sphi 0, %s119
      %s121 = sphi 0, %s119
      %s122 = sphi 0, %s121
      %s136 = sphi 0, %s122
      %s140 = sphi 0, %s140
      %s142 = sphi 0, %s140
      %s143 = sphi 0, %s142
      %s157 = sphi 0, %s143
      %s161 = sphi 0, %s161
      %s163 = sphi 0, %s161
      %s164 = sphi 0, %s163
      %s178 = sphi 0, %s164
      %s182 = sphi 0, %s182
      %s184 = sphi 0, %s182
      %s185 = sphi 0, %s184
      %s199 = sphi 0, %s185
      %s203 = sphi 0, %s203
      %s205 = sphi 0, %s203
      %s206 = sphi 0, %s205
      %s220 = sphi 0, %s206
      %s224 = sphi 0, %s224
      %s226 = sphi 0, %s224
      %s227 = sphi 0, %s226
      %s241 = sphi 0, %s227
      %s245 = sphi 0, %s245
      %s247 = sphi 0, %s245
      %s248 = sphi 0, %s247
      %s262 = sphi 0, %s248
      %s266 = sphi 0, %s266
      %s268 = sphi 0, %s266
      %s269 = sphi 0, %s268
      %s283 = sphi 0, %s269
      %s287 = sphi 0, %s287
      %s289 = sphi 0, %s287
      %s290 = sphi 0, %s289
      %s304 = sphi 0, %s290
      %s308 = sphi 0, %s308
      %s310 = sphi 0, %s308
      %s311 = sphi 0, %s310
      %s325 = sphi 0, %s311
      %s331 = sphi 0, %s333
      %s334 = sphi 0, %s331
      %s335 = sphi 0, %s334
      %s351 = sphi 0, %s335
    $region4: #{tpu_custom_call.1} parent=1 // loop_header_branch
      %32 = sbr.rel (%p30) target = $region8
    $region5: #{tpu_custom_call.1} parent=1 // loop_body
      %s34 = ssub.s32 %s29, 1
      %s35 = ssub.s32 %s29, 2
      %s42 = sadd.s32 1, %s37
      %p43 = scmp.ge.s32.totalorder %s42, 1
      %s44 = scalar_select %p43, 0, %s42
      %s45 = sadd.s32 1, %s36
      %s46 = scalar_select %p43, %s45, %s36
      %p47 = scmp.ge.s32.totalorder %s46, 2
      %s48 = scalar_select %p47, 0, %s46
      %s49 = ssub.s32 %s36, %s48
      %s50 = ssub.s32 %s37, %s44
      %s51 = sor.u32 %s49, %s50
      %p52 = scmp.eq.s32.totalorder %s51, 0
      %s54 = sadd.s32 %s53, 1
      %s55 = scalar_select %p52, %s53, %s54
      %p58 = pneg %p52
      %p59 = scmp.eq.s32.totalorder %s29, 1
      %p60 = por %p58, %p59
      %p61 = scmp.ne.s32.totalorder %s53, %s56
      %p62 = scmp.eq.s32.totalorder %s29, 0
      %p63 = por %p61, %p62
      %p64 = scmp.ne.s32.totalorder %s53, %s56
      %p65 = scmp.eq.s32.totalorder %s34, 1
      %p66 = por %p64, %p65
      %p67 = scmp.ne.s32.totalorder %s56, %s57
      %p68 = scmp.eq.s32.totalorder %s34, 0
      %p69 = por %p67, %p68
      %p70 = scmp.ne.s32.totalorder %s56, %s57
      %p71 = scmp.eq.s32.totalorder %s35, 1
      %p72 = por %p70, %p71
      %p74 = scmp.ne.s32.totalorder %s57, %s73
      %p75 = scmp.eq.s32.totalorder %s35, 0
      %p76 = por %p74, %p75
      %s78 = sadd.s32 %s77, 1
      %p81 = scmp.eq.s32.totalorder %s29, 1
      %p82 = scmp.ne.s32.totalorder %s77, %s79
      %p83 = scmp.eq.s32.totalorder %s29, 0
      %p84 = por %p82, %p83
      %p85 = scmp.ne.s32.totalorder %s77, %s79
      %p86 = scmp.eq.s32.totalorder %s34, 1
      %p87 = por %p85, %p86
      %p88 = scmp.ne.s32.totalorder %s79, %s80
      %p89 = scmp.eq.s32.totalorder %s34, 0
      %p90 = por %p88, %p89
      %p91 = scmp.ne.s32.totalorder %s79, %s80
      %p92 = scmp.eq.s32.totalorder %s35, 1
      %p93 = por %p91, %p92
      %p95 = scmp.ne.s32.totalorder %s80, %s94
      %p96 = scmp.eq.s32.totalorder %s35, 0
      %p97 = por %p95, %p96
      %s99 = sadd.s32 %s98, 1
      %p102 = scmp.eq.s32.totalorder %s29, 1
      %p103 = scmp.ne.s32.totalorder %s98, %s100
      %p104 = scmp.eq.s32.totalorder %s29, 0
      %p105 = por %p103, %p104
      %p106 = scmp.ne.s32.totalorder %s98, %s100
      %p107 = scmp.eq.s32.totalorder %s34, 1
      %p108 = por %p106, %p107
      %p109 = scmp.ne.s32.totalorder %s100, %s101
      %p110 = scmp.eq.s32.totalorder %s34, 0
      %p111 = por %p109, %p110
      %p112 = scmp.ne.s32.totalorder %s100, %s101
      %p113 = scmp.eq.s32.totalorder %s35, 1
      %p114 = por %p112, %p113
      %p116 = scmp.ne.s32.totalorder %s101, %s115
      %p117 = scmp.eq.s32.totalorder %s35, 0
      %p118 = por %p116, %p117
      %s120 = sadd.s32 %s119, 1
      %p123 = scmp.eq.s32.totalorder %s29, 1
      %p124 = scmp.ne.s32.totalorder %s119, %s121
      %p125 = scmp.eq.s32.totalorder %s29, 0
      %p126 = por %p124, %p125
      %p127 = scmp.ne.s32.totalorder %s119, %s121
      %p128 = scmp.eq.s32.totalorder %s34, 1
      %p129 = por %p127, %p128
      %p130 = scmp.ne.s32.totalorder %s121, %s122
      %p131 = scmp.eq.s32.totalorder %s34, 0
      %p132 = por %p130, %p131
      %p133 = scmp.ne.s32.totalorder %s121, %s122
      %p134 = scmp.eq.s32.totalorder %s35, 1
      %p135 = por %p133, %p134
      %p137 = scmp.ne.s32.totalorder %s122, %s136
      %p138 = scmp.eq.s32.totalorder %s35, 0
      %p139 = por %p137, %p138
      %s141 = sadd.s32 %s140, 1
      %p144 = scmp.eq.s32.totalorder %s29, 1
      %p145 = scmp.ne.s32.totalorder %s140, %s142
      %p146 = scmp.eq.s32.totalorder %s29, 0
      %p147 = por %p145, %p146
      %p148 = scmp.ne.s32.totalorder %s140, %s142
      %p149 = scmp.eq.s32.totalorder %s34, 1
      %p150 = por %p148, %p149
      %p151 = scmp.ne.s32.totalorder %s142, %s143
      %p152 = scmp.eq.s32.totalorder %s34, 0
      %p153 = por %p151, %p152
      %p154 = scmp.ne.s32.totalorder %s142, %s143
      %p155 = scmp.eq.s32.totalorder %s35, 1
      %p156 = por %p154, %p155
      %p158 = scmp.ne.s32.totalorder %s143, %s157
      %p159 = scmp.eq.s32.totalorder %s35, 0
      %p160 = por %p158, %p159
      %s162 = sadd.s32 %s161, 1
      %p165 = scmp.eq.s32.totalorder %s29, 1
      %p166 = scmp.ne.s32.totalorder %s161, %s163
      %p167 = scmp.eq.s32.totalorder %s29, 0
      %p168 = por %p166, %p167
      %p169 = scmp.ne.s32.totalorder %s161, %s163
      %p170 = scmp.eq.s32.totalorder %s34, 1
      %p171 = por %p169, %p170
      %p172 = scmp.ne.s32.totalorder %s163, %s164
      %p173 = scmp.eq.s32.totalorder %s34, 0
      %p174 = por %p172, %p173
      %p175 = scmp.ne.s32.totalorder %s163, %s164
      %p176 = scmp.eq.s32.totalorder %s35, 1
      %p177 = por %p175, %p176
      %p179 = scmp.ne.s32.totalorder %s164, %s178
      %p180 = scmp.eq.s32.totalorder %s35, 0
      %p181 = por %p179, %p180
      %s183 = sadd.s32 %s182, 1
      %p186 = scmp.eq.s32.totalorder %s29, 1
      %p187 = scmp.ne.s32.totalorder %s182, %s184
      %p188 = scmp.eq.s32.totalorder %s29, 0
      %p189 = por %p187, %p188
      %p190 = scmp.ne.s32.totalorder %s182, %s184
      %p191 = scmp.eq.s32.totalorder %s34, 1
      %p192 = por %p190, %p191
      %p193 = scmp.ne.s32.totalorder %s184, %s185
      %p194 = scmp.eq.s32.totalorder %s34, 0
      %p195 = por %p193, %p194
      %p196 = scmp.ne.s32.totalorder %s184, %s185
      %p197 = scmp.eq.s32.totalorder %s35, 1
      %p198 = por %p196, %p197
      %p200 = scmp.ne.s32.totalorder %s185, %s199
      %p201 = scmp.eq.s32.totalorder %s35, 0
      %p202 = por %p200, %p201
      %s204 = sadd.s32 %s203, 1
      %p207 = scmp.eq.s32.totalorder %s29, 1
      %p208 = scmp.ne.s32.totalorder %s203, %s205
      %p209 = scmp.eq.s32.totalorder %s29, 0
      %p210 = por %p208, %p209
      %p211 = scmp.ne.s32.totalorder %s203, %s205
      %p212 = scmp.eq.s32.totalorder %s34, 1
      %p213 = por %p211, %p212
      %p214 = scmp.ne.s32.totalorder %s205, %s206
      %p215 = scmp.eq.s32.totalorder %s34, 0
      %p216 = por %p214, %p215
      %p217 = scmp.ne.s32.totalorder %s205, %s206
      %p218 = scmp.eq.s32.totalorder %s35, 1
      %p219 = por %p217, %p218
      %p221 = scmp.ne.s32.totalorder %s206, %s220
      %p222 = scmp.eq.s32.totalorder %s35, 0
      %p223 = por %p221, %p222
      %s225 = sadd.s32 %s224, 1
      %p228 = scmp.eq.s32.totalorder %s29, 1
      %p229 = scmp.ne.s32.totalorder %s224, %s226
      %p230 = scmp.eq.s32.totalorder %s29, 0
      %p231 = por %p229, %p230
      %p232 = scmp.ne.s32.totalorder %s224, %s226
      %p233 = scmp.eq.s32.totalorder %s34, 1
      %p234 = por %p232, %p233
      %p235 = scmp.ne.s32.totalorder %s226, %s227
      %p236 = scmp.eq.s32.totalorder %s34, 0
      %p237 = por %p235, %p236
      %p238 = scmp.ne.s32.totalorder %s226, %s227
      %p239 = scmp.eq.s32.totalorder %s35, 1
      %p240 = por %p238, %p239
      %p242 = scmp.ne.s32.totalorder %s227, %s241
      %p243 = scmp.eq.s32.totalorder %s35, 0
      %p244 = por %p242, %p243
      %s246 = sadd.s32 %s245, 1
      %p249 = scmp.eq.s32.totalorder %s29, 1
      %p250 = scmp.ne.s32.totalorder %s245, %s247
      %p251 = scmp.eq.s32.totalorder %s29, 0
      %p252 = por %p250, %p251
      %p253 = scmp.ne.s32.totalorder %s245, %s247
      %p254 = scmp.eq.s32.totalorder %s34, 1
      %p255 = por %p253, %p254
      %p256 = scmp.ne.s32.totalorder %s247, %s248
      %p257 = scmp.eq.s32.totalorder %s34, 0
      %p258 = por %p256, %p257
      %p259 = scmp.ne.s32.totalorder %s247, %s248
      %p260 = scmp.eq.s32.totalorder %s35, 1
      %p261 = por %p259, %p260
      %p263 = scmp.ne.s32.totalorder %s248, %s262
      %p264 = scmp.eq.s32.totalorder %s35, 0
      %p265 = por %p263, %p264
      %s267 = sadd.s32 %s266, 1
      %p270 = scmp.eq.s32.totalorder %s29, 1
      %p271 = scmp.ne.s32.totalorder %s266, %s268
      %p272 = scmp.eq.s32.totalorder %s29, 0
      %p273 = por %p271, %p272
      %p274 = scmp.ne.s32.totalorder %s266, %s268
      %p275 = scmp.eq.s32.totalorder %s34, 1
      %p276 = por %p274, %p275
      %p277 = scmp.ne.s32.totalorder %s268, %s269
      %p278 = scmp.eq.s32.totalorder %s34, 0
      %p279 = por %p277, %p278
      %p280 = scmp.ne.s32.totalorder %s268, %s269
      %p281 = scmp.eq.s32.totalorder %s35, 1
      %p282 = por %p280, %p281
      %p284 = scmp.ne.s32.totalorder %s269, %s283
      %p285 = scmp.eq.s32.totalorder %s35, 0
      %p286 = por %p284, %p285
      %s288 = sadd.s32 %s287, 1
      %p291 = scmp.eq.s32.totalorder %s29, 1
      %p292 = scmp.ne.s32.totalorder %s287, %s289
      %p293 = scmp.eq.s32.totalorder %s29, 0
      %p294 = por %p292, %p293
      %p295 = scmp.ne.s32.totalorder %s287, %s289
      %p296 = scmp.eq.s32.totalorder %s34, 1
      %p297 = por %p295, %p296
      %p298 = scmp.ne.s32.totalorder %s289, %s290
      %p299 = scmp.eq.s32.totalorder %s34, 0
      %p300 = por %p298, %p299
      %p301 = scmp.ne.s32.totalorder %s289, %s290
      %p302 = scmp.eq.s32.totalorder %s35, 1
      %p303 = por %p301, %p302
      %p305 = scmp.ne.s32.totalorder %s290, %s304
      %p306 = scmp.eq.s32.totalorder %s35, 0
      %p307 = por %p305, %p306
      %s309 = sadd.s32 %s308, 1
      %p312 = scmp.eq.s32.totalorder %s29, 1
      %p313 = scmp.ne.s32.totalorder %s308, %s310
      %p314 = scmp.eq.s32.totalorder %s29, 0
      %p315 = por %p313, %p314
      %p316 = scmp.ne.s32.totalorder %s308, %s310
      %p317 = scmp.eq.s32.totalorder %s34, 1
      %p318 = por %p316, %p317
      %p319 = scmp.ne.s32.totalorder %s310, %s311
      %p320 = scmp.eq.s32.totalorder %s34, 0
      %p321 = por %p319, %p320
      %p322 = scmp.ne.s32.totalorder %s310, %s311
      %p323 = scmp.eq.s32.totalorder %s35, 1
      %p324 = por %p322, %p323
      %p326 = scmp.ne.s32.totalorder %s311, %s325
      %p327 = scmp.eq.s32.totalorder %s35, 0
      %p328 = por %p326, %p327
      %s329 = ssub.s32 %s36, %s48
      %p330 = scmp.eq.s32.totalorder %s329, 0
      %s332 = sadd.s32 %s331, 1
      %s333 = scalar_select %p330, %s331, %s332
      %p336 = pneg %p330
      %p337 = scmp.eq.s32.totalorder %s29, 1
      %p338 = por %p336, %p337
      %p339 = scmp.ne.s32.totalorder %s331, %s334
      %p340 = scmp.eq.s32.totalorder %s29, 0
      %p341 = por %p339, %p340
      %p342 = scmp.ne.s32.totalorder %s331, %s334
      %p343 = scmp.eq.s32.totalorder %s34, 1
      %p344 = por %p342, %p343
      %p345 = scmp.ne.s32.totalorder %s334, %s335
      %p346 = scmp.eq.s32.totalorder %s34, 0
      %p347 = por %p345, %p346
      %p348 = scmp.ne.s32.totalorder %s334, %s335
      %p349 = scmp.eq.s32.totalorder %s35, 1
      %p350 = por %p348, %p349
      %p352 = scmp.ne.s32.totalorder %s335, %s351
      %p353 = scmp.eq.s32.totalorder %s35, 0
      %p354 = por %p352, %p353
      %p355 = scmp.le.s32.totalorder 1, %s29
      %p356 = scmp.lt.s32.totalorder %s29, 3
      %p357 = pnand %p355, %p356
      %p358 = pneg %p357
      // Predicated region
      $region9: #{tpu_custom_call.1} parent=5 // pred_check
        _
      $region10: #{tpu_custom_call.1} parent=5 // pred_check_branch
        %360 = sbr.rel (%p357) target = $region12
      $region11: #{tpu_custom_call.1} parent=5 // pred_region
        %s361 = ssub.s32 %s29, 1
        // Predicated region
        $region13: #{tpu_custom_call.1} parent=11 // pred_check
          %p362 = pneg %p90
        $region14: #{tpu_custom_call.1} parent=11 // pred_check_branch
          %364 = sbr.rel (%p362) target = $region16
        $region15: #{tpu_custom_call.1} parent=11 // pred_region
          %s366 = ssub.s32 128, 128
          %367 = vsyncadd [#allocation7], %s366
          %s369 = sshll.u32 [#allocation6], 4
          %s370 = int_to_ptr.vmem [resolvable:$true] %s369
          %372 = dma.hbm_to_vmem [thread:$0]  %s1, 128, %s370, [#allocation7]
        $region16: #{tpu_custom_call.1} parent=11 // pred_fallthru
          _
        // Predicated region
        $region17: #{tpu_custom_call.1} parent=11 // pred_check
          %p373 = pneg %p111
        $region18: #{tpu_custom_call.1} parent=11 // pred_check_branch
          %375 = sbr.rel (%p373) target = $region20
        $region19: #{tpu_custom_call.1} parent=11 // pred_region
          _
        $region20: #{tpu_custom_call.1} parent=11 // pred_fallthru
          _
        // Predicated region
        $region21: #{tpu_custom_call.1} parent=11 // pred_check
          %p376 = pneg %p132
        $region22: #{tpu_custom_call.1} parent=11 // pred_check_branch
          %378 = sbr.rel (%p376) target = $region24
        $region23: #{tpu_custom_call.1} parent=11 // pred_region
          %s380 = ssub.s32 512, 512
          %381 = vsyncadd [#allocation7], %s380
          %s382 = sshll.u32 [#allocation8], 4
          %s383 = int_to_ptr.vmem [resolvable:$true] %s382
          %388 = dma.hbm_to_vmem [thread:$0]  %s3, 512, %s383, [#allocation7], 64, 64, 4
        $region24: #{tpu_custom_call.1} parent=11 // pred_fallthru
          _
        // Predicated region
        $region25: #{tpu_custom_call.1} parent=11 // pred_check
          %p389 = pneg %p153
        $region26: #{tpu_custom_call.1} parent=11 // pred_check_branch
          %391 = sbr.rel (%p389) target = $region28
        $region27: #{tpu_custom_call.1} parent=11 // pred_region
          %s393 = ssub.s32 16, 16
          %394 = vsyncadd [#allocation10], %s393
          %s396 = sshll.u32 [#allocation9], 4
          %s397 = int_to_ptr.vmem [resolvable:$true] %s396
          %399 = dma.hbm_to_vmem [thread:$0]  %s4, 16, %s397, [#allocation10]
        $region28: #{tpu_custom_call.1} parent=11 // pred_fallthru
          _
        // Predicated region
        $region29: #{tpu_custom_call.1} parent=11 // pred_check
          %p400 = pneg %p174
        $region30: #{tpu_custom_call.1} parent=11 // pred_check_branch
          %402 = sbr.rel (%p400) target = $region32
        $region31: #{tpu_custom_call.1} parent=11 // pred_region
          %s404 = ssub.s32 8192, 8192
          %405 = vsyncadd [#allocation10], %s404
          %s406 = sshll.u32 [#allocation11], 4
          %s407 = int_to_ptr.vmem [resolvable:$true] %s406
          %412 = dma.hbm_to_vmem [thread:$0]  %s5, 8192, %s407, [#allocation10], 512, 512, 32
        $region32: #{tpu_custom_call.1} parent=11 // pred_fallthru
          _
        // Predicated region
        $region33: #{tpu_custom_call.1} parent=11 // pred_check
          %p413 = pneg %p195
        $region34: #{tpu_custom_call.1} parent=11 // pred_check_branch
          %415 = sbr.rel (%p413) target = $region36
        $region35: #{tpu_custom_call.1} parent=11 // pred_region
          _
        $region36: #{tpu_custom_call.1} parent=11 // pred_fallthru
          _
        // Predicated region
        $region37: #{tpu_custom_call.1} parent=11 // pred_check
          %p416 = pneg %p216
        $region38: #{tpu_custom_call.1} parent=11 // pred_check_branch
          %418 = sbr.rel (%p416) target = $region40
        $region39: #{tpu_custom_call.1} parent=11 // pred_region
          %s420 = ssub.s32 32768, 32768
          %421 = vsyncadd [#allocation13], %s420
          %s422 = sshll.u32 [#allocation12], 4
          %s423 = int_to_ptr.vmem [resolvable:$true] %s422
          %428 = dma.hbm_to_vmem [thread:$0]  %s7, 32768, %s423, [#allocation13], 256, 256, 16
        $region40: #{tpu_custom_call.1} parent=11 // pred_fallthru
          _
        // Predicated region
        $region41: #{tpu_custom_call.1} parent=11 // pred_check
          %p429 = pneg %p237
        $region42: #{tpu_custom_call.1} parent=11 // pred_check_branch
          %431 = sbr.rel (%p429) target = $region44
        $region43: #{tpu_custom_call.1} parent=11 // pred_region
          _
        $region44: #{tpu_custom_call.1} parent=11 // pred_fallthru
          _
        // Predicated region
        $region45: #{tpu_custom_call.1} parent=11 // pred_check
          %p432 = pneg %p258
        $region46: #{tpu_custom_call.1} parent=11 // pred_check_branch
          %434 = sbr.rel (%p432) target = $region48
        $region47: #{tpu_custom_call.1} parent=11 // pred_region
          %s436 = ssub.s32 8192, 8192
          %437 = vsyncadd [#allocation13], %s436
          %s438 = sshll.u32 [#allocation14], 4
          %s439 = int_to_ptr.vmem [resolvable:$true] %s438
          %444 = dma.hbm_to_vmem [thread:$0]  %s9, 8192, %s439, [#allocation13], 128, 128, 8
        $region48: #{tpu_custom_call.1} parent=11 // pred_fallthru
          _
        // Predicated region
        $region49: #{tpu_custom_call.1} parent=11 // pred_check
          %p445 = pneg %p279
        $region50: #{tpu_custom_call.1} parent=11 // pred_check_branch
          %447 = sbr.rel (%p445) target = $region52
        $region51: #{tpu_custom_call.1} parent=11 // pred_region
          _
        $region52: #{tpu_custom_call.1} parent=11 // pred_fallthru
          _
        // Predicated region
        $region53: #{tpu_custom_call.1} parent=11 // pred_check
          %p448 = pneg %p300
        $region54: #{tpu_custom_call.1} parent=11 // pred_check_branch
          %450 = sbr.rel (%p448) target = $region56
        $region55: #{tpu_custom_call.1} parent=11 // pred_region
          %s452 = ssub.s32 2048, 2048
          %453 = vsyncadd [#allocation16], %s452
          %s454 = sshll.u32 [#allocation15], 4
          %s455 = int_to_ptr.vmem [resolvable:$true] %s454
          %460 = dma.hbm_to_vmem [thread:$0]  %s11, 2048, %s455, [#allocation16], 64, 64, 4
        $region56: #{tpu_custom_call.1} parent=11 // pred_fallthru
          _
        // Predicated region
        $region57: #{tpu_custom_call.1} parent=11 // pred_check
          %p461 = pneg %p321
        $region58: #{tpu_custom_call.1} parent=11 // pred_check_branch
          %463 = sbr.rel (%p461) target = $region60
        $region59: #{tpu_custom_call.1} parent=11 // pred_region
          _
        $region60: #{tpu_custom_call.1} parent=11 // pred_fallthru
          _
      $region12: #{tpu_custom_call.1} parent=5 // pred_fallthru
        _
      %p464 = scmp.lt.s32.totalorder %s29, 2
      // Predicated region
      $region61: #{tpu_custom_call.1} parent=5 // pred_check
        %p465 = pneg %p464
      $region62: #{tpu_custom_call.1} parent=5 // pred_check_branch
        %467 = sbr.rel (%p465) target = $region64
      $region63: #{tpu_custom_call.1} parent=5 // pred_region
        // Predicated region
        $region65: #{tpu_custom_call.1} parent=63 // pred_check
          %p468 = pneg %p63
        $region66: #{tpu_custom_call.1} parent=63 // pred_check_branch
          %470 = sbr.rel (%p468) target = $region68
        $region67: #{tpu_custom_call.1} parent=63 // pred_region
          %s471 = sand.u32 %s53, 1
          %s472 = scalar_lea.sflag [#allocation4], %s471
          %s473 = sand.u32 %s53, 1
          %s474 = smul.addr %s473, 8
          %s475 = scalar_lea.vmem [#allocation3], %s474
          %s477 = ssub.s32 128, 128
          %478 = vsyncadd %s472, %s477
          %s479 = sadd.s32 %s37, %s36
          %s480 = smul.addr %s479, 128
          %s481 = scalar_lea.hbm %s0, %s480
          %s483 = sshll.u32 %s475, 4
          %s484 = int_to_ptr.vmem [resolvable:$true] %s483
          %486 = dma.hbm_to_vmem [thread:$0]  %s481, 128, %s484, %s472
        $region68: #{tpu_custom_call.1} parent=63 // pred_fallthru
          _
      $region64: #{tpu_custom_call.1} parent=5 // pred_fallthru
        _
      %p487 = scmp.le.s32.totalorder 1, %s29
      %p488 = scmp.lt.s32.totalorder %s29, 3
      %p489 = pnand %p487, %p488
      %p490 = pneg %p489
      // Predicated region
      $region69: #{tpu_custom_call.1} parent=5 // pred_check
        _
      $region70: #{tpu_custom_call.1} parent=5 // pred_check_branch
        %492 = sbr.rel (%p489) target = $region72
      $region71: #{tpu_custom_call.1} parent=5 // pred_region
        %s493 = ssub.s32 %s29, 1
        %s494 = sand.u32 %s56, 1
        %s495 = scalar_lea.sflag [#allocation4], %s494
        %s496 = sand.u32 %s56, 1
        %s497 = smul.addr %s496, 8
        %s498 = scalar_lea.vmem [#allocation3], %s497
        // Predicated region
        $region73: #{tpu_custom_call.1} parent=71 // pred_check
          %p499 = pneg %p69
        $region74: #{tpu_custom_call.1} parent=71 // pred_check_branch
          %501 = sbr.rel (%p499) target = $region76
        $region75: #{tpu_custom_call.1} parent=71 // pred_region
          %502 = dma.done %s495, 128
        $region76: #{tpu_custom_call.1} parent=71 // pred_fallthru
          _
        // Predicated region
        $region77: #{tpu_custom_call.1} parent=71 // pred_check
          %p503 = pneg %p90
        $region78: #{tpu_custom_call.1} parent=71 // pred_check_branch
          %505 = sbr.rel (%p503) target = $region80
        $region79: #{tpu_custom_call.1} parent=71 // pred_region
          %506 = dma.done [#allocation7], 128
        $region80: #{tpu_custom_call.1} parent=71 // pred_fallthru
          _
        // Predicated region
        $region81: #{tpu_custom_call.1} parent=71 // pred_check
          %p507 = pneg %p132
        $region82: #{tpu_custom_call.1} parent=71 // pred_check_branch
          %509 = sbr.rel (%p507) target = $region84
        $region83: #{tpu_custom_call.1} parent=71 // pred_region
          %510 = dma.done [#allocation7], 512
        $region84: #{tpu_custom_call.1} parent=71 // pred_fallthru
          _
        // Predicated region
        $region85: #{tpu_custom_call.1} parent=71 // pred_check
          %p511 = pneg %p153
        $region86: #{tpu_custom_call.1} parent=71 // pred_check_branch
          %513 = sbr.rel (%p511) target = $region88
        $region87: #{tpu_custom_call.1} parent=71 // pred_region
          %514 = dma.done [#allocation10], 16
        $region88: #{tpu_custom_call.1} parent=71 // pred_fallthru
          _
        // Predicated region
        $region89: #{tpu_custom_call.1} parent=71 // pred_check
          %p515 = pneg %p174
        $region90: #{tpu_custom_call.1} parent=71 // pred_check_branch
          %517 = sbr.rel (%p515) target = $region92
        $region91: #{tpu_custom_call.1} parent=71 // pred_region
          %518 = dma.done [#allocation10], 8192
        $region92: #{tpu_custom_call.1} parent=71 // pred_fallthru
          _
        // Predicated region
        $region93: #{tpu_custom_call.1} parent=71 // pred_check
          %p519 = pneg %p216
        $region94: #{tpu_custom_call.1} parent=71 // pred_check_branch
          %521 = sbr.rel (%p519) target = $region96
        $region95: #{tpu_custom_call.1} parent=71 // pred_region
          %522 = dma.done [#allocation13], 32768
        $region96: #{tpu_custom_call.1} parent=71 // pred_fallthru
          _
        // Predicated region
        $region97: #{tpu_custom_call.1} parent=71 // pred_check
          %p523 = pneg %p258
        $region98: #{tpu_custom_call.1} parent=71 // pred_check_branch
          %525 = sbr.rel (%p523) target = $region100
        $region99: #{tpu_custom_call.1} parent=71 // pred_region
          %526 = dma.done [#allocation13], 8192
        $region100: #{tpu_custom_call.1} parent=71 // pred_fallthru
          _
        // Predicated region
        $region101: #{tpu_custom_call.1} parent=71 // pred_check
          %p527 = pneg %p300
        $region102: #{tpu_custom_call.1} parent=71 // pred_check_branch
          %529 = sbr.rel (%p527) target = $region104
        $region103: #{tpu_custom_call.1} parent=71 // pred_region
          %530 = dma.done [#allocation16], 2048
        $region104: #{tpu_custom_call.1} parent=71 // pred_fallthru
          _
        %s531 = sand.u32 %s56, 1
        %s532 = scalar_lea.sflag [#allocation4], %s531
        %s533 = sand.u32 %s56, 1
        %s534 = smul.addr %s533, 8
        %s535 = scalar_lea.vmem [#allocation3], %s534
        %p536 = pneg %p69
        %p537 = pneg %p66
        %p538 = pneg %p90
        %p539 = pneg %p87
        %p540 = pneg %p111
        %p541 = pneg %p108
        %p542 = pneg %p132
        %p543 = pneg %p129
        %p544 = pneg %p153
        %p545 = pneg %p150
        %p546 = pneg %p174
        %p547 = pneg %p171
        %p548 = pneg %p195
        %p549 = pneg %p192
        %p550 = pneg %p216
        %p551 = pneg %p213
        %p552 = pneg %p237
        %p553 = pneg %p234
        %p554 = pneg %p258
        %p555 = pneg %p255
        %p556 = pneg %p279
        %p557 = pneg %p276
        %p558 = pneg %p300
        %p559 = pneg %p297
        %p560 = pneg %p321
        %p561 = pneg %p318
        %p562 = pneg %p347
        %p563 = pneg %p344
        %s564 = sand.u32 %s334, 1
        %s565 = scalar_lea.sflag [#allocation5], %s564
        %s566 = sand.u32 %s334, 1
        %s567 = scalar_lea.vmem [#allocation17], %s566
        %p569 = scmp.eq.s32.totalorder %s39, 0
        // Predicated region
        $region105: #{tpu_custom_call.1} parent=71 // pred_check
          %p570 = pneg %p569
        $region106: #{tpu_custom_call.1} parent=71 // pred_check_branch
          %572 = sbr.rel (%p570) target = $region108
        $region107: #{tpu_custom_call.1} parent=71 // pred_region
          %573 = vst [vmem:[#allocation2] sm:$0xff] -inf
        $region108: #{tpu_custom_call.1} parent=71 // pred_fallthru
          _
        %v574 = vld [vmem:[%s498] sm:$0xff]
        %575 = vxpose.xlu0.b32.start [1/16] %v574, 128
        %576 = vxpose.xlu0.b32.cont [2/16] 0.0, 128
        %577 = vxpose.xlu0.b32.cont [3/16] 0.0, 128
        %578 = vxpose.xlu0.b32.cont [4/16] 0.0, 128
        %579 = vxpose.xlu0.b32.cont [5/16] 0.0, 128
        %580 = vxpose.xlu0.b32.cont [6/16] 0.0, 128
        %581 = vxpose.xlu0.b32.cont [7/16] 0.0, 128
        %582 = vxpose.xlu0.b32.cont [8/16] 0.0, 128
        %583 = vxpose.xlu0.b32.cont [9/16] 0.0, 128
        %584 = vxpose.xlu0.b32.cont [10/16] 0.0, 128
        %585 = vxpose.xlu0.b32.cont [11/16] 0.0, 128
        %586 = vxpose.xlu0.b32.cont [12/16] 0.0, 128
        %587 = vxpose.xlu0.b32.cont [13/16] 0.0, 128
        %588 = vxpose.xlu0.b32.cont [14/16] 0.0, 128
        %589 = vxpose.xlu0.b32.cont [15/16] 0.0, 128
        %590 = vxpose.xlu0.b32.end [16/16] 0.0, 128
        %v591 = vpop.trf.xlu0
        %v592 = vpop.trf.xlu0
        %v593 = vpop.trf.xlu0
        %v594 = vpop.trf.xlu0
        %v595 = vpop.trf.xlu0
        %v596 = vpop.trf.xlu0
        %v597 = vpop.trf.xlu0
        %v598 = vpop.trf.xlu0
        %v599 = vpop.trf.xlu0
        %v600 = vpop.trf.xlu0
        %v601 = vpop.trf.xlu0
        %v602 = vpop.trf.xlu0
        %v603 = vpop.trf.xlu0
        %v604 = vpop.trf.xlu0
        %v605 = vpop.trf.xlu0
        %v606 = vpop.trf.xlu0
        %v607 = vld [vmem:[%s2] sm:$0x1]
        %v608 = vld [vmem:[#allocation6] sm:$0x1]
        %610 = vset.pattern.permute.xlu0 0
        %611 = vperm.xlu0 %610, %v591
        %v612 = vpop.permute.xlu0 %611
        %615 = vset.pattern.permute.xlu0 0
        %616 = vperm.xlu0 %615, %v592
        %v617 = vpop.permute.xlu0 %616
        %620 = vset.pattern.permute.xlu0 0
        %621 = vperm.xlu0 %620, %v593
        %v622 = vpop.permute.xlu0 %621
        %625 = vset.pattern.permute.xlu0 0
        %626 = vperm.xlu0 %625, %v594
        %v627 = vpop.permute.xlu0 %626
        %630 = vset.pattern.permute.xlu0 0
        %631 = vperm.xlu0 %630, %v595
        %v632 = vpop.permute.xlu0 %631
        %635 = vset.pattern.permute.xlu0 0
        %636 = vperm.xlu0 %635, %v596
        %v637 = vpop.permute.xlu0 %636
        %640 = vset.pattern.permute.xlu0 0
        %641 = vperm.xlu0 %640, %v597
        %v642 = vpop.permute.xlu0 %641
        %645 = vset.pattern.permute.xlu0 0
        %646 = vperm.xlu0 %645, %v598
        %v647 = vpop.permute.xlu0 %646
        %650 = vset.pattern.permute.xlu0 0
        %651 = vperm.xlu0 %650, %v599
        %v652 = vpop.permute.xlu0 %651
        %655 = vset.pattern.permute.xlu0 0
        %656 = vperm.xlu0 %655, %v600
        %v657 = vpop.permute.xlu0 %656
        %660 = vset.pattern.permute.xlu0 0
        %661 = vperm.xlu0 %660, %v601
        %v662 = vpop.permute.xlu0 %661
        %665 = vset.pattern.permute.xlu0 0
        %666 = vperm.xlu0 %665, %v602
        %v667 = vpop.permute.xlu0 %666
        %670 = vset.pattern.permute.xlu0 0
        %671 = vperm.xlu0 %670, %v603
        %v672 = vpop.permute.xlu0 %671
        %675 = vset.pattern.permute.xlu0 0
        %676 = vperm.xlu0 %675, %v604
        %v677 = vpop.permute.xlu0 %676
        %680 = vset.pattern.permute.xlu0 0
        %681 = vperm.xlu0 %680, %v605
        %v682 = vpop.permute.xlu0 %681
        %685 = vset.pattern.permute.xlu0 0
        %686 = vperm.xlu0 %685, %v606
        %v687 = vpop.permute.xlu0 %686
        %v689 = vlaneseq
        %v690 = vshrl.u32 %v689, 7
        %v691 = vsub.s32 0, %v690
        %v692 = vrot.slane %v608, %v691
        %v693 = vmul.f32 %v612, %v692
        %v694 = vmul.f32 %v617, %v692
        %v695 = vmul.f32 %v622, %v692
        %v696 = vmul.f32 %v627, %v692
        %v697 = vmul.f32 %v632, %v692
        %v698 = vmul.f32 %v637, %v692
        %v699 = vmul.f32 %v642, %v692
        %v700 = vmul.f32 %v647, %v692
        %v701 = vmul.f32 %v652, %v692
        %v702 = vmul.f32 %v657, %v692
        %v703 = vmul.f32 %v662, %v692
        %v704 = vmul.f32 %v667, %v692
        %v705 = vmul.f32 %v672, %v692
        %v706 = vmul.f32 %v677, %v692
        %v707 = vmul.f32 %v682, %v692
        %v708 = vmul.f32 %v687, %v692
        %v710 = vlaneseq
        %v711 = vshrl.u32 %v710, 7
        %v712 = vsub.s32 0, %v711
        %v713 = vrot.slane %v607, %v712
        %v715 = vadd.f32 %v713, %v693
        %v716 = vadd.f32 %v713, %v694
        %v717 = vadd.f32 %v713, %v695
        %v718 = vadd.f32 %v713, %v696
        %v719 = vadd.f32 %v713, %v697
        %v720 = vadd.f32 %v713, %v698
        %v721 = vadd.f32 %v713, %v699
        %v722 = vadd.f32 %v713, %v700
        %v723 = vadd.f32 %v713, %v701
        %v724 = vadd.f32 %v713, %v702
        %v725 = vadd.f32 %v713, %v703
        %v726 = vadd.f32 %v713, %v704
        %v727 = vadd.f32 %v713, %v705
        %v728 = vadd.f32 %v713, %v706
        %v729 = vadd.f32 %v713, %v707
        %v730 = vadd.f32 %v713, %v708
        %v731 = vld [vmem:[#allocation6 + $0x1] sm:$0x1]
        %732 = vset.pattern.permute.xlu0 1
        %733 = vperm.xlu0 %732, %v591
        %v734 = vpop.permute.xlu0 %733
        %736 = vset.pattern.permute.xlu0 1
        %737 = vperm.xlu0 %736, %v592
        %v738 = vpop.permute.xlu0 %737
        %740 = vset.pattern.permute.xlu0 1
        %741 = vperm.xlu0 %740, %v593
        %v742 = vpop.permute.xlu0 %741
        %744 = vset.pattern.permute.xlu0 1
        %745 = vperm.xlu0 %744, %v594
        %v746 = vpop.permute.xlu0 %745
        %748 = vset.pattern.permute.xlu0 1
        %749 = vperm.xlu0 %748, %v595
        %v750 = vpop.permute.xlu0 %749
        %752 = vset.pattern.permute.xlu0 1
        %753 = vperm.xlu0 %752, %v596
        %v754 = vpop.permute.xlu0 %753
        %756 = vset.pattern.permute.xlu0 1
        %757 = vperm.xlu0 %756, %v597
        %v758 = vpop.permute.xlu0 %757
        %760 = vset.pattern.permute.xlu0 1
        %761 = vperm.xlu0 %760, %v598
        %v762 = vpop.permute.xlu0 %761
        %764 = vset.pattern.permute.xlu0 1
        %765 = vperm.xlu0 %764, %v599
        %v766 = vpop.permute.xlu0 %765
        %768 = vset.pattern.permute.xlu0 1
        %769 = vperm.xlu0 %768, %v600
        %v770 = vpop.permute.xlu0 %769
        %772 = vset.pattern.permute.xlu0 1
        %773 = vperm.xlu0 %772, %v601
        %v774 = vpop.permute.xlu0 %773
        %776 = vset.pattern.permute.xlu0 1
        %777 = vperm.xlu0 %776, %v602
        %v778 = vpop.permute.xlu0 %777
        %780 = vset.pattern.permute.xlu0 1
        %781 = vperm.xlu0 %780, %v603
        %v782 = vpop.permute.xlu0 %781
        %784 = vset.pattern.permute.xlu0 1
        %785 = vperm.xlu0 %784, %v604
        %v786 = vpop.permute.xlu0 %785
        %788 = vset.pattern.permute.xlu0 1
        %789 = vperm.xlu0 %788, %v605
        %v790 = vpop.permute.xlu0 %789
        %792 = vset.pattern.permute.xlu0 1
        %793 = vperm.xlu0 %792, %v606
        %v794 = vpop.permute.xlu0 %793
        %v796 = vlaneseq
        %v797 = vshrl.u32 %v796, 7
        %v798 = vsub.s32 0, %v797
        %v799 = vrot.slane %v731, %v798
        %v800 = vmul.f32 %v734, %v799
        %v801 = vmul.f32 %v738, %v799
        %v802 = vmul.f32 %v742, %v799
        %v803 = vmul.f32 %v746, %v799
        %v804 = vmul.f32 %v750, %v799
        %v805 = vmul.f32 %v754, %v799
        %v806 = vmul.f32 %v758, %v799
        %v807 = vmul.f32 %v762, %v799
        %v808 = vmul.f32 %v766, %v799
        %v809 = vmul.f32 %v770, %v799
        %v810 = vmul.f32 %v774, %v799
        %v811 = vmul.f32 %v778, %v799
        %v812 = vmul.f32 %v782, %v799
        %v813 = vmul.f32 %v786, %v799
        %v814 = vmul.f32 %v790, %v799
        %v815 = vmul.f32 %v794, %v799
        %v816 = vadd.f32 %v715, %v800
        %v817 = vadd.f32 %v716, %v801
        %v818 = vadd.f32 %v717, %v802
        %v819 = vadd.f32 %v718, %v803
        %v820 = vadd.f32 %v719, %v804
        %v821 = vadd.f32 %v720, %v805
        %v822 = vadd.f32 %v721, %v806
        %v823 = vadd.f32 %v722, %v807
        %v824 = vadd.f32 %v723, %v808
        %v825 = vadd.f32 %v724, %v809
        %v826 = vadd.f32 %v725, %v810
        %v827 = vadd.f32 %v726, %v811
        %v828 = vadd.f32 %v727, %v812
        %v829 = vadd.f32 %v728, %v813
        %v830 = vadd.f32 %v729, %v814
        %v831 = vadd.f32 %v730, %v815
        %v832 = vld [vmem:[#allocation6 + $0x2] sm:$0x1]
        %833 = vset.pattern.permute.xlu0 2
        %834 = vperm.xlu0 %833, %v591
        %v835 = vpop.permute.xlu0 %834
        %837 = vset.pattern.permute.xlu0 2
        %838 = vperm.xlu0 %837, %v592
        %v839 = vpop.permute.xlu0 %838
        %841 = vset.pattern.permute.xlu0 2
        %842 = vperm.xlu0 %841, %v593
        %v843 = vpop.permute.xlu0 %842
        %845 = vset.pattern.permute.xlu0 2
        %846 = vperm.xlu0 %845, %v594
        %v847 = vpop.permute.xlu0 %846
        %849 = vset.pattern.permute.xlu0 2
        %850 = vperm.xlu0 %849, %v595
        %v851 = vpop.permute.xlu0 %850
        %853 = vset.pattern.permute.xlu0 2
        %854 = vperm.xlu0 %853, %v596
        %v855 = vpop.permute.xlu0 %854
        %857 = vset.pattern.permute.xlu0 2
        %858 = vperm.xlu0 %857, %v597
        %v859 = vpop.permute.xlu0 %858
        %861 = vset.pattern.permute.xlu0 2
        %862 = vperm.xlu0 %861, %v598
        %v863 = vpop.permute.xlu0 %862
        %865 = vset.pattern.permute.xlu0 2
        %866 = vperm.xlu0 %865, %v599
        %v867 = vpop.permute.xlu0 %866
        %869 = vset.pattern.permute.xlu0 2
        %870 = vperm.xlu0 %869, %v600
        %v871 = vpop.permute.xlu0 %870
        %873 = vset.pattern.permute.xlu0 2
        %874 = vperm.xlu0 %873, %v601
        %v875 = vpop.permute.xlu0 %874
        %877 = vset.pattern.permute.xlu0 2
        %878 = vperm.xlu0 %877, %v602
        %v879 = vpop.permute.xlu0 %878
        %881 = vset.pattern.permute.xlu0 2
        %882 = vperm.xlu0 %881, %v603
        %v883 = vpop.permute.xlu0 %882
        %885 = vset.pattern.permute.xlu0 2
        %886 = vperm.xlu0 %885, %v604
        %v887 = vpop.permute.xlu0 %886
        %889 = vset.pattern.permute.xlu0 2
        %890 = vperm.xlu0 %889, %v605
        %v891 = vpop.permute.xlu0 %890
        %893 = vset.pattern.permute.xlu0 2
        %894 = vperm.xlu0 %893, %v606
        %v895 = vpop.permute.xlu0 %894
        %v897 = vlaneseq
        %v898 = vshrl.u32 %v897, 7
        %v899 = vsub.s32 0, %v898
        %v900 = vrot.slane %v832, %v899
        %v901 = vmul.f32 %v835, %v900
        %v902 = vmul.f32 %v839, %v900
        %v903 = vmul.f32 %v843, %v900
        %v904 = vmul.f32 %v847, %v900
        %v905 = vmul.f32 %v851, %v900
        %v906 = vmul.f32 %v855, %v900
        %v907 = vmul.f32 %v859, %v900
        %v908 = vmul.f32 %v863, %v900
        %v909 = vmul.f32 %v867, %v900
        %v910 = vmul.f32 %v871, %v900
        %v911 = vmul.f32 %v875, %v900
        %v912 = vmul.f32 %v879, %v900
        %v913 = vmul.f32 %v883, %v900
        %v914 = vmul.f32 %v887, %v900
        %v915 = vmul.f32 %v891, %v900
        %v916 = vmul.f32 %v895, %v900
        %v917 = vadd.f32 %v816, %v901
        %v918 = vadd.f32 %v817, %v902
        %v919 = vadd.f32 %v818, %v903
        %v920 = vadd.f32 %v819, %v904
        %v921 = vadd.f32 %v820, %v905
        %v922 = vadd.f32 %v821, %v906
        %v923 = vadd.f32 %v822, %v907
        %v924 = vadd.f32 %v823, %v908
        %v925 = vadd.f32 %v824, %v909
        %v926 = vadd.f32 %v825, %v910
        %v927 = vadd.f32 %v826, %v911
        %v928 = vadd.f32 %v827, %v912
        %v929 = vadd.f32 %v828, %v913
        %v930 = vadd.f32 %v829, %v914
        %v931 = vadd.f32 %v830, %v915
        %v932 = vadd.f32 %v831, %v916
        %v933 = vmax.f32 %v917, 0.0
        %v934 = vmax.f32 %v918, 0.0
        %v935 = vmax.f32 %v919, 0.0
        %v936 = vmax.f32 %v920, 0.0
        %v937 = vmax.f32 %v921, 0.0
        %v938 = vmax.f32 %v922, 0.0
        %v939 = vmax.f32 %v923, 0.0
        %v940 = vmax.f32 %v924, 0.0
        %v941 = vmax.f32 %v925, 0.0
        %v942 = vmax.f32 %v926, 0.0
        %v943 = vmax.f32 %v927, 0.0
        %v944 = vmax.f32 %v928, 0.0
        %v945 = vmax.f32 %v929, 0.0
        %v946 = vmax.f32 %v930, 0.0
        %v947 = vmax.f32 %v931, 0.0
        %v948 = vmax.f32 %v932, 0.0
        %v949 = vpack.c.bf16 %v934, %v933
        %v950 = vpack.c.bf16 %v936, %v935
        %v951 = vpack.c.bf16 %v938, %v937
        %v952 = vpack.c.bf16 %v940, %v939
        %v953 = vpack.c.bf16 %v942, %v941
        %v954 = vpack.c.bf16 %v944, %v943
        %v955 = vpack.c.bf16 %v946, %v945
        %v956 = vpack.c.bf16 %v948, %v947
        %v957 = vld [vmem:[#allocation8] sm:$0xf]
        %v958 = vld [vmem:[#allocation8 + $0x4] sm:$0xf]
        %v959 = vld [vmem:[#allocation8 + $0x8] sm:$0xf]
        %v960 = vld [vmem:[#allocation8 + $0xc] sm:$0xf]
        %v961 = vld [vmem:[#allocation8 + $0x10] sm:$0xf]
        %v962 = vld [vmem:[#allocation8 + $0x14] sm:$0xf]
        %v963 = vld [vmem:[#allocation8 + $0x18] sm:$0xf]
        %v964 = vld [vmem:[#allocation8 + $0x1c] sm:$0xf]
        %v965 = vld [vmem:[#allocation9] sm:$0x1]
        %v967 = vlaneseq
        %v968 = vshrl.u32 %v967, 7
        %v969 = vsub.s32 0, %v968
        %v970 = vrot.slane %v965, %v969
        %v980 = vunpack.c.l.b16 %v957
        %v981 = vunpack.c.l.b16 %v958
        %v982 = vunpack.c.l.b16 %v959
        %v983 = vunpack.c.l.b16 %v960
        %v984 = vunpack.c.l.b16 %v961
        %v985 = vunpack.c.l.b16 %v962
        %v986 = vunpack.c.l.b16 %v963
        %v987 = vunpack.c.l.b16 %v964
        %v988 = vpack.c.b16 %v981, %v980
        %v989 = vpack.c.b16 %v983, %v982
        %v990 = vpack.c.b16 %v985, %v984
        %v991 = vpack.c.b16 %v987, %v986
        %vm996 = vcmask 523264
        %v998 = vsel %vm996, %v949, 0
        %v1001 = vsel %vm996, %v950, 0
        %v1004 = vsel %vm996, %v951, 0
        %v1007 = vsel %vm996, %v952, 0
        %v1010 = vsel %vm996, %v953, 0
        %v1013 = vsel %vm996, %v954, 0
        %v1016 = vsel %vm996, %v955, 0
        %v1019 = vsel %vm996, %v956, 0
        %1021 = vmatprep.subr.bf16.mxu0 0
        %1022 = vmatpush1.bf16.msra.mxu0 %v988
        %1023 = vmatprep.subr.bf16.mxu0 0
        %1024 = vmatpush1.bf16.msra.mxu0 %v989
        %1025 = vmatprep.subr.bf16.mxu0 0
        %1026 = vmatpush1.bf16.msra.mxu0 %v990
        %1027 = vmatprep.subr.bf16.mxu0 0
        %1028 = vmatpush1.bf16.msra.mxu0 %v991
        %1029 = vmatprep.subr.bf16.mxu0 0
        %1030 = vmatpush1.bf16.msra.mxu0 0
        %1031 = vmatprep.subr.bf16.mxu0 0
        %1032 = vmatpush1.bf16.msra.mxu0 0
        %1033 = vmatprep.subr.bf16.mxu0 0
        %1034 = vmatpush1.bf16.msra.mxu0 0
        %1035 = vmatprep.subr.bf16.mxu0 0
        %1036 = vmatpush1.bf16.msra.mxu0 0
        %1037 = vmatprep.subr.bf16.mxu0 0
        %1038 = vmatpush1.bf16.msra.mxu0 0
        %1039 = vmatprep.subr.bf16.mxu0 0
        %1040 = vmatpush1.bf16.msra.mxu0 0
        %1041 = vmatprep.subr.bf16.mxu0 0
        %1042 = vmatpush1.bf16.msra.mxu0 0
        %1043 = vmatprep.subr.bf16.mxu0 0
        %1044 = vmatpush1.bf16.msra.mxu0 0
        %1045 = vmatprep.subr.bf16.mxu0 0
        %1046 = vmatpush1.bf16.msra.mxu0 0
        %1047 = vmatprep.subr.bf16.mxu0 0
        %1048 = vmatpush1.bf16.msra.mxu0 0
        %1049 = vmatprep.subr.bf16.mxu0 0
        %1050 = vmatpush1.bf16.msra.mxu0 0
        %1051 = vmatprep.subr.bf16.mxu0 0
        %1052 = vmatpush1.bf16.msra.mxu0 0
        %1053 = vmatprep.mubr.bf16.mxu0 0
        %1054 = vmatmul.mubr.bf16.gmra.mrb[0].mxu0 %v998
        %v1055 = vpop.f32.mrb[0].mxu0
        %v1056 = vadd.f32 %v970, %v1055
        %v1057 = vpop.f32.mrb[0].mxu0
        %v1058 = vpop.f32.mrb[0].mxu0
        %v1059 = vadd.f32 %v970, %v1058
        %v1060 = vpop.f32.mrb[0].mxu0
        %1061 = vmatprep.mubr.bf16.mxu0 0
        %1062 = vmatmul.mubr.bf16.gmra.mrb[0].mxu0 %v1001
        %v1063 = vpop.f32.mrb[0].mxu0
        %v1064 = vadd.f32 %v970, %v1063
        %v1065 = vpop.f32.mrb[0].mxu0
        %v1066 = vpop.f32.mrb[0].mxu0
        %v1067 = vadd.f32 %v970, %v1066
        %v1068 = vpop.f32.mrb[0].mxu0
        %1069 = vmatprep.mubr.bf16.mxu0 0
        %1070 = vmatmul.mubr.bf16.gmra.mrb[0].mxu0 %v1004
        %v1071 = vpop.f32.mrb[0].mxu0
        %v1072 = vadd.f32 %v970, %v1071
        %v1073 = vpop.f32.mrb[0].mxu0
        %v1074 = vpop.f32.mrb[0].mxu0
        %v1075 = vadd.f32 %v970, %v1074
        %v1076 = vpop.f32.mrb[0].mxu0
        %1077 = vmatprep.mubr.bf16.mxu0 0
        %1078 = vmatmul.mubr.bf16.gmra.mrb[0].mxu0 %v1007
        %v1079 = vpop.f32.mrb[0].mxu0
        %v1080 = vadd.f32 %v970, %v1079
        %v1081 = vpop.f32.mrb[0].mxu0
        %v1082 = vpop.f32.mrb[0].mxu0
        %v1083 = vadd.f32 %v970, %v1082
        %v1084 = vpop.f32.mrb[0].mxu0
        %1085 = vmatprep.mubr.bf16.mxu0 0
        %1086 = vmatmul.mubr.bf16.gmra.mrb[0].mxu0 %v1010
        %v1087 = vpop.f32.mrb[0].mxu0
        %v1088 = vadd.f32 %v970, %v1087
        %v1089 = vpop.f32.mrb[0].mxu0
        %v1090 = vpop.f32.mrb[0].mxu0
        %v1091 = vadd.f32 %v970, %v1090
        %v1092 = vpop.f32.mrb[0].mxu0
        %1093 = vmatprep.mubr.bf16.mxu0 0
        %1094 = vmatmul.mubr.bf16.gmra.mrb[0].mxu0 %v1013
        %v1095 = vpop.f32.mrb[0].mxu0
        %v1096 = vadd.f32 %v970, %v1095
        %v1097 = vpop.f32.mrb[0].mxu0
        %v1098 = vpop.f32.mrb[0].mxu0
        %v1099 = vadd.f32 %v970, %v1098
        %v1100 = vpop.f32.mrb[0].mxu0
        %1101 = vmatprep.mubr.bf16.mxu0 0
        %1102 = vmatmul.mubr.bf16.gmra.mrb[0].mxu0 %v1016
        %v1103 = vpop.f32.mrb[0].mxu0
        %v1104 = vadd.f32 %v970, %v1103
        %v1105 = vpop.f32.mrb[0].mxu0
        %v1106 = vpop.f32.mrb[0].mxu0
        %v1107 = vadd.f32 %v970, %v1106
        %v1108 = vpop.f32.mrb[0].mxu0
        %1109 = vmatprep.mubr.bf16.mxu0 0
        %1110 = vmatmul.mubr.bf16.gmra.mrb[0].mxu0 %v1019
        %v1111 = vpop.f32.mrb[0].mxu0
        %v1112 = vadd.f32 %v970, %v1111
        %v1113 = vpop.f32.mrb[0].mxu0
        %v1114 = vpop.f32.mrb[0].mxu0
        %v1115 = vadd.f32 %v970, %v1114
        %v1116 = vpop.f32.mrb[0].mxu0
        %1117 = vdwg.mxu0
        %v1118 = vmax.f32 %v1056, 0.0
        %v1119 = vmax.f32 %v1059, 0.0
        %v1120 = vmax.f32 %v1064, 0.0
        %v1121 = vmax.f32 %v1067, 0.0
        %v1122 = vmax.f32 %v1072, 0.0
        %v1123 = vmax.f32 %v1075, 0.0
        %v1124 = vmax.f32 %v1080, 0.0
        %v1125 = vmax.f32 %v1083, 0.0
        %v1126 = vmax.f32 %v1088, 0.0
        %v1127 = vmax.f32 %v1091, 0.0
        %v1128 = vmax.f32 %v1096, 0.0
        %v1129 = vmax.f32 %v1099, 0.0
        %v1130 = vmax.f32 %v1104, 0.0
        %v1131 = vmax.f32 %v1107, 0.0
        %v1132 = vmax.f32 %v1112, 0.0
        %v1133 = vmax.f32 %v1115, 0.0
        %v1134 = vpack.c.bf16 %v1119, %v1118
        %v1135 = vpack.c.bf16 %v1121, %v1120
        %v1136 = vpack.c.bf16 %v1123, %v1122
        %v1137 = vpack.c.bf16 %v1125, %v1124
        %v1138 = vpack.c.bf16 %v1127, %v1126
        %v1139 = vpack.c.bf16 %v1129, %v1128
        %v1140 = vpack.c.bf16 %v1131, %v1130
        %v1141 = vpack.c.bf16 %v1133, %v1132
        %v1142 = vld [vmem:[#allocation11] sm:$0xff]
        %v1143 = vld [vmem:[#allocation11 + $0x8] sm:$0xff]
        %v1144 = vld [vmem:[#allocation11 + $0x10] sm:$0xff]
        %v1145 = vld [vmem:[#allocation11 + $0x18] sm:$0xff]
        %v1146 = vld [vmem:[#allocation11 + $0x20] sm:$0xff]
        %v1147 = vld [vmem:[#allocation11 + $0x28] sm:$0xff]
        %v1148 = vld [vmem:[#allocation11 + $0x30] sm:$0xff]
        %v1149 = vld [vmem:[#allocation11 + $0x38] sm:$0xff]
        %v1150 = vld [vmem:[#allocation11 + $0x40] sm:$0xff]
        %v1151 = vld [vmem:[#allocation11 + $0x48] sm:$0xff]
        %v1152 = vld [vmem:[#allocation11 + $0x50] sm:$0xff]
        %v1153 = vld [vmem:[#allocation11 + $0x58] sm:$0xff]
        %v1154 = vld [vmem:[#allocation11 + $0x60] sm:$0xff]
        %v1155 = vld [vmem:[#allocation11 + $0x68] sm:$0xff]
        %v1156 = vld [vmem:[#allocation11 + $0x70] sm:$0xff]
        %v1157 = vld [vmem:[#allocation11 + $0x78] sm:$0xff]
        %v1158 = vld [vmem:[#allocation11 + $0x80] sm:$0xff]
        %v1159 = vld [vmem:[#allocation11 + $0x88] sm:$0xff]
        %v1160 = vld [vmem:[#allocation11 + $0x90] sm:$0xff]
        %v1161 = vld [vmem:[#allocation11 + $0x98] sm:$0xff]
        %v1162 = vld [vmem:[#allocation11 + $0xa0] sm:$0xff]
        %v1163 = vld [vmem:[#allocation11 + $0xa8] sm:$0xff]
        %v1164 = vld [vmem:[#allocation11 + $0xb0] sm:$0xff]
        %v1165 = vld [vmem:[#allocation11 + $0xb8] sm:$0xff]
        %v1166 = vld [vmem:[#allocation11 + $0xc0] sm:$0xff]
        %v1167 = vld [vmem:[#allocation11 + $0xc8] sm:$0xff]
        %v1168 = vld [vmem:[#allocation11 + $0xd0] sm:$0xff]
        %v1169 = vld [vmem:[#allocation11 + $0xd8] sm:$0xff]
        %v1170 = vld [vmem:[#allocation11 + $0xe0] sm:$0xff]
        %v1171 = vld [vmem:[#allocation11 + $0xe8] sm:$0xff]
        %v1172 = vld [vmem:[#allocation11 + $0xf0] sm:$0xff]
        %v1173 = vld [vmem:[#allocation11 + $0xf8] sm:$0xff]
        %v1174 = vld [vmem:[#allocation11 + $0x100] sm:$0xff]
        %v1175 = vld [vmem:[#allocation11 + $0x108] sm:$0xff]
        %v1176 = vld [vmem:[#allocation11 + $0x110] sm:$0xff]
        %v1177 = vld [vmem:[#allocation11 + $0x118] sm:$0xff]
        %v1178 = vld [vmem:[#allocation11 + $0x120] sm:$0xff]
        %v1179 = vld [vmem:[#allocation11 + $0x128] sm:$0xff]
        %v1180 = vld [vmem:[#allocation11 + $0x130] sm:$0xff]
        %v1181 = vld [vmem:[#allocation11 + $0x138] sm:$0xff]
        %v1182 = vld [vmem:[#allocation11 + $0x140] sm:$0xff]
        %v1183 = vld [vmem:[#allocation11 + $0x148] sm:$0xff]
        %v1184 = vld [vmem:[#allocation11 + $0x150] sm:$0xff]
        %v1185 = vld [vmem:[#allocation11 + $0x158] sm:$0xff]
        %v1186 = vld [vmem:[#allocation11 + $0x160] sm:$0xff]
        %v1187 = vld [vmem:[#allocation11 + $0x168] sm:$0xff]
        %v1188 = vld [vmem:[#allocation11 + $0x170] sm:$0xff]
        %v1189 = vld [vmem:[#allocation11 + $0x178] sm:$0xff]
        %v1190 = vld [vmem:[#allocation11 + $0x180] sm:$0xff]
        %v1191 = vld [vmem:[#allocation11 + $0x188] sm:$0xff]
        %v1192 = vld [vmem:[#allocation11 + $0x190] sm:$0xff]
        %v1193 = vld [vmem:[#allocation11 + $0x198] sm:$0xff]
        %v1194 = vld [vmem:[#allocation11 + $0x1a0] sm:$0xff]
        %v1195 = vld [vmem:[#allocation11 + $0x1a8] sm:$0xff]
        %v1196 = vld [vmem:[#allocation11 + $0x1b0] sm:$0xff]
        %v1197 = vld [vmem:[#allocation11 + $0x1b8] sm:$0xff]
        %v1198 = vld [vmem:[#allocation11 + $0x1c0] sm:$0xff]
        %v1199 = vld [vmem:[#allocation11 + $0x1c8] sm:$0xff]
        %v1200 = vld [vmem:[#allocation11 + $0x1d0] sm:$0xff]
        %v1201 = vld [vmem:[#allocation11 + $0x1d8] sm:$0xff]
        %v1202 = vld [vmem:[#allocation11 + $0x1e0] sm:$0xff]
        %v1203 = vld [vmem:[#allocation11 + $0x1e8] sm:$0xff]
        %v1204 = vld [vmem:[#allocation11 + $0x1f0] sm:$0xff]
        %v1205 = vld [vmem:[#allocation11 + $0x1f8] sm:$0xff]
        %v1206 = vld [vmem:[%s6] sm:$0xff]
        %v1208 = vlaneseq
        %v1209 = vshrl.u32 %v1208, 7
        %v1210 = vsub.s32 0, %v1209
        %v1211 = vrot.slane %v1206, %v1210
        %v1212 = vlaneseq
        %v1213 = vshrl.u32 %v1212, 7
        %v1214 = vsub.s32 1, %v1213
        %v1215 = vrot.slane %v1206, %v1214
        %v1216 = vlaneseq
        %v1217 = vshrl.u32 %v1216, 7
        %v1218 = vsub.s32 2, %v1217
        %v1219 = vrot.slane %v1206, %v1218
        %v1220 = vlaneseq
        %v1221 = vshrl.u32 %v1220, 7
        %v1222 = vsub.s32 3, %v1221
        %v1223 = vrot.slane %v1206, %v1222
        %v1224 = vlaneseq
        %v1225 = vshrl.u32 %v1224, 7
        %v1226 = vsub.s32 4, %v1225
        %v1227 = vrot.slane %v1206, %v1226
        %v1228 = vlaneseq
        %v1229 = vshrl.u32 %v1228, 7
        %v1230 = vsub.s32 5, %v1229
        %v1231 = vrot.slane %v1206, %v1230
        %v1232 = vlaneseq
        %v1233 = vshrl.u32 %v1232, 7
        %v1234 = vsub.s32 6, %v1233
        %v1235 = vrot.slane %v1206, %v1234
        %v1236 = vlaneseq
        %v1237 = vshrl.u32 %v1236, 7
        %v1238 = vsub.s32 7, %v1237
        %v1239 = vrot.slane %v1206, %v1238
        %v1312 = vunpack.c.l.b16 %v1142
        %v1313 = vunpack.c.h.b16 %v1142
        %v1314 = vunpack.c.l.b16 %v1143
        %v1315 = vunpack.c.h.b16 %v1143
        %v1316 = vunpack.c.l.b16 %v1144
        %v1317 = vunpack.c.h.b16 %v1144
        %v1318 = vunpack.c.l.b16 %v1145
        %v1319 = vunpack.c.h.b16 %v1145
        %v1320 = vunpack.c.l.b16 %v1146
        %v1321 = vunpack.c.h.b16 %v1146
        %v1322 = vunpack.c.l.b16 %v1147
        %v1323 = vunpack.c.h.b16 %v1147
        %v1324 = vunpack.c.l.b16 %v1148
        %v1325 = vunpack.c.h.b16 %v1148
        %v1326 = vunpack.c.l.b16 %v1149
        %v1327 = vunpack.c.h.b16 %v1149
        %v1328 = vunpack.c.l.b16 %v1150
        %v1329 = vunpack.c.h.b16 %v1150
        %v1330 = vunpack.c.l.b16 %v1151
        %v1331 = vunpack.c.h.b16 %v1151
        %v1332 = vunpack.c.l.b16 %v1152
        %v1333 = vunpack.c.h.b16 %v1152
        %v1334 = vunpack.c.l.b16 %v1153
        %v1335 = vunpack.c.h.b16 %v1153
        %v1336 = vunpack.c.l.b16 %v1154
        %v1337 = vunpack.c.h.b16 %v1154
        %v1338 = vunpack.c.l.b16 %v1155
        %v1339 = vunpack.c.h.b16 %v1155
        %v1340 = vunpack.c.l.b16 %v1156
        %v1341 = vunpack.c.h.b16 %v1156
        %v1342 = vunpack.c.l.b16 %v1157
        %v1343 = vunpack.c.h.b16 %v1157
        %v1344 = vunpack.c.l.b16 %v1158
        %v1345 = vunpack.c.h.b16 %v1158
        %v1346 = vunpack.c.l.b16 %v1159
        %v1347 = vunpack.c.h.b16 %v1159
        %v1348 = vunpack.c.l.b16 %v1160
        %v1349 = vunpack.c.h.b16 %v1160
        %v1350 = vunpack.c.l.b16 %v1161
        %v1351 = vunpack.c.h.b16 %v1161
        %v1352 = vunpack.c.l.b16 %v1162
        %v1353 = vunpack.c.h.b16 %v1162
        %v1354 = vunpack.c.l.b16 %v1163
        %v1355 = vunpack.c.h.b16 %v1163
        %v1356 = vunpack.c.l.b16 %v1164
        %v1357 = vunpack.c.h.b16 %v1164
        %v1358 = vunpack.c.l.b16 %v1165
        %v1359 = vunpack.c.h.b16 %v1165
        %v1360 = vunpack.c.l.b16 %v1166
        %v1361 = vunpack.c.h.b16 %v1166
        %v1362 = vunpack.c.l.b16 %v1167
        %v1363 = vunpack.c.h.b16 %v1167
        %v1364 = vunpack.c.l.b16 %v1168
        %v1365 = vunpack.c.h.b16 %v1168
        %v1366 = vunpack.c.l.b16 %v1169
        %v1367 = vunpack.c.h.b16 %v1169
        %v1368 = vunpack.c.l.b16 %v1170
        %v1369 = vunpack.c.h.b16 %v1170
        %v1370 = vunpack.c.l.b16 %v1171
        %v1371 = vunpack.c.h.b16 %v1171
        %v1372 = vunpack.c.l.b16 %v1172
        %v1373 = vunpack.c.h.b16 %v1172
        %v1374 = vunpack.c.l.b16 %v1173
        %v1375 = vunpack.c.h.b16 %v1173
        %v1376 = vunpack.c.l.b16 %v1174
        %v1377 = vunpack.c.h.b16 %v1174
        %v1378 = vunpack.c.l.b16 %v1175
        %v1379 = vunpack.c.h.b16 %v1175
        %v1380 = vunpack.c.l.b16 %v1176
        %v1381 = vunpack.c.h.b16 %v1176
        %v1382 = vunpack.c.l.b16 %v1177
        %v1383 = vunpack.c.h.b16 %v1177
        %v1384 = vunpack.c.l.b16 %v1178
        %v1385 = vunpack.c.h.b16 %v1178
        %v1386 = vunpack.c.l.b16 %v1179
        %v1387 = vunpack.c.h.b16 %v1179
        %v1388 = vunpack.c.l.b16 %v1180
        %v1389 = vunpack.c.h.b16 %v1180
        %v1390 = vunpack.c.l.b16 %v1181
        %v1391 = vunpack.c.h.b16 %v1181
        %v1392 = vunpack.c.l.b16 %v1182
        %v1393 = vunpack.c.h.b16 %v1182
        %v1394 = vunpack.c.l.b16 %v1183
        %v1395 = vunpack.c.h.b16 %v1183
        %v1396 = vunpack.c.l.b16 %v1184
        %v1397 = vunpack.c.h.b16 %v1184
        %v1398 = vunpack.c.l.b16 %v1185
        %v1399 = vunpack.c.h.b16 %v1185
        %v1400 = vunpack.c.l.b16 %v1186
        %v1401 = vunpack.c.h.b16 %v1186
        %v1402 = vunpack.c.l.b16 %v1187
        %v1403 = vunpack.c.h.b16 %v1187
        %v1404 = vunpack.c.l.b16 %v1188
        %v1405 = vunpack.c.h.b16 %v1188
        %v1406 = vunpack.c.l.b16 %v1189
        %v1407 = vunpack.c.h.b16 %v1189
        %v1408 = vunpack.c.l.b16 %v1190
        %v1409 = vunpack.c.h.b16 %v1190
        %v1410 = vunpack.c.l.b16 %v1191
        %v1411 = vunpack.c.h.b16 %v1191
        %v1412 = vunpack.c.l.b16 %v1192
        %v1413 = vunpack.c.h.b16 %v1192
        %v1414 = vunpack.c.l.b16 %v1193
        %v1415 = vunpack.c.h.b16 %v1193
        %v1416 = vunpack.c.l.b16 %v1194
        %v1417 = vunpack.c.h.b16 %v1194
        %v1418 = vunpack.c.l.b16 %v1195
        %v1419 = vunpack.c.h.b16 %v1195
        %v1420 = vunpack.c.l.b16 %v1196
        %v1421 = vunpack.c.h.b16 %v1196
        %v1422 = vunpack.c.l.b16 %v1197
        %v1423 = vunpack.c.h.b16 %v1197
        %v1424 = vunpack.c.l.b16 %v1198
        %v1425 = vunpack.c.h.b16 %v1198
        %v1426 = vunpack.c.l.b16 %v1199
        %v1427 = vunpack.c.h.b16 %v1199
        %v1428 = vunpack.c.l.b16 %v1200
        %v1429 = vunpack.c.h.b16 %v1200
        %v1430 = vunpack.c.l.b16 %v1201
        %v1431 = vunpack.c.h.b16 %v1201
        %v1432 = vunpack.c.l.b16 %v1202
        %v1433 = vunpack.c.h.b16 %v1202
        %v1434 = vunpack.c.l.b16 %v1203
        %v1435 = vunpack.c.h.b16 %v1203
        %v1436 = vunpack.c.l.b16 %v1204
        %v1437 = vunpack.c.h.b16 %v1204
        %v1438 = vunpack.c.l.b16 %v1205
        %v1439 = vunpack.c.h.b16 %v1205
        %v1440 = vpack.c.b16 %v1320, %v1312
        %v1441 = vpack.c.b16 %v1321, %v1313
        %v1442 = vpack.c.b16 %v1322, %v1314
        %v1443 = vpack.c.b16 %v1323, %v1315
        %v1444 = vpack.c.b16 %v1324, %v1316
        %v1445 = vpack.c.b16 %v1325, %v1317
        %v1446 = vpack.c.b16 %v1326, %v1318
        %v1447 = vpack.c.b16 %v1327, %v1319
        %v1448 = vpack.c.b16 %v1336, %v1328
        %v1449 = vpack.c.b16 %v1337, %v1329
        %v1450 = vpack.c.b16 %v1338, %v1330
        %v1451 = vpack.c.b16 %v1339, %v1331
        %v1452 = vpack.c.b16 %v1340, %v1332
        %v1453 = vpack.c.b16 %v1341, %v1333
        %v1454 = vpack.c.b16 %v1342, %v1334
        %v1455 = vpack.c.b16 %v1343, %v1335
        %v1456 = vpack.c.b16 %v1352, %v1344
        %v1457 = vpack.c.b16 %v1353, %v1345
        %v1458 = vpack.c.b16 %v1354, %v1346
        %v1459 = vpack.c.b16 %v1355, %v1347
        %v1460 = vpack.c.b16 %v1356, %v1348
        %v1461 = vpack.c.b16 %v1357, %v1349
        %v1462 = vpack.c.b16 %v1358, %v1350
        %v1463 = vpack.c.b16 %v1359, %v1351
        %v1464 = vpack.c.b16 %v1368, %v1360
        %v1465 = vpack.c.b16 %v1369, %v1361
        %v1466 = vpack.c.b16 %v1370, %v1362
        %v1467 = vpack.c.b16 %v1371, %v1363
        %v1468 = vpack.c.b16 %v1372, %v1364
        %v1469 = vpack.c.b16 %v1373, %v1365
        %v1470 = vpack.c.b16 %v1374, %v1366
        %v1471 = vpack.c.b16 %v1375, %v1367
        %v1472 = vpack.c.b16 %v1384, %v1376
        %v1473 = vpack.c.b16 %v1385, %v1377
        %v1474 = vpack.c.b16 %v1386, %v1378
        %v1475 = vpack.c.b16 %v1387, %v1379
        %v1476 = vpack.c.b16 %v1388, %v1380
        %v1477 = vpack.c.b16 %v1389, %v1381
        %v1478 = vpack.c.b16 %v1390, %v1382
        %v1479 = vpack.c.b16 %v1391, %v1383
        %v1480 = vpack.c.b16 %v1400, %v1392
        %v1481 = vpack.c.b16 %v1401, %v1393
        %v1482 = vpack.c.b16 %v1402, %v1394
        %v1483 = vpack.c.b16 %v1403, %v1395
        %v1484 = vpack.c.b16 %v1404, %v1396
        %v1485 = vpack.c.b16 %v1405, %v1397
        %v1486 = vpack.c.b16 %v1406, %v1398
        %v1487 = vpack.c.b16 %v1407, %v1399
        %v1488 = vpack.c.b16 %v1416, %v1408
        %v1489 = vpack.c.b16 %v1417, %v1409
        %v1490 = vpack.c.b16 %v1418, %v1410
        %v1491 = vpack.c.b16 %v1419, %v1411
        %v1492 = vpack.c.b16 %v1420, %v1412
        %v1493 = vpack.c.b16 %v1421, %v1413
        %v1494 = vpack.c.b16 %v1422, %v1414
        %v1495 = vpack.c.b16 %v1423, %v1415
        %v1496 = vpack.c.b16 %v1432, %v1424
        %v1497 = vpack.c.b16 %v1433, %v1425
        %v1498 = vpack.c.b16 %v1434, %v1426
        %v1499 = vpack.c.b16 %v1435, %v1427
        %v1500 = vpack.c.b16 %v1436, %v1428
        %v1501 = vpack.c.b16 %v1437, %v1429
        %v1502 = vpack.c.b16 %v1438, %v1430
        %v1503 = vpack.c.b16 %v1439, %v1431
        %1568 = vmatprep.subr.bf16.mxu0 %v1441
        %1569 = vmatpush1.bf16.msra.mxu0 %v1440
        %1570 = vmatprep.subr.bf16.mxu0 %v1449
        %1571 = vmatpush1.bf16.msra.mxu0 %v1448
        %1572 = vmatprep.subr.bf16.mxu0 %v1457
        %1573 = vmatpush1.bf16.msra.mxu0 %v1456
        %1574 = vmatprep.subr.bf16.mxu0 %v1465
        %1575 = vmatpush1.bf16.msra.mxu0 %v1464
        %1576 = vmatprep.subr.bf16.mxu0 %v1473
        %1577 = vmatpush1.bf16.msra.mxu0 %v1472
        %1578 = vmatprep.subr.bf16.mxu0 %v1481
        %1579 = vmatpush1.bf16.msra.mxu0 %v1480
        %1580 = vmatprep.subr.bf16.mxu0 %v1489
        %1581 = vmatpush1.bf16.msra.mxu0 %v1488
        %1582 = vmatprep.subr.bf16.mxu0 %v1497
        %1583 = vmatpush1.bf16.msra.mxu0 %v1496
        %1584 = vmatprep.subr.bf16.mxu0 0
        %1585 = vmatpush1.bf16.msra.mxu0 0
        %1586 = vmatprep.subr.bf16.mxu0 0
        %1587 = vmatpush1.bf16.msra.mxu0 0
        %1588 = vmatprep.subr.bf16.mxu0 0
        %1589 = vmatpush1.bf16.msra.mxu0 0
        %1590 = vmatprep.subr.bf16.mxu0 0
        %1591 = vmatpush1.bf16.msra.mxu0 0
        %1592 = vmatprep.subr.bf16.mxu0 0
        %1593 = vmatpush1.bf16.msra.mxu0 0
        %1594 = vmatprep.subr.bf16.mxu0 0
        %1595 = vmatpush1.bf16.msra.mxu0 0
        %1596 = vmatprep.subr.bf16.mxu0 0
        %1597 = vmatpush1.bf16.msra.mxu0 0
        %1598 = vmatprep.subr.bf16.mxu0 0
        %1599 = vmatpush1.bf16.msra.mxu0 0
        %1600 = vmatprep.mubr.bf16.mxu0 0
        %1601 = vmatmul.mubr.bf16.gmra.mrb[0].mxu0 %v1134
        %v1602 = vpop.f32.mrb[0].mxu0
        %v1603 = vadd.f32 %v1211, %v1602
        %v1604 = vpop.f32.mrb[0].mxu0
        %v1605 = vadd.f32 %v1215, %v1604
        %v1606 = vpop.f32.mrb[0].mxu0
        %v1607 = vadd.f32 %v1211, %v1606
        %v1608 = vpop.f32.mrb[0].mxu0
        %v1609 = vadd.f32 %v1215, %v1608
        %1610 = vmatprep.mubr.bf16.mxu0 0
        %1611 = vmatmul.mubr.bf16.gmra.mrb[0].mxu0 %v1135
        %v1612 = vpop.f32.mrb[0].mxu0
        %v1613 = vadd.f32 %v1211, %v1612
        %v1614 = vpop.f32.mrb[0].mxu0
        %v1615 = vadd.f32 %v1215, %v1614
        %v1616 = vpop.f32.mrb[0].mxu0
        %v1617 = vadd.f32 %v1211, %v1616
        %v1618 = vpop.f32.mrb[0].mxu0
        %v1619 = vadd.f32 %v1215, %v1618
        %1620 = vmatprep.mubr.bf16.mxu0 0
        %1621 = vmatmul.mubr.bf16.gmra.mrb[0].mxu0 %v1136
        %v1622 = vpop.f32.mrb[0].mxu0
        %v1623 = vadd.f32 %v1211, %v1622
        %v1624 = vpop.f32.mrb[0].mxu0
        %v1625 = vadd.f32 %v1215, %v1624
        %v1626 = vpop.f32.mrb[0].mxu0
        %v1627 = vadd.f32 %v1211, %v1626
        %v1628 = vpop.f32.mrb[0].mxu0
        %v1629 = vadd.f32 %v1215, %v1628
        %1630 = vmatprep.mubr.bf16.mxu0 0
        %1631 = vmatmul.mubr.bf16.gmra.mrb[0].mxu0 %v1137
        %v1632 = vpop.f32.mrb[0].mxu0
        %v1633 = vadd.f32 %v1211, %v1632
        %v1634 = vpop.f32.mrb[0].mxu0
        %v1635 = vadd.f32 %v1215, %v1634
        %v1636 = vpop.f32.mrb[0].mxu0
        %v1637 = vadd.f32 %v1211, %v1636
        %v1638 = vpop.f32.mrb[0].mxu0
        %v1639 = vadd.f32 %v1215, %v1638
        %1640 = vmatprep.mubr.bf16.mxu0 0
        %1641 = vmatmul.mubr.bf16.gmra.mrb[0].mxu0 %v1138
        %v1642 = vpop.f32.mrb[0].mxu0
        %v1643 = vadd.f32 %v1211, %v1642
        %v1644 = vpop.f32.mrb[0].mxu0
        %v1645 = vadd.f32 %v1215, %v1644
        %v1646 = vpop.f32.mrb[0].mxu0
        %v1647 = vadd.f32 %v1211, %v1646
        %v1648 = vpop.f32.mrb[0].mxu0
        %v1649 = vadd.f32 %v1215, %v1648
        %1650 = vmatprep.mubr.bf16.mxu0 0
        %1651 = vmatmul.mubr.bf16.gmra.mrb[0].mxu0 %v1139
        %v1652 = vpop.f32.mrb[0].mxu0
        %v1653 = vadd.f32 %v1211, %v1652
        %v1654 = vpop.f32.mrb[0].mxu0
        %v1655 = vadd.f32 %v1215, %v1654
        %v1656 = vpop.f32.mrb[0].mxu0
        %v1657 = vadd.f32 %v1211, %v1656
        %v1658 = vpop.f32.mrb[0].mxu0
        %v1659 = vadd.f32 %v1215, %v1658
        %1660 = vmatprep.mubr.bf16.mxu0 0
        %1661 = vmatmul.mubr.bf16.gmra.mrb[0].mxu0 %v1140
        %v1662 = vpop.f32.mrb[0].mxu0
        %v1663 = vadd.f32 %v1211, %v1662
        %v1664 = vpop.f32.mrb[0].mxu0
        %v1665 = vadd.f32 %v1215, %v1664
        %v1666 = vpop.f32.mrb[0].mxu0
        %v1667 = vadd.f32 %v1211, %v1666
        %v1668 = vpop.f32.mrb[0].mxu0
        %v1669 = vadd.f32 %v1215, %v1668
        %1670 = vmatprep.mubr.bf16.mxu0 0
        %1671 = vmatmul.mubr.bf16.gmra.mrb[0].mxu0 %v1141
        %v1672 = vpop.f32.mrb[0].mxu0
        %v1673 = vadd.f32 %v1211, %v1672
        %v1674 = vpop.f32.mrb[0].mxu0
        %v1675 = vadd.f32 %v1215, %v1674
        %v1676 = vpop.f32.mrb[0].mxu0
        %v1677 = vadd.f32 %v1211, %v1676
        %v1678 = vpop.f32.mrb[0].mxu0
        %v1679 = vadd.f32 %v1215, %v1678
        %1680 = vdwg.mxu0
        %1681 = vmatprep.subr.bf16.mxu0 %v1443
        %1682 = vmatpush1.bf16.msra.mxu0 %v1442
        %1683 = vmatprep.subr.bf16.mxu0 %v1451
        %1684 = vmatpush1.bf16.msra.mxu0 %v1450
        %1685 = vmatprep.subr.bf16.mxu0 %v1459
        %1686 = vmatpush1.bf16.msra.mxu0 %v1458
        %1687 = vmatprep.subr.bf16.mxu0 %v1467
        %1688 = vmatpush1.bf16.msra.mxu0 %v1466
        %1689 = vmatprep.subr.bf16.mxu0 %v1475
        %1690 = vmatpush1.bf16.msra.mxu0 %v1474
        %1691 = vmatprep.subr.bf16.mxu0 %v1483
        %1692 = vmatpush1.bf16.msra.mxu0 %v1482
        %1693 = vmatprep.subr.bf16.mxu0 %v1491
        %1694 = vmatpush1.bf16.msra.mxu0 %v1490
        %1695 = vmatprep.subr.bf16.mxu0 %v1499
        %1696 = vmatpush1.bf16.msra.mxu0 %v1498
        %1697 = vmatprep.subr.bf16.mxu0 0
        %1698 = vmatpush1.bf16.msra.mxu0 0
        %1699 = vmatprep.subr.bf16.mxu0 0
        %1700 = vmatpush1.bf16.msra.mxu0 0
        %1701 = vmatprep.subr.bf16.mxu0 0
        %1702 = vmatpush1.bf16.msra.mxu0 0
        %1703 = vmatprep.subr.bf16.mxu0 0
        %1704 = vmatpush1.bf16.msra.mxu0 0
        %1705 = vmatprep.subr.bf16.mxu0 0
        %1706 = vmatpush1.bf16.msra.mxu0 0
        %1707 = vmatprep.subr.bf16.mxu0 0
        %1708 = vmatpush1.bf16.msra.mxu0 0
        %1709 = vmatprep.subr.bf16.mxu0 0
        %1710 = vmatpush1.bf16.msra.mxu0 0
        %1711 = vmatprep.subr.bf16.mxu0 0
        %1712 = vmatpush1.bf16.msra.mxu0 0
        %1713 = vmatprep.mubr.bf16.mxu0 0
        %1714 = vmatmul.mubr.bf16.gmra.mrb[0].mxu0 %v1134
        %v1715 = vpop.f32.mrb[0].mxu0
        %v1716 = vadd.f32 %v1219, %v1715
        %v1717 = vpop.f32.mrb[0].mxu0
        %v1718 = vadd.f32 %v1223, %v1717
        %v1719 = vpop.f32.mrb[0].mxu0
        %v1720 = vadd.f32 %v1219, %v1719
        %v1721 = vpop.f32.mrb[0].mxu0
        %v1722 = vadd.f32 %v1223, %v1721
        %1723 = vmatprep.mubr.bf16.mxu0 0
        %1724 = vmatmul.mubr.bf16.gmra.mrb[0].mxu0 %v1135
        %v1725 = vpop.f32.mrb[0].mxu0
        %v1726 = vadd.f32 %v1219, %v1725
        %v1727 = vpop.f32.mrb[0].mxu0
        %v1728 = vadd.f32 %v1223, %v1727
        %v1729 = vpop.f32.mrb[0].mxu0
        %v1730 = vadd.f32 %v1219, %v1729
        %v1731 = vpop.f32.mrb[0].mxu0
        %v1732 = vadd.f32 %v1223, %v1731
        %1733 = vmatprep.mubr.bf16.mxu0 0
        %1734 = vmatmul.mubr.bf16.gmra.mrb[0].mxu0 %v1136
        %v1735 = vpop.f32.mrb[0].mxu0
        %v1736 = vadd.f32 %v1219, %v1735
        %v1737 = vpop.f32.mrb[0].mxu0
        %v1738 = vadd.f32 %v1223, %v1737
        %v1739 = vpop.f32.mrb[0].mxu0
        %v1740 = vadd.f32 %v1219, %v1739
        %v1741 = vpop.f32.mrb[0].mxu0
        %v1742 = vadd.f32 %v1223, %v1741
        %1743 = vmatprep.mubr.bf16.mxu0 0
        %1744 = vmatmul.mubr.bf16.gmra.mrb[0].mxu0 %v1137
        %v1745 = vpop.f32.mrb[0].mxu0
        %v1746 = vadd.f32 %v1219, %v1745
        %v1747 = vpop.f32.mrb[0].mxu0
        %v1748 = vadd.f32 %v1223, %v1747
        %v1749 = vpop.f32.mrb[0].mxu0
        %v1750 = vadd.f32 %v1219, %v1749
        %v1751 = vpop.f32.mrb[0].mxu0
        %v1752 = vadd.f32 %v1223, %v1751
        %1753 = vmatprep.mubr.bf16.mxu0 0
        %1754 = vmatmul.mubr.bf16.gmra.mrb[0].mxu0 %v1138
        %v1755 = vpop.f32.mrb[0].mxu0
        %v1756 = vadd.f32 %v1219, %v1755
        %v1757 = vpop.f32.mrb[0].mxu0
        %v1758 = vadd.f32 %v1223, %v1757
        %v1759 = vpop.f32.mrb[0].mxu0
        %v1760 = vadd.f32 %v1219, %v1759
        %v1761 = vpop.f32.mrb[0].mxu0
        %v1762 = vadd.f32 %v1223, %v1761
        %1763 = vmatprep.mubr.bf16.mxu0 0
        %1764 = vmatmul.mubr.bf16.gmra.mrb[0].mxu0 %v1139
        %v1765 = vpop.f32.mrb[0].mxu0
        %v1766 = vadd.f32 %v1219, %v1765
        %v1767 = vpop.f32.mrb[0].mxu0
        %v1768 = vadd.f32 %v1223, %v1767
        %v1769 = vpop.f32.mrb[0].mxu0
        %v1770 = vadd.f32 %v1219, %v1769
        %v1771 = vpop.f32.mrb[0].mxu0
        %v1772 = vadd.f32 %v1223, %v1771
        %1773 = vmatprep.mubr.bf16.mxu0 0
        %1774 = vmatmul.mubr.bf16.gmra.mrb[0].mxu0 %v1140
        %v1775 = vpop.f32.mrb[0].mxu0
        %v1776 = vadd.f32 %v1219, %v1775
        %v1777 = vpop.f32.mrb[0].mxu0
        %v1778 = vadd.f32 %v1223, %v1777
        %v1779 = vpop.f32.mrb[0].mxu0
        %v1780 = vadd.f32 %v1219, %v1779
        %v1781 = vpop.f32.mrb[0].mxu0
        %v1782 = vadd.f32 %v1223, %v1781
        %1783 = vmatprep.mubr.bf16.mxu0 0
        %1784 = vmatmul.mubr.bf16.gmra.mrb[0].mxu0 %v1141
        %v1785 = vpop.f32.mrb[0].mxu0
        %v1786 = vadd.f32 %v1219, %v1785
        %v1787 = vpop.f32.mrb[0].mxu0
        %v1788 = vadd.f32 %v1223, %v1787
        %v1789 = vpop.f32.mrb[0].mxu0
        %v1790 = vadd.f32 %v1219, %v1789
        %v1791 = vpop.f32.mrb[0].mxu0
        %v1792 = vadd.f32 %v1223, %v1791
        %1793 = vdwg.mxu0
        %1794 = vmatprep.subr.bf16.mxu0 %v1445
        %1795 = vmatpush1.bf16.msra.mxu0 %v1444
        %1796 = vmatprep.subr.bf16.mxu0 %v1453
        %1797 = vmatpush1.bf16.msra.mxu0 %v1452
        %1798 = vmatprep.subr.bf16.mxu0 %v1461
        %1799 = vmatpush1.bf16.msra.mxu0 %v1460
        %1800 = vmatprep.subr.bf16.mxu0 %v1469
        %1801 = vmatpush1.bf16.msra.mxu0 %v1468
        %1802 = vmatprep.subr.bf16.mxu0 %v1477
        %1803 = vmatpush1.bf16.msra.mxu0 %v1476
        %1804 = vmatprep.subr.bf16.mxu0 %v1485
        %1805 = vmatpush1.bf16.msra.mxu0 %v1484
        %1806 = vmatprep.subr.bf16.mxu0 %v1493
        %1807 = vmatpush1.bf16.msra.mxu0 %v1492
        %1808 = vmatprep.subr.bf16.mxu0 %v1501
        %1809 = vmatpush1.bf16.msra.mxu0 %v1500
        %1810 = vmatprep.subr.bf16.mxu0 0
        %1811 = vmatpush1.bf16.msra.mxu0 0
        %1812 = vmatprep.subr.bf16.mxu0 0
        %1813 = vmatpush1.bf16.msra.mxu0 0
        %1814 = vmatprep.subr.bf16.mxu0 0
        %1815 = vmatpush1.bf16.msra.mxu0 0
        %1816 = vmatprep.subr.bf16.mxu0 0
        %1817 = vmatpush1.bf16.msra.mxu0 0
        %1818 = vmatprep.subr.bf16.mxu0 0
        %1819 = vmatpush1.bf16.msra.mxu0 0
        %1820 = vmatprep.subr.bf16.mxu0 0
        %1821 = vmatpush1.bf16.msra.mxu0 0
        %1822 = vmatprep.subr.bf16.mxu0 0
        %1823 = vmatpush1.bf16.msra.mxu0 0
        %1824 = vmatprep.subr.bf16.mxu0 0
        %1825 = vmatpush1.bf16.msra.mxu0 0
        %1826 = vmatprep.mubr.bf16.mxu0 0
        %1827 = vmatmul.mubr.bf16.gmra.mrb[0].mxu0 %v1134
        %v1828 = vpop.f32.mrb[0].mxu0
        %v1829 = vadd.f32 %v1227, %v1828
        %v1830 = vpop.f32.mrb[0].mxu0
        %v1831 = vadd.f32 %v1231, %v1830
        %v1832 = vpop.f32.mrb[0].mxu0
        %v1833 = vadd.f32 %v1227, %v1832
        %v1834 = vpop.f32.mrb[0].mxu0
        %v1835 = vadd.f32 %v1231, %v1834
        %1836 = vmatprep.mubr.bf16.mxu0 0
        %1837 = vmatmul.mubr.bf16.gmra.mrb[0].mxu0 %v1135
        %v1838 = vpop.f32.mrb[0].mxu0
        %v1839 = vadd.f32 %v1227, %v1838
        %v1840 = vpop.f32.mrb[0].mxu0
        %v1841 = vadd.f32 %v1231, %v1840
        %v1842 = vpop.f32.mrb[0].mxu0
        %v1843 = vadd.f32 %v1227, %v1842
        %v1844 = vpop.f32.mrb[0].mxu0
        %v1845 = vadd.f32 %v1231, %v1844
        %1846 = vmatprep.mubr.bf16.mxu0 0
        %1847 = vmatmul.mubr.bf16.gmra.mrb[0].mxu0 %v1136
        %v1848 = vpop.f32.mrb[0].mxu0
        %v1849 = vadd.f32 %v1227, %v1848
        %v1850 = vpop.f32.mrb[0].mxu0
        %v1851 = vadd.f32 %v1231, %v1850
        %v1852 = vpop.f32.mrb[0].mxu0
        %v1853 = vadd.f32 %v1227, %v1852
        %v1854 = vpop.f32.mrb[0].mxu0
        %v1855 = vadd.f32 %v1231, %v1854
        %1856 = vmatprep.mubr.bf16.mxu0 0
        %1857 = vmatmul.mubr.bf16.gmra.mrb[0].mxu0 %v1137
        %v1858 = vpop.f32.mrb[0].mxu0
        %v1859 = vadd.f32 %v1227, %v1858
        %v1860 = vpop.f32.mrb[0].mxu0
        %v1861 = vadd.f32 %v1231, %v1860
        %v1862 = vpop.f32.mrb[0].mxu0
        %v1863 = vadd.f32 %v1227, %v1862
        %v1864 = vpop.f32.mrb[0].mxu0
        %v1865 = vadd.f32 %v1231, %v1864
        %1866 = vmatprep.mubr.bf16.mxu0 0
        %1867 = vmatmul.mubr.bf16.gmra.mrb[0].mxu0 %v1138
        %v1868 = vpop.f32.mrb[0].mxu0
        %v1869 = vadd.f32 %v1227, %v1868
        %v1870 = vpop.f32.mrb[0].mxu0
        %v1871 = vadd.f32 %v1231, %v1870
        %v1872 = vpop.f32.mrb[0].mxu0
        %v1873 = vadd.f32 %v1227, %v1872
        %v1874 = vpop.f32.mrb[0].mxu0
        %v1875 = vadd.f32 %v1231, %v1874
        %1876 = vmatprep.mubr.bf16.mxu0 0
        %1877 = vmatmul.mubr.bf16.gmra.mrb[0].mxu0 %v1139
        %v1878 = vpop.f32.mrb[0].mxu0
        %v1879 = vadd.f32 %v1227, %v1878
        %v1880 = vpop.f32.mrb[0].mxu0
        %v1881 = vadd.f32 %v1231, %v1880
        %v1882 = vpop.f32.mrb[0].mxu0
        %v1883 = vadd.f32 %v1227, %v1882
        %v1884 = vpop.f32.mrb[0].mxu0
        %v1885 = vadd.f32 %v1231, %v1884
        %1886 = vmatprep.mubr.bf16.mxu0 0
        %1887 = vmatmul.mubr.bf16.gmra.mrb[0].mxu0 %v1140
        %v1888 = vpop.f32.mrb[0].mxu0
        %v1889 = vadd.f32 %v1227, %v1888
        %v1890 = vpop.f32.mrb[0].mxu0
        %v1891 = vadd.f32 %v1231, %v1890
        %v1892 = vpop.f32.mrb[0].mxu0
        %v1893 = vadd.f32 %v1227, %v1892
        %v1894 = vpop.f32.mrb[0].mxu0
        %v1895 = vadd.f32 %v1231, %v1894
        %1896 = vmatprep.mubr.bf16.mxu0 0
        %1897 = vmatmul.mubr.bf16.gmra.mrb[0].mxu0 %v1141
        %v1898 = vpop.f32.mrb[0].mxu0
        %v1899 = vadd.f32 %v1227, %v1898
        %v1900 = vpop.f32.mrb[0].mxu0
        %v1901 = vadd.f32 %v1231, %v1900
        %v1902 = vpop.f32.mrb[0].mxu0
        %v1903 = vadd.f32 %v1227, %v1902
        %v1904 = vpop.f32.mrb[0].mxu0
        %v1905 = vadd.f32 %v1231, %v1904
        %1906 = vdwg.mxu0
        %1907 = vmatprep.subr.bf16.mxu0 %v1447
        %1908 = vmatpush1.bf16.msra.mxu0 %v1446
        %1909 = vmatprep.subr.bf16.mxu0 %v1455
        %1910 = vmatpush1.bf16.msra.mxu0 %v1454
        %1911 = vmatprep.subr.bf16.mxu0 %v1463
        %1912 = vmatpush1.bf16.msra.mxu0 %v1462
        %1913 = vmatprep.subr.bf16.mxu0 %v1471
        %1914 = vmatpush1.bf16.msra.mxu0 %v1470
        %1915 = vmatprep.subr.bf16.mxu0 %v1479
        %1916 = vmatpush1.bf16.msra.mxu0 %v1478
        %1917 = vmatprep.subr.bf16.mxu0 %v1487
        %1918 = vmatpush1.bf16.msra.mxu0 %v1486
        %1919 = vmatprep.subr.bf16.mxu0 %v1495
        %1920 = vmatpush1.bf16.msra.mxu0 %v1494
        %1921 = vmatprep.subr.bf16.mxu0 %v1503
        %1922 = vmatpush1.bf16.msra.mxu0 %v1502
        %1923 = vmatprep.subr.bf16.mxu0 0
        %1924 = vmatpush1.bf16.msra.mxu0 0
        %1925 = vmatprep.subr.bf16.mxu0 0
        %1926 = vmatpush1.bf16.msra.mxu0 0
        %1927 = vmatprep.subr.bf16.mxu0 0
        %1928 = vmatpush1.bf16.msra.mxu0 0
        %1929 = vmatprep.subr.bf16.mxu0 0
        %1930 = vmatpush1.bf16.msra.mxu0 0
        %1931 = vmatprep.subr.bf16.mxu0 0
        %1932 = vmatpush1.bf16.msra.mxu0 0
        %1933 = vmatprep.subr.bf16.mxu0 0
        %1934 = vmatpush1.bf16.msra.mxu0 0
        %1935 = vmatprep.subr.bf16.mxu0 0
        %1936 = vmatpush1.bf16.msra.mxu0 0
        %1937 = vmatprep.subr.bf16.mxu0 0
        %1938 = vmatpush1.bf16.msra.mxu0 0
        %1939 = vmatprep.mubr.bf16.mxu0 0
        %1940 = vmatmul.mubr.bf16.gmra.mrb[0].mxu0 %v1134
        %v1941 = vpop.f32.mrb[0].mxu0
        %v1942 = vadd.f32 %v1235, %v1941
        %v1943 = vpop.f32.mrb[0].mxu0
        %v1944 = vadd.f32 %v1239, %v1943
        %v1945 = vpop.f32.mrb[0].mxu0
        %v1946 = vadd.f32 %v1235, %v1945
        %v1947 = vpop.f32.mrb[0].mxu0
        %v1948 = vadd.f32 %v1239, %v1947
        %1949 = vmatprep.mubr.bf16.mxu0 0
        %1950 = vmatmul.mubr.bf16.gmra.mrb[0].mxu0 %v1135
        %v1951 = vpop.f32.mrb[0].mxu0
        %v1952 = vadd.f32 %v1235, %v1951
        %v1953 = vpop.f32.mrb[0].mxu0
        %v1954 = vadd.f32 %v1239, %v1953
        %v1955 = vpop.f32.mrb[0].mxu0
        %v1956 = vadd.f32 %v1235, %v1955
        %v1957 = vpop.f32.mrb[0].mxu0
        %v1958 = vadd.f32 %v1239, %v1957
        %1959 = vmatprep.mubr.bf16.mxu0 0
        %1960 = vmatmul.mubr.bf16.gmra.mrb[0].mxu0 %v1136
        %v1961 = vpop.f32.mrb[0].mxu0
        %v1962 = vadd.f32 %v1235, %v1961
        %v1963 = vpop.f32.mrb[0].mxu0
        %v1964 = vadd.f32 %v1239, %v1963
        %v1965 = vpop.f32.mrb[0].mxu0
        %v1966 = vadd.f32 %v1235, %v1965
        %v1967 = vpop.f32.mrb[0].mxu0
        %v1968 = vadd.f32 %v1239, %v1967
        %1969 = vmatprep.mubr.bf16.mxu0 0
        %1970 = vmatmul.mubr.bf16.gmra.mrb[0].mxu0 %v1137
        %v1971 = vpop.f32.mrb[0].mxu0
        %v1972 = vadd.f32 %v1235, %v1971
        %v1973 = vpop.f32.mrb[0].mxu0
        %v1974 = vadd.f32 %v1239, %v1973
        %v1975 = vpop.f32.mrb[0].mxu0
        %v1976 = vadd.f32 %v1235, %v1975
        %v1977 = vpop.f32.mrb[0].mxu0
        %v1978 = vadd.f32 %v1239, %v1977
        %1979 = vmatprep.mubr.bf16.mxu0 0
        %1980 = vmatmul.mubr.bf16.gmra.mrb[0].mxu0 %v1138
        %v1981 = vpop.f32.mrb[0].mxu0
        %v1982 = vadd.f32 %v1235, %v1981
        %v1983 = vpop.f32.mrb[0].mxu0
        %v1984 = vadd.f32 %v1239, %v1983
        %v1985 = vpop.f32.mrb[0].mxu0
        %v1986 = vadd.f32 %v1235, %v1985
        %v1987 = vpop.f32.mrb[0].mxu0
        %v1988 = vadd.f32 %v1239, %v1987
        %1989 = vmatprep.mubr.bf16.mxu0 0
        %1990 = vmatmul.mubr.bf16.gmra.mrb[0].mxu0 %v1139
        %v1991 = vpop.f32.mrb[0].mxu0
        %v1992 = vadd.f32 %v1235, %v1991
        %v1993 = vpop.f32.mrb[0].mxu0
        %v1994 = vadd.f32 %v1239, %v1993
        %v1995 = vpop.f32.mrb[0].mxu0
        %v1996 = vadd.f32 %v1235, %v1995
        %v1997 = vpop.f32.mrb[0].mxu0
        %v1998 = vadd.f32 %v1239, %v1997
        %1999 = vmatprep.mubr.bf16.mxu0 0
        %2000 = vmatmul.mubr.bf16.gmra.mrb[0].mxu0 %v1140
        %v2001 = vpop.f32.mrb[0].mxu0
        %v2002 = vadd.f32 %v1235, %v2001
        %v2003 = vpop.f32.mrb[0].mxu0
        %v2004 = vadd.f32 %v1239, %v2003
        %v2005 = vpop.f32.mrb[0].mxu0
        %v2006 = vadd.f32 %v1235, %v2005
        %v2007 = vpop.f32.mrb[0].mxu0
        %v2008 = vadd.f32 %v1239, %v2007
        %2009 = vmatprep.mubr.bf16.mxu0 0
        %2010 = vmatmul.mubr.bf16.gmra.mrb[0].mxu0 %v1141
        %v2011 = vpop.f32.mrb[0].mxu0
        %v2012 = vadd.f32 %v1235, %v2011
        %v2013 = vpop.f32.mrb[0].mxu0
        %v2014 = vadd.f32 %v1239, %v2013
        %v2015 = vpop.f32.mrb[0].mxu0
        %v2016 = vadd.f32 %v1235, %v2015
        %v2017 = vpop.f32.mrb[0].mxu0
        %v2018 = vadd.f32 %v1239, %v2017
        %2019 = vdwg.mxu0
        %v2020 = vmax.f32 %v1603, 0.0
        %v2021 = vmax.f32 %v1605, 0.0
        %v2022 = vmax.f32 %v1716, 0.0
        %v2023 = vmax.f32 %v1718, 0.0
        %v2024 = vmax.f32 %v1829, 0.0
        %v2025 = vmax.f32 %v1831, 0.0
        %v2026 = vmax.f32 %v1942, 0.0
        %v2027 = vmax.f32 %v1944, 0.0
        %v2028 = vmax.f32 %v1607, 0.0
        %v2029 = vmax.f32 %v1609, 0.0
        %v2030 = vmax.f32 %v1720, 0.0
        %v2031 = vmax.f32 %v1722, 0.0
        %v2032 = vmax.f32 %v1833, 0.0
        %v2033 = vmax.f32 %v1835, 0.0
        %v2034 = vmax.f32 %v1946, 0.0
        %v2035 = vmax.f32 %v1948, 0.0
        %v2036 = vmax.f32 %v1613, 0.0
        %v2037 = vmax.f32 %v1615, 0.0
        %v2038 = vmax.f32 %v1726, 0.0
        %v2039 = vmax.f32 %v1728, 0.0
        %v2040 = vmax.f32 %v1839, 0.0
        %v2041 = vmax.f32 %v1841, 0.0
        %v2042 = vmax.f32 %v1952, 0.0
        %v2043 = vmax.f32 %v1954, 0.0
        %v2044 = vmax.f32 %v1617, 0.0
        %v2045 = vmax.f32 %v1619, 0.0
        %v2046 = vmax.f32 %v1730, 0.0
        %v2047 = vmax.f32 %v1732, 0.0
        %v2048 = vmax.f32 %v1843, 0.0
        %v2049 = vmax.f32 %v1845, 0.0
        %v2050 = vmax.f32 %v1956, 0.0
        %v2051 = vmax.f32 %v1958, 0.0
        %v2052 = vmax.f32 %v1623, 0.0
        %v2053 = vmax.f32 %v1625, 0.0
        %v2054 = vmax.f32 %v1736, 0.0
        %v2055 = vmax.f32 %v1738, 0.0
        %v2056 = vmax.f32 %v1849, 0.0
        %v2057 = vmax.f32 %v1851, 0.0
        %v2058 = vmax.f32 %v1962, 0.0
        %v2059 = vmax.f32 %v1964, 0.0
        %v2060 = vmax.f32 %v1627, 0.0
        %v2061 = vmax.f32 %v1629, 0.0
        %v2062 = vmax.f32 %v1740, 0.0
        %v2063 = vmax.f32 %v1742, 0.0
        %v2064 = vmax.f32 %v1853, 0.0
        %v2065 = vmax.f32 %v1855, 0.0
        %v2066 = vmax.f32 %v1966, 0.0
        %v2067 = vmax.f32 %v1968, 0.0
        %v2068 = vmax.f32 %v1633, 0.0
        %v2069 = vmax.f32 %v1635, 0.0
        %v2070 = vmax.f32 %v1746, 0.0
        %v2071 = vmax.f32 %v1748, 0.0
        %v2072 = vmax.f32 %v1859, 0.0
        %v2073 = vmax.f32 %v1861, 0.0
        %v2074 = vmax.f32 %v1972, 0.0
        %v2075 = vmax.f32 %v1974, 0.0
        %v2076 = vmax.f32 %v1637, 0.0
        %v2077 = vmax.f32 %v1639, 0.0
        %v2078 = vmax.f32 %v1750, 0.0
        %v2079 = vmax.f32 %v1752, 0.0
        %v2080 = vmax.f32 %v1863, 0.0
        %v2081 = vmax.f32 %v1865, 0.0
        %v2082 = vmax.f32 %v1976, 0.0
        %v2083 = vmax.f32 %v1978, 0.0
        %v2084 = vmax.f32 %v1643, 0.0
        %v2085 = vmax.f32 %v1645, 0.0
        %v2086 = vmax.f32 %v1756, 0.0
        %v2087 = vmax.f32 %v1758, 0.0
        %v2088 = vmax.f32 %v1869, 0.0
        %v2089 = vmax.f32 %v1871, 0.0
        %v2090 = vmax.f32 %v1982, 0.0
        %v2091 = vmax.f32 %v1984, 0.0
        %v2092 = vmax.f32 %v1647, 0.0
        %v2093 = vmax.f32 %v1649, 0.0
        %v2094 = vmax.f32 %v1760, 0.0
        %v2095 = vmax.f32 %v1762, 0.0
        %v2096 = vmax.f32 %v1873, 0.0
        %v2097 = vmax.f32 %v1875, 0.0
        %v2098 = vmax.f32 %v1986, 0.0
        %v2099 = vmax.f32 %v1988, 0.0
        %v2100 = vmax.f32 %v1653, 0.0
        %v2101 = vmax.f32 %v1655, 0.0
        %v2102 = vmax.f32 %v1766, 0.0
        %v2103 = vmax.f32 %v1768, 0.0
        %v2104 = vmax.f32 %v1879, 0.0
        %v2105 = vmax.f32 %v1881, 0.0
        %v2106 = vmax.f32 %v1992, 0.0
        %v2107 = vmax.f32 %v1994, 0.0
        %v2108 = vmax.f32 %v1657, 0.0
        %v2109 = vmax.f32 %v1659, 0.0
        %v2110 = vmax.f32 %v1770, 0.0
        %v2111 = vmax.f32 %v1772, 0.0
        %v2112 = vmax.f32 %v1883, 0.0
        %v2113 = vmax.f32 %v1885, 0.0
        %v2114 = vmax.f32 %v1996, 0.0
        %v2115 = vmax.f32 %v1998, 0.0
        %v2116 = vmax.f32 %v1663, 0.0
        %v2117 = vmax.f32 %v1665, 0.0
        %v2118 = vmax.f32 %v1776, 0.0
        %v2119 = vmax.f32 %v1778, 0.0
        %v2120 = vmax.f32 %v1889, 0.0
        %v2121 = vmax.f32 %v1891, 0.0
        %v2122 = vmax.f32 %v2002, 0.0
        %v2123 = vmax.f32 %v2004, 0.0
        %v2124 = vmax.f32 %v1667, 0.0
        %v2125 = vmax.f32 %v1669, 0.0
        %v2126 = vmax.f32 %v1780, 0.0
        %v2127 = vmax.f32 %v1782, 0.0
        %v2128 = vmax.f32 %v1893, 0.0
        %v2129 = vmax.f32 %v1895, 0.0
        %v2130 = vmax.f32 %v2006, 0.0
        %v2131 = vmax.f32 %v2008, 0.0
        %v2132 = vmax.f32 %v1673, 0.0
        %v2133 = vmax.f32 %v1675, 0.0
        %v2134 = vmax.f32 %v1786, 0.0
        %v2135 = vmax.f32 %v1788, 0.0
        %v2136 = vmax.f32 %v1899, 0.0
        %v2137 = vmax.f32 %v1901, 0.0
        %v2138 = vmax.f32 %v2012, 0.0
        %v2139 = vmax.f32 %v2014, 0.0
        %v2140 = vmax.f32 %v1677, 0.0
        %v2141 = vmax.f32 %v1679, 0.0
        %v2142 = vmax.f32 %v1790, 0.0
        %v2143 = vmax.f32 %v1792, 0.0
        %v2144 = vmax.f32 %v1903, 0.0
        %v2145 = vmax.f32 %v1905, 0.0
        %v2146 = vmax.f32 %v2016, 0.0
        %v2147 = vmax.f32 %v2018, 0.0
        %v2148 = vld [vmem:[#allocation2] sm:$0xff]
        %v2149 = vmax.f32 %v2020, %v2028
        %v2150 = vmax.f32 %v2149, %v2036
        %v2151 = vmax.f32 %v2150, %v2044
        %v2152 = vmax.f32 %v2151, %v2052
        %v2153 = vmax.f32 %v2152, %v2060
        %v2154 = vmax.f32 %v2153, %v2068
        %v2155 = vmax.f32 %v2154, %v2076
        %v2156 = vmax.f32 %v2155, %v2084
        %v2157 = vmax.f32 %v2156, %v2092
        %v2158 = vmax.f32 %v2157, %v2100
        %v2159 = vmax.f32 %v2158, %v2108
        %v2160 = vmax.f32 %v2159, %v2116
        %v2161 = vmax.f32 %v2160, %v2124
        %v2162 = vmax.f32 %v2161, %v2132
        %v2163 = vmax.f32 %v2162, %v2140
        %v2164 = vrot.slane %v2163, 4
        %v2165 = vmax.f32 %v2163, %v2164
        %v2166 = vrot.slane %v2165, 2
        %v2167 = vmax.f32 %v2165, %v2166
        %v2168 = vrot.slane %v2167, 1
        %v2169 = vmax.f32 %v2167, %v2168
        %v2170 = vmax.f32 %v2021, %v2029
        %v2171 = vmax.f32 %v2170, %v2037
        %v2172 = vmax.f32 %v2171, %v2045
        %v2173 = vmax.f32 %v2172, %v2053
        %v2174 = vmax.f32 %v2173, %v2061
        %v2175 = vmax.f32 %v2174, %v2069
        %v2176 = vmax.f32 %v2175, %v2077
        %v2177 = vmax.f32 %v2176, %v2085
        %v2178 = vmax.f32 %v2177, %v2093
        %v2179 = vmax.f32 %v2178, %v2101
        %v2180 = vmax.f32 %v2179, %v2109
        %v2181 = vmax.f32 %v2180, %v2117
        %v2182 = vmax.f32 %v2181, %v2125
        %v2183 = vmax.f32 %v2182, %v2133
        %v2184 = vmax.f32 %v2183, %v2141
        %v2185 = vrot.slane %v2184, 4
        %v2186 = vmax.f32 %v2184, %v2185
        %v2187 = vrot.slane %v2186, 2
        %v2188 = vmax.f32 %v2186, %v2187
        %v2189 = vrot.slane %v2188, 1
        %v2190 = vmax.f32 %v2188, %v2189
        %v2191 = vmax.f32 %v2022, %v2030
        %v2192 = vmax.f32 %v2191, %v2038
        %v2193 = vmax.f32 %v2192, %v2046
        %v2194 = vmax.f32 %v2193, %v2054
        %v2195 = vmax.f32 %v2194, %v2062
        %v2196 = vmax.f32 %v2195, %v2070
        %v2197 = vmax.f32 %v2196, %v2078
        %v2198 = vmax.f32 %v2197, %v2086
        %v2199 = vmax.f32 %v2198, %v2094
        %v2200 = vmax.f32 %v2199, %v2102
        %v2201 = vmax.f32 %v2200, %v2110
        %v2202 = vmax.f32 %v2201, %v2118
        %v2203 = vmax.f32 %v2202, %v2126
        %v2204 = vmax.f32 %v2203, %v2134
        %v2205 = vmax.f32 %v2204, %v2142
        %v2206 = vrot.slane %v2205, 4
        %v2207 = vmax.f32 %v2205, %v2206
        %v2208 = vrot.slane %v2207, 2
        %v2209 = vmax.f32 %v2207, %v2208
        %v2210 = vrot.slane %v2209, 1
        %v2211 = vmax.f32 %v2209, %v2210
        %v2212 = vmax.f32 %v2023, %v2031
        %v2213 = vmax.f32 %v2212, %v2039
        %v2214 = vmax.f32 %v2213, %v2047
        %v2215 = vmax.f32 %v2214, %v2055
        %v2216 = vmax.f32 %v2215, %v2063
        %v2217 = vmax.f32 %v2216, %v2071
        %v2218 = vmax.f32 %v2217, %v2079
        %v2219 = vmax.f32 %v2218, %v2087
        %v2220 = vmax.f32 %v2219, %v2095
        %v2221 = vmax.f32 %v2220, %v2103
        %v2222 = vmax.f32 %v2221, %v2111
        %v2223 = vmax.f32 %v2222, %v2119
        %v2224 = vmax.f32 %v2223, %v2127
        %v2225 = vmax.f32 %v2224, %v2135
        %v2226 = vmax.f32 %v2225, %v2143
        %v2227 = vrot.slane %v2226, 4
        %v2228 = vmax.f32 %v2226, %v2227
        %v2229 = vrot.slane %v2228, 2
        %v2230 = vmax.f32 %v2228, %v2229
        %v2231 = vrot.slane %v2230, 1
        %v2232 = vmax.f32 %v2230, %v2231
        %v2233 = vmax.f32 %v2024, %v2032
        %v2234 = vmax.f32 %v2233, %v2040
        %v2235 = vmax.f32 %v2234, %v2048
        %v2236 = vmax.f32 %v2235, %v2056
        %v2237 = vmax.f32 %v2236, %v2064
        %v2238 = vmax.f32 %v2237, %v2072
        %v2239 = vmax.f32 %v2238, %v2080
        %v2240 = vmax.f32 %v2239, %v2088
        %v2241 = vmax.f32 %v2240, %v2096
        %v2242 = vmax.f32 %v2241, %v2104
        %v2243 = vmax.f32 %v2242, %v2112
        %v2244 = vmax.f32 %v2243, %v2120
        %v2245 = vmax.f32 %v2244, %v2128
        %v2246 = vmax.f32 %v2245, %v2136
        %v2247 = vmax.f32 %v2246, %v2144
        %v2248 = vrot.slane %v2247, 4
        %v2249 = vmax.f32 %v2247, %v2248
        %v2250 = vrot.slane %v2249, 2
        %v2251 = vmax.f32 %v2249, %v2250
        %v2252 = vrot.slane %v2251, 1
        %v2253 = vmax.f32 %v2251, %v2252
        %v2254 = vmax.f32 %v2025, %v2033
        %v2255 = vmax.f32 %v2254, %v2041
        %v2256 = vmax.f32 %v2255, %v2049
        %v2257 = vmax.f32 %v2256, %v2057
        %v2258 = vmax.f32 %v2257, %v2065
        %v2259 = vmax.f32 %v2258, %v2073
        %v2260 = vmax.f32 %v2259, %v2081
        %v2261 = vmax.f32 %v2260, %v2089
        %v2262 = vmax.f32 %v2261, %v2097
        %v2263 = vmax.f32 %v2262, %v2105
        %v2264 = vmax.f32 %v2263, %v2113
        %v2265 = vmax.f32 %v2264, %v2121
        %v2266 = vmax.f32 %v2265, %v2129
        %v2267 = vmax.f32 %v2266, %v2137
        %v2268 = vmax.f32 %v2267, %v2145
        %v2269 = vrot.slane %v2268, 4
        %v2270 = vmax.f32 %v2268, %v2269
        %v2271 = vrot.slane %v2270, 2
        %v2272 = vmax.f32 %v2270, %v2271
        %v2273 = vrot.slane %v2272, 1
        %v2274 = vmax.f32 %v2272, %v2273
        %v2275 = vmax.f32 %v2026, %v2034
        %v2276 = vmax.f32 %v2275, %v2042
        %v2277 = vmax.f32 %v2276, %v2050
        %v2278 = vmax.f32 %v2277, %v2058
        %v2279 = vmax.f32 %v2278, %v2066
        %v2280 = vmax.f32 %v2279, %v2074
        %v2281 = vmax.f32 %v2280, %v2082
        %v2282 = vmax.f32 %v2281, %v2090
        %v2283 = vmax.f32 %v2282, %v2098
        %v2284 = vmax.f32 %v2283, %v2106
        %v2285 = vmax.f32 %v2284, %v2114
        %v2286 = vmax.f32 %v2285, %v2122
        %v2287 = vmax.f32 %v2286, %v2130
        %v2288 = vmax.f32 %v2287, %v2138
        %v2289 = vmax.f32 %v2288, %v2146
        %v2290 = vrot.slane %v2289, 4
        %v2291 = vmax.f32 %v2289, %v2290
        %v2292 = vrot.slane %v2291, 2
        %v2293 = vmax.f32 %v2291, %v2292
        %v2294 = vrot.slane %v2293, 1
        %v2295 = vmax.f32 %v2293, %v2294
        %v2296 = vmax.f32 %v2027, %v2035
        %v2297 = vmax.f32 %v2296, %v2043
        %v2298 = vmax.f32 %v2297, %v2051
        %v2299 = vmax.f32 %v2298, %v2059
        %v2300 = vmax.f32 %v2299, %v2067
        %v2301 = vmax.f32 %v2300, %v2075
        %v2302 = vmax.f32 %v2301, %v2083
        %v2303 = vmax.f32 %v2302, %v2091
        %v2304 = vmax.f32 %v2303, %v2099
        %v2305 = vmax.f32 %v2304, %v2107
        %v2306 = vmax.f32 %v2305, %v2115
        %v2307 = vmax.f32 %v2306, %v2123
        %v2308 = vmax.f32 %v2307, %v2131
        %v2309 = vmax.f32 %v2308, %v2139
        %v2310 = vmax.f32 %v2309, %v2147
        %v2311 = vrot.slane %v2310, 4
        %v2312 = vmax.f32 %v2310, %v2311
        %v2313 = vrot.slane %v2312, 2
        %v2314 = vmax.f32 %v2312, %v2313
        %v2315 = vrot.slane %v2314, 1
        %v2316 = vmax.f32 %v2314, %v2315
        %v2325 = vcombine.low %v2169, %v2190
        %v2326 = vcombine.low %v2211, %v2232
        %v2327 = vcombine.low %v2253, %v2274
        %v2328 = vcombine.low %v2295, %v2316
        %v2330 = vunpack.c.l.s4 1966171168
        %v2331 = vunpack.c.0.s8 %v2330
        %v2332 = vlaneseq
        %v2333 = vshrl.u32 %v2332, 7
        %v2334 = vsub.s32 %v2331, %v2333
        %v2335 = vrot.slane %v2325, %v2334
        %v2337 = vunpack.c.l.s4 1966171168
        %v2338 = vunpack.c.0.s8 %v2337
        %v2339 = vlaneseq
        %v2340 = vshrl.u32 %v2339, 7
        %v2341 = vsub.s32 %v2338, %v2340
        %v2342 = vrot.slane %v2326, %v2341
        %v2344 = vunpack.c.l.s4 1966171168
        %v2345 = vunpack.c.0.s8 %v2344
        %v2346 = vlaneseq
        %v2347 = vshrl.u32 %v2346, 7
        %v2348 = vsub.s32 %v2345, %v2347
        %v2349 = vrot.slane %v2327, %v2348
        %v2351 = vunpack.c.l.s4 1966171168
        %v2352 = vunpack.c.0.s8 %v2351
        %v2353 = vlaneseq
        %v2354 = vshrl.u32 %v2353, 7
        %v2355 = vsub.s32 %v2352, %v2354
        %v2356 = vrot.slane %v2328, %v2355
        %v2357 = vcombine.low %v2335, %v2342
        %v2358 = vcombine.low %v2349, %v2356
        %v2360 = vunpack.c.l.s4 1966171168
        %v2361 = vunpack.c.0.s8 %v2360
        %v2362 = vlaneseq
        %v2363 = vshrl.u32 %v2362, 7
        %v2364 = vsub.s32 %v2361, %v2363
        %v2365 = vrot.slane %v2357, %v2364
        %v2367 = vunpack.c.l.s4 1966171168
        %v2368 = vunpack.c.0.s8 %v2367
        %v2369 = vlaneseq
        %v2370 = vshrl.u32 %v2369, 7
        %v2371 = vsub.s32 %v2368, %v2370
        %v2372 = vrot.slane %v2358, %v2371
        %v2373 = vcombine.low %v2365, %v2372
        %v2375 = vmax.f32 %v2148, %v2373
        %2376 = vst [vmem:[#allocation2] sm:$0xff] %v2375
        // Predicated region
        $region109: #{tpu_custom_call.1} parent=71 // pred_check
          %p2377 = pneg %p569
        $region110: #{tpu_custom_call.1} parent=71 // pred_check_branch
          %2379 = sbr.rel (%p2377) target = $region112
        $region111: #{tpu_custom_call.1} parent=71 // pred_region
          %v2380 = vld [vmem:[#allocation2] sm:$0xff]
          %v2382 = vlaneseq
          %v2383 = vshrl.u32 %v2382, 7
          %v2384 = vsub.s32 0, %v2383
          %v2385 = vrot.slane %v2380, %v2384
          %v2386 = vlaneseq
          %v2387 = vshrl.u32 %v2386, 7
          %v2388 = vsub.s32 1, %v2387
          %v2389 = vrot.slane %v2380, %v2388
          %v2390 = vlaneseq
          %v2391 = vshrl.u32 %v2390, 7
          %v2392 = vsub.s32 2, %v2391
          %v2393 = vrot.slane %v2380, %v2392
          %v2394 = vlaneseq
          %v2395 = vshrl.u32 %v2394, 7
          %v2396 = vsub.s32 3, %v2395
          %v2397 = vrot.slane %v2380, %v2396
          %v2398 = vlaneseq
          %v2399 = vshrl.u32 %v2398, 7
          %v2400 = vsub.s32 4, %v2399
          %v2401 = vrot.slane %v2380, %v2400
          %v2402 = vlaneseq
          %v2403 = vshrl.u32 %v2402, 7
          %v2404 = vsub.s32 5, %v2403
          %v2405 = vrot.slane %v2380, %v2404
          %v2406 = vlaneseq
          %v2407 = vshrl.u32 %v2406, 7
          %v2408 = vsub.s32 6, %v2407
          %v2409 = vrot.slane %v2380, %v2408
          %v2410 = vlaneseq
          %v2411 = vshrl.u32 %v2410, 7
          %v2412 = vsub.s32 7, %v2411
          %v2413 = vrot.slane %v2380, %v2412
          %v2422 = vpack.c.bf16 %v2385, %v2385
          %v2423 = vpack.c.bf16 %v2389, %v2389
          %v2424 = vpack.c.bf16 %v2393, %v2393
          %v2425 = vpack.c.bf16 %v2397, %v2397
          %v2426 = vpack.c.bf16 %v2401, %v2401
          %v2427 = vpack.c.bf16 %v2405, %v2405
          %v2428 = vpack.c.bf16 %v2409, %v2409
          %v2429 = vpack.c.bf16 %v2413, %v2413
          %v2430 = vld [vmem:[#allocation12] sm:$0xff]
          %v2431 = vld [vmem:[#allocation12 + $0x8] sm:$0xff]
          %v2432 = vld [vmem:[#allocation12 + $0x10] sm:$0xff]
          %v2433 = vld [vmem:[#allocation12 + $0x18] sm:$0xff]
          %v2434 = vld [vmem:[#allocation12 + $0x20] sm:$0xff]
          %v2435 = vld [vmem:[#allocation12 + $0x28] sm:$0xff]
          %v2436 = vld [vmem:[#allocation12 + $0x30] sm:$0xff]
          %v2437 = vld [vmem:[#allocation12 + $0x38] sm:$0xff]
          %v2438 = vld [vmem:[#allocation12 + $0x40] sm:$0xff]
          %v2439 = vld [vmem:[#allocation12 + $0x48] sm:$0xff]
          %v2440 = vld [vmem:[#allocation12 + $0x50] sm:$0xff]
          %v2441 = vld [vmem:[#allocation12 + $0x58] sm:$0xff]
          %v2442 = vld [vmem:[#allocation12 + $0x60] sm:$0xff]
          %v2443 = vld [vmem:[#allocation12 + $0x68] sm:$0xff]
          %v2444 = vld [vmem:[#allocation12 + $0x70] sm:$0xff]
          %v2445 = vld [vmem:[#allocation12 + $0x78] sm:$0xff]
          %v2446 = vld [vmem:[#allocation12 + $0x80] sm:$0xff]
          %v2447 = vld [vmem:[#allocation12 + $0x88] sm:$0xff]
          %v2448 = vld [vmem:[#allocation12 + $0x90] sm:$0xff]
          %v2449 = vld [vmem:[#allocation12 + $0x98] sm:$0xff]
          %v2450 = vld [vmem:[#allocation12 + $0xa0] sm:$0xff]
          %v2451 = vld [vmem:[#allocation12 + $0xa8] sm:$0xff]
          %v2452 = vld [vmem:[#allocation12 + $0xb0] sm:$0xff]
          %v2453 = vld [vmem:[#allocation12 + $0xb8] sm:$0xff]
          %v2454 = vld [vmem:[#allocation12 + $0xc0] sm:$0xff]
          %v2455 = vld [vmem:[#allocation12 + $0xc8] sm:$0xff]
          %v2456 = vld [vmem:[#allocation12 + $0xd0] sm:$0xff]
          %v2457 = vld [vmem:[#allocation12 + $0xd8] sm:$0xff]
          %v2458 = vld [vmem:[#allocation12 + $0xe0] sm:$0xff]
          %v2459 = vld [vmem:[#allocation12 + $0xe8] sm:$0xff]
          %v2460 = vld [vmem:[#allocation12 + $0xf0] sm:$0xff]
          %v2461 = vld [vmem:[#allocation12 + $0xf8] sm:$0xff]
          %v2462 = vld [vmem:[#allocation12 + $0x100] sm:$0xff]
          %v2463 = vld [vmem:[#allocation12 + $0x108] sm:$0xff]
          %v2464 = vld [vmem:[#allocation12 + $0x110] sm:$0xff]
          %v2465 = vld [vmem:[#allocation12 + $0x118] sm:$0xff]
          %v2466 = vld [vmem:[#allocation12 + $0x120] sm:$0xff]
          %v2467 = vld [vmem:[#allocation12 + $0x128] sm:$0xff]
          %v2468 = vld [vmem:[#allocation12 + $0x130] sm:$0xff]
          %v2469 = vld [vmem:[#allocation12 + $0x138] sm:$0xff]
          %v2470 = vld [vmem:[#allocation12 + $0x140] sm:$0xff]
          %v2471 = vld [vmem:[#allocation12 + $0x148] sm:$0xff]
          %v2472 = vld [vmem:[#allocation12 + $0x150] sm:$0xff]
          %v2473 = vld [vmem:[#allocation12 + $0x158] sm:$0xff]
          %v2474 = vld [vmem:[#allocation12 + $0x160] sm:$0xff]
          %v2475 = vld [vmem:[#allocation12 + $0x168] sm:$0xff]
          %v2476 = vld [vmem:[#allocation12 + $0x170] sm:$0xff]
          %v2477 = vld [vmem:[#allocation12 + $0x178] sm:$0xff]
          %v2478 = vld [vmem:[#allocation12 + $0x180] sm:$0xff]
          %v2479 = vld [vmem:[#allocation12 + $0x188] sm:$0xff]
          %v2480 = vld [vmem:[#allocation12 + $0x190] sm:$0xff]
          %v2481 = vld [vmem:[#allocation12 + $0x198] sm:$0xff]
          %v2482 = vld [vmem:[#allocation12 + $0x1a0] sm:$0xff]
          %v2483 = vld [vmem:[#allocation12 + $0x1a8] sm:$0xff]
          %v2484 = vld [vmem:[#allocation12 + $0x1b0] sm:$0xff]
          %v2485 = vld [vmem:[#allocation12 + $0x1b8] sm:$0xff]
          %v2486 = vld [vmem:[#allocation12 + $0x1c0] sm:$0xff]
          %v2487 = vld [vmem:[#allocation12 + $0x1c8] sm:$0xff]
          %v2488 = vld [vmem:[#allocation12 + $0x1d0] sm:$0xff]
          %v2489 = vld [vmem:[#allocation12 + $0x1d8] sm:$0xff]
          %v2490 = vld [vmem:[#allocation12 + $0x1e0] sm:$0xff]
          %v2491 = vld [vmem:[#allocation12 + $0x1e8] sm:$0xff]
          %v2492 = vld [vmem:[#allocation12 + $0x1f0] sm:$0xff]
          %v2493 = vld [vmem:[#allocation12 + $0x1f8] sm:$0xff]
          %v2494 = vld [vmem:[#allocation12 + $0x200] sm:$0xff]
          %v2495 = vld [vmem:[#allocation12 + $0x208] sm:$0xff]
          %v2496 = vld [vmem:[#allocation12 + $0x210] sm:$0xff]
          %v2497 = vld [vmem:[#allocation12 + $0x218] sm:$0xff]
          %v2498 = vld [vmem:[#allocation12 + $0x220] sm:$0xff]
          %v2499 = vld [vmem:[#allocation12 + $0x228] sm:$0xff]
          %v2500 = vld [vmem:[#allocation12 + $0x230] sm:$0xff]
          %v2501 = vld [vmem:[#allocation12 + $0x238] sm:$0xff]
          %v2502 = vld [vmem:[#allocation12 + $0x240] sm:$0xff]
          %v2503 = vld [vmem:[#allocation12 + $0x248] sm:$0xff]
          %v2504 = vld [vmem:[#allocation12 + $0x250] sm:$0xff]
          %v2505 = vld [vmem:[#allocation12 + $0x258] sm:$0xff]
          %v2506 = vld [vmem:[#allocation12 + $0x260] sm:$0xff]
          %v2507 = vld [vmem:[#allocation12 + $0x268] sm:$0xff]
          %v2508 = vld [vmem:[#allocation12 + $0x270] sm:$0xff]
          %v2509 = vld [vmem:[#allocation12 + $0x278] sm:$0xff]
          %v2510 = vld [vmem:[#allocation12 + $0x280] sm:$0xff]
          %v2511 = vld [vmem:[#allocation12 + $0x288] sm:$0xff]
          %v2512 = vld [vmem:[#allocation12 + $0x290] sm:$0xff]
          %v2513 = vld [vmem:[#allocation12 + $0x298] sm:$0xff]
          %v2514 = vld [vmem:[#allocation12 + $0x2a0] sm:$0xff]
          %v2515 = vld [vmem:[#allocation12 + $0x2a8] sm:$0xff]
          %v2516 = vld [vmem:[#allocation12 + $0x2b0] sm:$0xff]
          %v2517 = vld [vmem:[#allocation12 + $0x2b8] sm:$0xff]
          %v2518 = vld [vmem:[#allocation12 + $0x2c0] sm:$0xff]
          %v2519 = vld [vmem:[#allocation12 + $0x2c8] sm:$0xff]
          %v2520 = vld [vmem:[#allocation12 + $0x2d0] sm:$0xff]
          %v2521 = vld [vmem:[#allocation12 + $0x2d8] sm:$0xff]
          %v2522 = vld [vmem:[#allocation12 + $0x2e0] sm:$0xff]
          %v2523 = vld [vmem:[#allocation12 + $0x2e8] sm:$0xff]
          %v2524 = vld [vmem:[#allocation12 + $0x2f0] sm:$0xff]
          %v2525 = vld [vmem:[#allocation12 + $0x2f8] sm:$0xff]
          %v2526 = vld [vmem:[#allocation12 + $0x300] sm:$0xff]
          %v2527 = vld [vmem:[#allocation12 + $0x308] sm:$0xff]
          %v2528 = vld [vmem:[#allocation12 + $0x310] sm:$0xff]
          %v2529 = vld [vmem:[#allocation12 + $0x318] sm:$0xff]
          %v2530 = vld [vmem:[#allocation12 + $0x320] sm:$0xff]
          %v2531 = vld [vmem:[#allocation12 + $0x328] sm:$0xff]
          %v2532 = vld [vmem:[#allocation12 + $0x330] sm:$0xff]
          %v2533 = vld [vmem:[#allocation12 + $0x338] sm:$0xff]
          %v2534 = vld [vmem:[#allocation12 + $0x340] sm:$0xff]
          %v2535 = vld [vmem:[#allocation12 + $0x348] sm:$0xff]
          %v2536 = vld [vmem:[#allocation12 + $0x350] sm:$0xff]
          %v2537 = vld [vmem:[#allocation12 + $0x358] sm:$0xff]
          %v2538 = vld [vmem:[#allocation12 + $0x360] sm:$0xff]
          %v2539 = vld [vmem:[#allocation12 + $0x368] sm:$0xff]
          %v2540 = vld [vmem:[#allocation12 + $0x370] sm:$0xff]
          %v2541 = vld [vmem:[#allocation12 + $0x378] sm:$0xff]
          %v2542 = vld [vmem:[#allocation12 + $0x380] sm:$0xff]
          %v2543 = vld [vmem:[#allocation12 + $0x388] sm:$0xff]
          %v2544 = vld [vmem:[#allocation12 + $0x390] sm:$0xff]
          %v2545 = vld [vmem:[#allocation12 + $0x398] sm:$0xff]
          %v2546 = vld [vmem:[#allocation12 + $0x3a0] sm:$0xff]
          %v2547 = vld [vmem:[#allocation12 + $0x3a8] sm:$0xff]
          %v2548 = vld [vmem:[#allocation12 + $0x3b0] sm:$0xff]
          %v2549 = vld [vmem:[#allocation12 + $0x3b8] sm:$0xff]
          %v2550 = vld [vmem:[#allocation12 + $0x3c0] sm:$0xff]
          %v2551 = vld [vmem:[#allocation12 + $0x3c8] sm:$0xff]
          %v2552 = vld [vmem:[#allocation12 + $0x3d0] sm:$0xff]
          %v2553 = vld [vmem:[#allocation12 + $0x3d8] sm:$0xff]
          %v2554 = vld [vmem:[#allocation12 + $0x3e0] sm:$0xff]
          %v2555 = vld [vmem:[#allocation12 + $0x3e8] sm:$0xff]
          %v2556 = vld [vmem:[#allocation12 + $0x3f0] sm:$0xff]
          %v2557 = vld [vmem:[#allocation12 + $0x3f8] sm:$0xff]
          %v2558 = vld [vmem:[#allocation12 + $0x400] sm:$0xff]
          %v2559 = vld [vmem:[#allocation12 + $0x408] sm:$0xff]
          %v2560 = vld [vmem:[#allocation12 + $0x410] sm:$0xff]
          %v2561 = vld [vmem:[#allocation12 + $0x418] sm:$0xff]
          %v2562 = vld [vmem:[#allocation12 + $0x420] sm:$0xff]
          %v2563 = vld [vmem:[#allocation12 + $0x428] sm:$0xff]
          %v2564 = vld [vmem:[#allocation12 + $0x430] sm:$0xff]
          %v2565 = vld [vmem:[#allocation12 + $0x438] sm:$0xff]
          %v2566 = vld [vmem:[#allocation12 + $0x440] sm:$0xff]
          %v2567 = vld [vmem:[#allocation12 + $0x448] sm:$0xff]
          %v2568 = vld [vmem:[#allocation12 + $0x450] sm:$0xff]
          %v2569 = vld [vmem:[#allocation12 + $0x458] sm:$0xff]
          %v2570 = vld [vmem:[#allocation12 + $0x460] sm:$0xff]
          %v2571 = vld [vmem:[#allocation12 + $0x468] sm:$0xff]
          %v2572 = vld [vmem:[#allocation12 + $0x470] sm:$0xff]
          %v2573 = vld [vmem:[#allocation12 + $0x478] sm:$0xff]
          %v2574 = vld [vmem:[#allocation12 + $0x480] sm:$0xff]
          %v2575 = vld [vmem:[#allocation12 + $0x488] sm:$0xff]
          %v2576 = vld [vmem:[#allocation12 + $0x490] sm:$0xff]
          %v2577 = vld [vmem:[#allocation12 + $0x498] sm:$0xff]
          %v2578 = vld [vmem:[#allocation12 + $0x4a0] sm:$0xff]
          %v2579 = vld [vmem:[#allocation12 + $0x4a8] sm:$0xff]
          %v2580 = vld [vmem:[#allocation12 + $0x4b0] sm:$0xff]
          %v2581 = vld [vmem:[#allocation12 + $0x4b8] sm:$0xff]
          %v2582 = vld [vmem:[#allocation12 + $0x4c0] sm:$0xff]
          %v2583 = vld [vmem:[#allocation12 + $0x4c8] sm:$0xff]
          %v2584 = vld [vmem:[#allocation12 + $0x4d0] sm:$0xff]
          %v2585 = vld [vmem:[#allocation12 + $0x4d8] sm:$0xff]
          %v2586 = vld [vmem:[#allocation12 + $0x4e0] sm:$0xff]
          %v2587 = vld [vmem:[#allocation12 + $0x4e8] sm:$0xff]
          %v2588 = vld [vmem:[#allocation12 + $0x4f0] sm:$0xff]
          %v2589 = vld [vmem:[#allocation12 + $0x4f8] sm:$0xff]
          %v2590 = vld [vmem:[#allocation12 + $0x500] sm:$0xff]
          %v2591 = vld [vmem:[#allocation12 + $0x508] sm:$0xff]
          %v2592 = vld [vmem:[#allocation12 + $0x510] sm:$0xff]
          %v2593 = vld [vmem:[#allocation12 + $0x518] sm:$0xff]
          %v2594 = vld [vmem:[#allocation12 + $0x520] sm:$0xff]
          %v2595 = vld [vmem:[#allocation12 + $0x528] sm:$0xff]
          %v2596 = vld [vmem:[#allocation12 + $0x530] sm:$0xff]
          %v2597 = vld [vmem:[#allocation12 + $0x538] sm:$0xff]
          %v2598 = vld [vmem:[#allocation12 + $0x540] sm:$0xff]
          %v2599 = vld [vmem:[#allocation12 + $0x548] sm:$0xff]
          %v2600 = vld [vmem:[#allocation12 + $0x550] sm:$0xff]
          %v2601 = vld [vmem:[#allocation12 + $0x558] sm:$0xff]
          %v2602 = vld [vmem:[#allocation12 + $0x560] sm:$0xff]
          %v2603 = vld [vmem:[#allocation12 + $0x568] sm:$0xff]
          %v2604 = vld [vmem:[#allocation12 + $0x570] sm:$0xff]
          %v2605 = vld [vmem:[#allocation12 + $0x578] sm:$0xff]
          %v2606 = vld [vmem:[#allocation12 + $0x580] sm:$0xff]
          %v2607 = vld [vmem:[#allocation12 + $0x588] sm:$0xff]
          %v2608 = vld [vmem:[#allocation12 + $0x590] sm:$0xff]
          %v2609 = vld [vmem:[#allocation12 + $0x598] sm:$0xff]
          %v2610 = vld [vmem:[#allocation12 + $0x5a0] sm:$0xff]
          %v2611 = vld [vmem:[#allocation12 + $0x5a8] sm:$0xff]
          %v2612 = vld [vmem:[#allocation12 + $0x5b0] sm:$0xff]
          %v2613 = vld [vmem:[#allocation12 + $0x5b8] sm:$0xff]
          %v2614 = vld [vmem:[#allocation12 + $0x5c0] sm:$0xff]
          %v2615 = vld [vmem:[#allocation12 + $0x5c8] sm:$0xff]
          %v2616 = vld [vmem:[#allocation12 + $0x5d0] sm:$0xff]
          %v2617 = vld [vmem:[#allocation12 + $0x5d8] sm:$0xff]
          %v2618 = vld [vmem:[#allocation12 + $0x5e0] sm:$0xff]
          %v2619 = vld [vmem:[#allocation12 + $0x5e8] sm:$0xff]
          %v2620 = vld [vmem:[#allocation12 + $0x5f0] sm:$0xff]
          %v2621 = vld [vmem:[#allocation12 + $0x5f8] sm:$0xff]
          %v2622 = vld [vmem:[#allocation12 + $0x600] sm:$0xff]
          %v2623 = vld [vmem:[#allocation12 + $0x608] sm:$0xff]
          %v2624 = vld [vmem:[#allocation12 + $0x610] sm:$0xff]
          %v2625 = vld [vmem:[#allocation12 + $0x618] sm:$0xff]
          %v2626 = vld [vmem:[#allocation12 + $0x620] sm:$0xff]
          %v2627 = vld [vmem:[#allocation12 + $0x628] sm:$0xff]
          %v2628 = vld [vmem:[#allocation12 + $0x630] sm:$0xff]
          %v2629 = vld [vmem:[#allocation12 + $0x638] sm:$0xff]
          %v2630 = vld [vmem:[#allocation12 + $0x640] sm:$0xff]
          %v2631 = vld [vmem:[#allocation12 + $0x648] sm:$0xff]
          %v2632 = vld [vmem:[#allocation12 + $0x650] sm:$0xff]
          %v2633 = vld [vmem:[#allocation12 + $0x658] sm:$0xff]
          %v2634 = vld [vmem:[#allocation12 + $0x660] sm:$0xff]
          %v2635 = vld [vmem:[#allocation12 + $0x668] sm:$0xff]
          %v2636 = vld [vmem:[#allocation12 + $0x670] sm:$0xff]
          %v2637 = vld [vmem:[#allocation12 + $0x678] sm:$0xff]
          %v2638 = vld [vmem:[#allocation12 + $0x680] sm:$0xff]
          %v2639 = vld [vmem:[#allocation12 + $0x688] sm:$0xff]
          %v2640 = vld [vmem:[#allocation12 + $0x690] sm:$0xff]
          %v2641 = vld [vmem:[#allocation12 + $0x698] sm:$0xff]
          %v2642 = vld [vmem:[#allocation12 + $0x6a0] sm:$0xff]
          %v2643 = vld [vmem:[#allocation12 + $0x6a8] sm:$0xff]
          %v2644 = vld [vmem:[#allocation12 + $0x6b0] sm:$0xff]
          %v2645 = vld [vmem:[#allocation12 + $0x6b8] sm:$0xff]
          %v2646 = vld [vmem:[#allocation12 + $0x6c0] sm:$0xff]
          %v2647 = vld [vmem:[#allocation12 + $0x6c8] sm:$0xff]
          %v2648 = vld [vmem:[#allocation12 + $0x6d0] sm:$0xff]
          %v2649 = vld [vmem:[#allocation12 + $0x6d8] sm:$0xff]
          %v2650 = vld [vmem:[#allocation12 + $0x6e0] sm:$0xff]
          %v2651 = vld [vmem:[#allocation12 + $0x6e8] sm:$0xff]
          %v2652 = vld [vmem:[#allocation12 + $0x6f0] sm:$0xff]
          %v2653 = vld [vmem:[#allocation12 + $0x6f8] sm:$0xff]
          %v2654 = vld [vmem:[#allocation12 + $0x700] sm:$0xff]
          %v2655 = vld [vmem:[#allocation12 + $0x708] sm:$0xff]
          %v2656 = vld [vmem:[#allocation12 + $0x710] sm:$0xff]
          %v2657 = vld [vmem:[#allocation12 + $0x718] sm:$0xff]
          %v2658 = vld [vmem:[#allocation12 + $0x720] sm:$0xff]
          %v2659 = vld [vmem:[#allocation12 + $0x728] sm:$0xff]
          %v2660 = vld [vmem:[#allocation12 + $0x730] sm:$0xff]
          %v2661 = vld [vmem:[#allocation12 + $0x738] sm:$0xff]
          %v2662 = vld [vmem:[#allocation12 + $0x740] sm:$0xff]
          %v2663 = vld [vmem:[#allocation12 + $0x748] sm:$0xff]
          %v2664 = vld [vmem:[#allocation12 + $0x750] sm:$0xff]
          %v2665 = vld [vmem:[#allocation12 + $0x758] sm:$0xff]
          %v2666 = vld [vmem:[#allocation12 + $0x760] sm:$0xff]
          %v2667 = vld [vmem:[#allocation12 + $0x768] sm:$0xff]
          %v2668 = vld [vmem:[#allocation12 + $0x770] sm:$0xff]
          %v2669 = vld [vmem:[#allocation12 + $0x778] sm:$0xff]
          %v2670 = vld [vmem:[#allocation12 + $0x780] sm:$0xff]
          %v2671 = vld [vmem:[#allocation12 + $0x788] sm:$0xff]
          %v2672 = vld [vmem:[#allocation12 + $0x790] sm:$0xff]
          %v2673 = vld [vmem:[#allocation12 + $0x798] sm:$0xff]
          %v2674 = vld [vmem:[#allocation12 + $0x7a0] sm:$0xff]
          %v2675 = vld [vmem:[#allocation12 + $0x7a8] sm:$0xff]
          %v2676 = vld [vmem:[#allocation12 + $0x7b0] sm:$0xff]
          %v2677 = vld [vmem:[#allocation12 + $0x7b8] sm:$0xff]
          %v2678 = vld [vmem:[#allocation12 + $0x7c0] sm:$0xff]
          %v2679 = vld [vmem:[#allocation12 + $0x7c8] sm:$0xff]
          %v2680 = vld [vmem:[#allocation12 + $0x7d0] sm:$0xff]
          %v2681 = vld [vmem:[#allocation12 + $0x7d8] sm:$0xff]
          %v2682 = vld [vmem:[#allocation12 + $0x7e0] sm:$0xff]
          %v2683 = vld [vmem:[#allocation12 + $0x7e8] sm:$0xff]
          %v2684 = vld [vmem:[#allocation12 + $0x7f0] sm:$0xff]
          %v2685 = vld [vmem:[#allocation12 + $0x7f8] sm:$0xff]
          %v2686 = vld [vmem:[%s8] sm:$0xf]
          %v2943 = vunpack.c.l.b16 %v2430
          %v2944 = vunpack.c.h.b16 %v2430
          %v2945 = vunpack.c.l.b16 %v2431
          %v2946 = vunpack.c.h.b16 %v2431
          %v2947 = vunpack.c.l.b16 %v2432
          %v2948 = vunpack.c.h.b16 %v2432
          %v2949 = vunpack.c.l.b16 %v2433
          %v2950 = vunpack.c.h.b16 %v2433
          %v2951 = vunpack.c.l.b16 %v2434
          %v2952 = vunpack.c.h.b16 %v2434
          %v2953 = vunpack.c.l.b16 %v2435
          %v2954 = vunpack.c.h.b16 %v2435
          %v2955 = vunpack.c.l.b16 %v2436
          %v2956 = vunpack.c.h.b16 %v2436
          %v2957 = vunpack.c.l.b16 %v2437
          %v2958 = vunpack.c.h.b16 %v2437
          %v2959 = vunpack.c.l.b16 %v2438
          %v2960 = vunpack.c.h.b16 %v2438
          %v2961 = vunpack.c.l.b16 %v2439
          %v2962 = vunpack.c.h.b16 %v2439
          %v2963 = vunpack.c.l.b16 %v2440
          %v2964 = vunpack.c.h.b16 %v2440
          %v2965 = vunpack.c.l.b16 %v2441
          %v2966 = vunpack.c.h.b16 %v2441
          %v2967 = vunpack.c.l.b16 %v2442
          %v2968 = vunpack.c.h.b16 %v2442
          %v2969 = vunpack.c.l.b16 %v2443
          %v2970 = vunpack.c.h.b16 %v2443
          %v2971 = vunpack.c.l.b16 %v2444
          %v2972 = vunpack.c.h.b16 %v2444
          %v2973 = vunpack.c.l.b16 %v2445
          %v2974 = vunpack.c.h.b16 %v2445
          %v2975 = vunpack.c.l.b16 %v2446
          %v2976 = vunpack.c.h.b16 %v2446
          %v2977 = vunpack.c.l.b16 %v2447
          %v2978 = vunpack.c.h.b16 %v2447
          %v2979 = vunpack.c.l.b16 %v2448
          %v2980 = vunpack.c.h.b16 %v2448
          %v2981 = vunpack.c.l.b16 %v2449
          %v2982 = vunpack.c.h.b16 %v2449
          %v2983 = vunpack.c.l.b16 %v2450
          %v2984 = vunpack.c.h.b16 %v2450
          %v2985 = vunpack.c.l.b16 %v2451
          %v2986 = vunpack.c.h.b16 %v2451
          %v2987 = vunpack.c.l.b16 %v2452
          %v2988 = vunpack.c.h.b16 %v2452
          %v2989 = vunpack.c.l.b16 %v2453
          %v2990 = vunpack.c.h.b16 %v2453
          %v2991 = vunpack.c.l.b16 %v2454
          %v2992 = vunpack.c.h.b16 %v2454
          %v2993 = vunpack.c.l.b16 %v2455
          %v2994 = vunpack.c.h.b16 %v2455
          %v2995 = vunpack.c.l.b16 %v2456
          %v2996 = vunpack.c.h.b16 %v2456
          %v2997 = vunpack.c.l.b16 %v2457
          %v2998 = vunpack.c.h.b16 %v2457
          %v2999 = vunpack.c.l.b16 %v2458
          %v3000 = vunpack.c.h.b16 %v2458
          %v3001 = vunpack.c.l.b16 %v2459
          %v3002 = vunpack.c.h.b16 %v2459
          %v3003 = vunpack.c.l.b16 %v2460
          %v3004 = vunpack.c.h.b16 %v2460
          %v3005 = vunpack.c.l.b16 %v2461
          %v3006 = vunpack.c.h.b16 %v2461
          %v3007 = vunpack.c.l.b16 %v2462
          %v3008 = vunpack.c.h.b16 %v2462
          %v3009 = vunpack.c.l.b16 %v2463
          %v3010 = vunpack.c.h.b16 %v2463
          %v3011 = vunpack.c.l.b16 %v2464
          %v3012 = vunpack.c.h.b16 %v2464
          %v3013 = vunpack.c.l.b16 %v2465
          %v3014 = vunpack.c.h.b16 %v2465
          %v3015 = vunpack.c.l.b16 %v2466
          %v3016 = vunpack.c.h.b16 %v2466
          %v3017 = vunpack.c.l.b16 %v2467
          %v3018 = vunpack.c.h.b16 %v2467
          %v3019 = vunpack.c.l.b16 %v2468
          %v3020 = vunpack.c.h.b16 %v2468
          %v3021 = vunpack.c.l.b16 %v2469
          %v3022 = vunpack.c.h.b16 %v2469
          %v3023 = vunpack.c.l.b16 %v2470
          %v3024 = vunpack.c.h.b16 %v2470
          %v3025 = vunpack.c.l.b16 %v2471
          %v3026 = vunpack.c.h.b16 %v2471
          %v3027 = vunpack.c.l.b16 %v2472
          %v3028 = vunpack.c.h.b16 %v2472
          %v3029 = vunpack.c.l.b16 %v2473
          %v3030 = vunpack.c.h.b16 %v2473
          %v3031 = vunpack.c.l.b16 %v2474
          %v3032 = vunpack.c.h.b16 %v2474
          %v3033 = vunpack.c.l.b16 %v2475
          %v3034 = vunpack.c.h.b16 %v2475
          %v3035 = vunpack.c.l.b16 %v2476
          %v3036 = vunpack.c.h.b16 %v2476
          %v3037 = vunpack.c.l.b16 %v2477
          %v3038 = vunpack.c.h.b16 %v2477
          %v3039 = vunpack.c.l.b16 %v2478
          %v3040 = vunpack.c.h.b16 %v2478
          %v3041 = vunpack.c.l.b16 %v2479
          %v3042 = vunpack.c.h.b16 %v2479
          %v3043 = vunpack.c.l.b16 %v2480
          %v3044 = vunpack.c.h.b16 %v2480
          %v3045 = vunpack.c.l.b16 %v2481
          %v3046 = vunpack.c.h.b16 %v2481
          %v3047 = vunpack.c.l.b16 %v2482
          %v3048 = vunpack.c.h.b16 %v2482
          %v3049 = vunpack.c.l.b16 %v2483
          %v3050 = vunpack.c.h.b16 %v2483
          %v3051 = vunpack.c.l.b16 %v2484
          %v3052 = vunpack.c.h.b16 %v2484
          %v3053 = vunpack.c.l.b16 %v2485
          %v3054 = vunpack.c.h.b16 %v2485
          %v3055 = vunpack.c.l.b16 %v2486
          %v3056 = vunpack.c.h.b16 %v2486
          %v3057 = vunpack.c.l.b16 %v2487
          %v3058 = vunpack.c.h.b16 %v2487
          %v3059 = vunpack.c.l.b16 %v2488
          %v3060 = vunpack.c.h.b16 %v2488
          %v3061 = vunpack.c.l.b16 %v2489
          %v3062 = vunpack.c.h.b16 %v2489
          %v3063 = vunpack.c.l.b16 %v2490
          %v3064 = vunpack.c.h.b16 %v2490
          %v3065 = vunpack.c.l.b16 %v2491
          %v3066 = vunpack.c.h.b16 %v2491
          %v3067 = vunpack.c.l.b16 %v2492
          %v3068 = vunpack.c.h.b16 %v2492
          %v3069 = vunpack.c.l.b16 %v2493
          %v3070 = vunpack.c.h.b16 %v2493
          %v3071 = vunpack.c.l.b16 %v2494
          %v3072 = vunpack.c.h.b16 %v2494
          %v3073 = vunpack.c.l.b16 %v2495
          %v3074 = vunpack.c.h.b16 %v2495
          %v3075 = vunpack.c.l.b16 %v2496
          %v3076 = vunpack.c.h.b16 %v2496
          %v3077 = vunpack.c.l.b16 %v2497
          %v3078 = vunpack.c.h.b16 %v2497
          %v3079 = vunpack.c.l.b16 %v2498
          %v3080 = vunpack.c.h.b16 %v2498
          %v3081 = vunpack.c.l.b16 %v2499
          %v3082 = vunpack.c.h.b16 %v2499
          %v3083 = vunpack.c.l.b16 %v2500
          %v3084 = vunpack.c.h.b16 %v2500
          %v3085 = vunpack.c.l.b16 %v2501
          %v3086 = vunpack.c.h.b16 %v2501
          %v3087 = vunpack.c.l.b16 %v2502
          %v3088 = vunpack.c.h.b16 %v2502
          %v3089 = vunpack.c.l.b16 %v2503
          %v3090 = vunpack.c.h.b16 %v2503
          %v3091 = vunpack.c.l.b16 %v2504
          %v3092 = vunpack.c.h.b16 %v2504
          %v3093 = vunpack.c.l.b16 %v2505
          %v3094 = vunpack.c.h.b16 %v2505
          %v3095 = vunpack.c.l.b16 %v2506
          %v3096 = vunpack.c.h.b16 %v2506
          %v3097 = vunpack.c.l.b16 %v2507
          %v3098 = vunpack.c.h.b16 %v2507
          %v3099 = vunpack.c.l.b16 %v2508
          %v3100 = vunpack.c.h.b16 %v2508
          %v3101 = vunpack.c.l.b16 %v2509
          %v3102 = vunpack.c.h.b16 %v2509
          %v3103 = vunpack.c.l.b16 %v2510
          %v3104 = vunpack.c.h.b16 %v2510
          %v3105 = vunpack.c.l.b16 %v2511
          %v3106 = vunpack.c.h.b16 %v2511
          %v3107 = vunpack.c.l.b16 %v2512
          %v3108 = vunpack.c.h.b16 %v2512
          %v3109 = vunpack.c.l.b16 %v2513
          %v3110 = vunpack.c.h.b16 %v2513
          %v3111 = vunpack.c.l.b16 %v2514
          %v3112 = vunpack.c.h.b16 %v2514
          %v3113 = vunpack.c.l.b16 %v2515
          %v3114 = vunpack.c.h.b16 %v2515
          %v3115 = vunpack.c.l.b16 %v2516
          %v3116 = vunpack.c.h.b16 %v2516
          %v3117 = vunpack.c.l.b16 %v2517
          %v3118 = vunpack.c.h.b16 %v2517
          %v3119 = vunpack.c.l.b16 %v2518
          %v3120 = vunpack.c.h.b16 %v2518
          %v3121 = vunpack.c.l.b16 %v2519
          %v3122 = vunpack.c.h.b16 %v2519
          %v3123 = vunpack.c.l.b16 %v2520
          %v3124 = vunpack.c.h.b16 %v2520
          %v3125 = vunpack.c.l.b16 %v2521
          %v3126 = vunpack.c.h.b16 %v2521
          %v3127 = vunpack.c.l.b16 %v2522
          %v3128 = vunpack.c.h.b16 %v2522
          %v3129 = vunpack.c.l.b16 %v2523
          %v3130 = vunpack.c.h.b16 %v2523
          %v3131 = vunpack.c.l.b16 %v2524
          %v3132 = vunpack.c.h.b16 %v2524
          %v3133 = vunpack.c.l.b16 %v2525
          %v3134 = vunpack.c.h.b16 %v2525
          %v3135 = vunpack.c.l.b16 %v2526
          %v3136 = vunpack.c.h.b16 %v2526
          %v3137 = vunpack.c.l.b16 %v2527
          %v3138 = vunpack.c.h.b16 %v2527
          %v3139 = vunpack.c.l.b16 %v2528
          %v3140 = vunpack.c.h.b16 %v2528
          %v3141 = vunpack.c.l.b16 %v2529
          %v3142 = vunpack.c.h.b16 %v2529
          %v3143 = vunpack.c.l.b16 %v2530
          %v3144 = vunpack.c.h.b16 %v2530
          %v3145 = vunpack.c.l.b16 %v2531
          %v3146 = vunpack.c.h.b16 %v2531
          %v3147 = vunpack.c.l.b16 %v2532
          %v3148 = vunpack.c.h.b16 %v2532
          %v3149 = vunpack.c.l.b16 %v2533
          %v3150 = vunpack.c.h.b16 %v2533
          %v3151 = vunpack.c.l.b16 %v2534
          %v3152 = vunpack.c.h.b16 %v2534
          %v3153 = vunpack.c.l.b16 %v2535
          %v3154 = vunpack.c.h.b16 %v2535
          %v3155 = vunpack.c.l.b16 %v2536
          %v3156 = vunpack.c.h.b16 %v2536
          %v3157 = vunpack.c.l.b16 %v2537
          %v3158 = vunpack.c.h.b16 %v2537
          %v3159 = vunpack.c.l.b16 %v2538
          %v3160 = vunpack.c.h.b16 %v2538
          %v3161 = vunpack.c.l.b16 %v2539
          %v3162 = vunpack.c.h.b16 %v2539
          %v3163 = vunpack.c.l.b16 %v2540
          %v3164 = vunpack.c.h.b16 %v2540
          %v3165 = vunpack.c.l.b16 %v2541
          %v3166 = vunpack.c.h.b16 %v2541
          %v3167 = vunpack.c.l.b16 %v2542
          %v3168 = vunpack.c.h.b16 %v2542
          %v3169 = vunpack.c.l.b16 %v2543
          %v3170 = vunpack.c.h.b16 %v2543
          %v3171 = vunpack.c.l.b16 %v2544
          %v3172 = vunpack.c.h.b16 %v2544
          %v3173 = vunpack.c.l.b16 %v2545
          %v3174 = vunpack.c.h.b16 %v2545
          %v3175 = vunpack.c.l.b16 %v2546
          %v3176 = vunpack.c.h.b16 %v2546
          %v3177 = vunpack.c.l.b16 %v2547
          %v3178 = vunpack.c.h.b16 %v2547
          %v3179 = vunpack.c.l.b16 %v2548
          %v3180 = vunpack.c.h.b16 %v2548
          %v3181 = vunpack.c.l.b16 %v2549
          %v3182 = vunpack.c.h.b16 %v2549
          %v3183 = vunpack.c.l.b16 %v2550
          %v3184 = vunpack.c.h.b16 %v2550
          %v3185 = vunpack.c.l.b16 %v2551
          %v3186 = vunpack.c.h.b16 %v2551
          %v3187 = vunpack.c.l.b16 %v2552
          %v3188 = vunpack.c.h.b16 %v2552
          %v3189 = vunpack.c.l.b16 %v2553
          %v3190 = vunpack.c.h.b16 %v2553
          %v3191 = vunpack.c.l.b16 %v2554
          %v3192 = vunpack.c.h.b16 %v2554
          %v3193 = vunpack.c.l.b16 %v2555
          %v3194 = vunpack.c.h.b16 %v2555
          %v3195 = vunpack.c.l.b16 %v2556
          %v3196 = vunpack.c.h.b16 %v2556
          %v3197 = vunpack.c.l.b16 %v2557
          %v3198 = vunpack.c.h.b16 %v2557
          %v3199 = vunpack.c.l.b16 %v2558
          %v3200 = vunpack.c.h.b16 %v2558
          %v3201 = vunpack.c.l.b16 %v2559
          %v3202 = vunpack.c.h.b16 %v2559
          %v3203 = vunpack.c.l.b16 %v2560
          %v3204 = vunpack.c.h.b16 %v2560
          %v3205 = vunpack.c.l.b16 %v2561
          %v3206 = vunpack.c.h.b16 %v2561
          %v3207 = vunpack.c.l.b16 %v2562
          %v3208 = vunpack.c.h.b16 %v2562
          %v3209 = vunpack.c.l.b16 %v2563
          %v3210 = vunpack.c.h.b16 %v2563
          %v3211 = vunpack.c.l.b16 %v2564
          %v3212 = vunpack.c.h.b16 %v2564
          %v3213 = vunpack.c.l.b16 %v2565
          %v3214 = vunpack.c.h.b16 %v2565
          %v3215 = vunpack.c.l.b16 %v2566
          %v3216 = vunpack.c.h.b16 %v2566
          %v3217 = vunpack.c.l.b16 %v2567
          %v3218 = vunpack.c.h.b16 %v2567
          %v3219 = vunpack.c.l.b16 %v2568
          %v3220 = vunpack.c.h.b16 %v2568
          %v3221 = vunpack.c.l.b16 %v2569
          %v3222 = vunpack.c.h.b16 %v2569
          %v3223 = vunpack.c.l.b16 %v2570
          %v3224 = vunpack.c.h.b16 %v2570
          %v3225 = vunpack.c.l.b16 %v2571
          %v3226 = vunpack.c.h.b16 %v2571
          %v3227 = vunpack.c.l.b16 %v2572
          %v3228 = vunpack.c.h.b16 %v2572
          %v3229 = vunpack.c.l.b16 %v2573
          %v3230 = vunpack.c.h.b16 %v2573
          %v3231 = vunpack.c.l.b16 %v2574
          %v3232 = vunpack.c.h.b16 %v2574
          %v3233 = vunpack.c.l.b16 %v2575
          %v3234 = vunpack.c.h.b16 %v2575
          %v3235 = vunpack.c.l.b16 %v2576
          %v3236 = vunpack.c.h.b16 %v2576
          %v3237 = vunpack.c.l.b16 %v2577
          %v3238 = vunpack.c.h.b16 %v2577
          %v3239 = vunpack.c.l.b16 %v2578
          %v3240 = vunpack.c.h.b16 %v2578
          %v3241 = vunpack.c.l.b16 %v2579
          %v3242 = vunpack.c.h.b16 %v2579
          %v3243 = vunpack.c.l.b16 %v2580
          %v3244 = vunpack.c.h.b16 %v2580
          %v3245 = vunpack.c.l.b16 %v2581
          %v3246 = vunpack.c.h.b16 %v2581
          %v3247 = vunpack.c.l.b16 %v2582
          %v3248 = vunpack.c.h.b16 %v2582
          %v3249 = vunpack.c.l.b16 %v2583
          %v3250 = vunpack.c.h.b16 %v2583
          %v3251 = vunpack.c.l.b16 %v2584
          %v3252 = vunpack.c.h.b16 %v2584
          %v3253 = vunpack.c.l.b16 %v2585
          %v3254 = vunpack.c.h.b16 %v2585
          %v3255 = vunpack.c.l.b16 %v2586
          %v3256 = vunpack.c.h.b16 %v2586
          %v3257 = vunpack.c.l.b16 %v2587
          %v3258 = vunpack.c.h.b16 %v2587
          %v3259 = vunpack.c.l.b16 %v2588
          %v3260 = vunpack.c.h.b16 %v2588
          %v3261 = vunpack.c.l.b16 %v2589
          %v3262 = vunpack.c.h.b16 %v2589
          %v3263 = vunpack.c.l.b16 %v2590
          %v3264 = vunpack.c.h.b16 %v2590
          %v3265 = vunpack.c.l.b16 %v2591
          %v3266 = vunpack.c.h.b16 %v2591
          %v3267 = vunpack.c.l.b16 %v2592
          %v3268 = vunpack.c.h.b16 %v2592
          %v3269 = vunpack.c.l.b16 %v2593
          %v3270 = vunpack.c.h.b16 %v2593
          %v3271 = vunpack.c.l.b16 %v2594
          %v3272 = vunpack.c.h.b16 %v2594
          %v3273 = vunpack.c.l.b16 %v2595
          %v3274 = vunpack.c.h.b16 %v2595
          %v3275 = vunpack.c.l.b16 %v2596
          %v3276 = vunpack.c.h.b16 %v2596
          %v3277 = vunpack.c.l.b16 %v2597
          %v3278 = vunpack.c.h.b16 %v2597
          %v3279 = vunpack.c.l.b16 %v2598
          %v3280 = vunpack.c.h.b16 %v2598
          %v3281 = vunpack.c.l.b16 %v2599
          %v3282 = vunpack.c.h.b16 %v2599
          %v3283 = vunpack.c.l.b16 %v2600
          %v3284 = vunpack.c.h.b16 %v2600
          %v3285 = vunpack.c.l.b16 %v2601
          %v3286 = vunpack.c.h.b16 %v2601
          %v3287 = vunpack.c.l.b16 %v2602
          %v3288 = vunpack.c.h.b16 %v2602
          %v3289 = vunpack.c.l.b16 %v2603
          %v3290 = vunpack.c.h.b16 %v2603
          %v3291 = vunpack.c.l.b16 %v2604
          %v3292 = vunpack.c.h.b16 %v2604
          %v3293 = vunpack.c.l.b16 %v2605
          %v3294 = vunpack.c.h.b16 %v2605
          %v3295 = vunpack.c.l.b16 %v2606
          %v3296 = vunpack.c.h.b16 %v2606
          %v3297 = vunpack.c.l.b16 %v2607
          %v3298 = vunpack.c.h.b16 %v2607
          %v3299 = vunpack.c.l.b16 %v2608
          %v3300 = vunpack.c.h.b16 %v2608
          %v3301 = vunpack.c.l.b16 %v2609
          %v3302 = vunpack.c.h.b16 %v2609
          %v3303 = vunpack.c.l.b16 %v2610
          %v3304 = vunpack.c.h.b16 %v2610
          %v3305 = vunpack.c.l.b16 %v2611
          %v3306 = vunpack.c.h.b16 %v2611
          %v3307 = vunpack.c.l.b16 %v2612
          %v3308 = vunpack.c.h.b16 %v2612
          %v3309 = vunpack.c.l.b16 %v2613
          %v3310 = vunpack.c.h.b16 %v2613
          %v3311 = vunpack.c.l.b16 %v2614
          %v3312 = vunpack.c.h.b16 %v2614
          %v3313 = vunpack.c.l.b16 %v2615
          %v3314 = vunpack.c.h.b16 %v2615
          %v3315 = vunpack.c.l.b16 %v2616
          %v3316 = vunpack.c.h.b16 %v2616
          %v3317 = vunpack.c.l.b16 %v2617
          %v3318 = vunpack.c.h.b16 %v2617
          %v3319 = vunpack.c.l.b16 %v2618
          %v3320 = vunpack.c.h.b16 %v2618
          %v3321 = vunpack.c.l.b16 %v2619
          %v3322 = vunpack.c.h.b16 %v2619
          %v3323 = vunpack.c.l.b16 %v2620
          %v3324 = vunpack.c.h.b16 %v2620
          %v3325 = vunpack.c.l.b16 %v2621
          %v3326 = vunpack.c.h.b16 %v2621
          %v3327 = vunpack.c.l.b16 %v2622
          %v3328 = vunpack.c.h.b16 %v2622
          %v3329 = vunpack.c.l.b16 %v2623
          %v3330 = vunpack.c.h.b16 %v2623
          %v3331 = vunpack.c.l.b16 %v2624
          %v3332 = vunpack.c.h.b16 %v2624
          %v3333 = vunpack.c.l.b16 %v2625
          %v3334 = vunpack.c.h.b16 %v2625
          %v3335 = vunpack.c.l.b16 %v2626
          %v3336 = vunpack.c.h.b16 %v2626
          %v3337 = vunpack.c.l.b16 %v2627
          %v3338 = vunpack.c.h.b16 %v2627
          %v3339 = vunpack.c.l.b16 %v2628
          %v3340 = vunpack.c.h.b16 %v2628
          %v3341 = vunpack.c.l.b16 %v2629
          %v3342 = vunpack.c.h.b16 %v2629
          %v3343 = vunpack.c.l.b16 %v2630
          %v3344 = vunpack.c.h.b16 %v2630
          %v3345 = vunpack.c.l.b16 %v2631
          %v3346 = vunpack.c.h.b16 %v2631
          %v3347 = vunpack.c.l.b16 %v2632
          %v3348 = vunpack.c.h.b16 %v2632
          %v3349 = vunpack.c.l.b16 %v2633
          %v3350 = vunpack.c.h.b16 %v2633
          %v3351 = vunpack.c.l.b16 %v2634
          %v3352 = vunpack.c.h.b16 %v2634
          %v3353 = vunpack.c.l.b16 %v2635
          %v3354 = vunpack.c.h.b16 %v2635
          %v3355 = vunpack.c.l.b16 %v2636
          %v3356 = vunpack.c.h.b16 %v2636
          %v3357 = vunpack.c.l.b16 %v2637
          %v3358 = vunpack.c.h.b16 %v2637
          %v3359 = vunpack.c.l.b16 %v2638
          %v3360 = vunpack.c.h.b16 %v2638
          %v3361 = vunpack.c.l.b16 %v2639
          %v3362 = vunpack.c.h.b16 %v2639
          %v3363 = vunpack.c.l.b16 %v2640
          %v3364 = vunpack.c.h.b16 %v2640
          %v3365 = vunpack.c.l.b16 %v2641
          %v3366 = vunpack.c.h.b16 %v2641
          %v3367 = vunpack.c.l.b16 %v2642
          %v3368 = vunpack.c.h.b16 %v2642
          %v3369 = vunpack.c.l.b16 %v2643
          %v3370 = vunpack.c.h.b16 %v2643
          %v3371 = vunpack.c.l.b16 %v2644
          %v3372 = vunpack.c.h.b16 %v2644
          %v3373 = vunpack.c.l.b16 %v2645
          %v3374 = vunpack.c.h.b16 %v2645
          %v3375 = vunpack.c.l.b16 %v2646
          %v3376 = vunpack.c.h.b16 %v2646
          %v3377 = vunpack.c.l.b16 %v2647
          %v3378 = vunpack.c.h.b16 %v2647
          %v3379 = vunpack.c.l.b16 %v2648
          %v3380 = vunpack.c.h.b16 %v2648
          %v3381 = vunpack.c.l.b16 %v2649
          %v3382 = vunpack.c.h.b16 %v2649
          %v3383 = vunpack.c.l.b16 %v2650
          %v3384 = vunpack.c.h.b16 %v2650
          %v3385 = vunpack.c.l.b16 %v2651
          %v3386 = vunpack.c.h.b16 %v2651
          %v3387 = vunpack.c.l.b16 %v2652
          %v3388 = vunpack.c.h.b16 %v2652
          %v3389 = vunpack.c.l.b16 %v2653
          %v3390 = vunpack.c.h.b16 %v2653
          %v3391 = vunpack.c.l.b16 %v2654
          %v3392 = vunpack.c.h.b16 %v2654
          %v3393 = vunpack.c.l.b16 %v2655
          %v3394 = vunpack.c.h.b16 %v2655
          %v3395 = vunpack.c.l.b16 %v2656
          %v3396 = vunpack.c.h.b16 %v2656
          %v3397 = vunpack.c.l.b16 %v2657
          %v3398 = vunpack.c.h.b16 %v2657
          %v3399 = vunpack.c.l.b16 %v2658
          %v3400 = vunpack.c.h.b16 %v2658
          %v3401 = vunpack.c.l.b16 %v2659
          %v3402 = vunpack.c.h.b16 %v2659
          %v3403 = vunpack.c.l.b16 %v2660
          %v3404 = vunpack.c.h.b16 %v2660
          %v3405 = vunpack.c.l.b16 %v2661
          %v3406 = vunpack.c.h.b16 %v2661
          %v3407 = vunpack.c.l.b16 %v2662
          %v3408 = vunpack.c.h.b16 %v2662
          %v3409 = vunpack.c.l.b16 %v2663
          %v3410 = vunpack.c.h.b16 %v2663
          %v3411 = vunpack.c.l.b16 %v2664
          %v3412 = vunpack.c.h.b16 %v2664
          %v3413 = vunpack.c.l.b16 %v2665
          %v3414 = vunpack.c.h.b16 %v2665
          %v3415 = vunpack.c.l.b16 %v2666
          %v3416 = vunpack.c.h.b16 %v2666
          %v3417 = vunpack.c.l.b16 %v2667
          %v3418 = vunpack.c.h.b16 %v2667
          %v3419 = vunpack.c.l.b16 %v2668
          %v3420 = vunpack.c.h.b16 %v2668
          %v3421 = vunpack.c.l.b16 %v2669
          %v3422 = vunpack.c.h.b16 %v2669
          %v3423 = vunpack.c.l.b16 %v2670
          %v3424 = vunpack.c.h.b16 %v2670
          %v3425 = vunpack.c.l.b16 %v2671
          %v3426 = vunpack.c.h.b16 %v2671
          %v3427 = vunpack.c.l.b16 %v2672
          %v3428 = vunpack.c.h.b16 %v2672
          %v3429 = vunpack.c.l.b16 %v2673
          %v3430 = vunpack.c.h.b16 %v2673
          %v3431 = vunpack.c.l.b16 %v2674
          %v3432 = vunpack.c.h.b16 %v2674
          %v3433 = vunpack.c.l.b16 %v2675
          %v3434 = vunpack.c.h.b16 %v2675
          %v3435 = vunpack.c.l.b16 %v2676
          %v3436 = vunpack.c.h.b16 %v2676
          %v3437 = vunpack.c.l.b16 %v2677
          %v3438 = vunpack.c.h.b16 %v2677
          %v3439 = vunpack.c.l.b16 %v2678
          %v3440 = vunpack.c.h.b16 %v2678
          %v3441 = vunpack.c.l.b16 %v2679
          %v3442 = vunpack.c.h.b16 %v2679
          %v3443 = vunpack.c.l.b16 %v2680
          %v3444 = vunpack.c.h.b16 %v2680
          %v3445 = vunpack.c.l.b16 %v2681
          %v3446 = vunpack.c.h.b16 %v2681
          %v3447 = vunpack.c.l.b16 %v2682
          %v3448 = vunpack.c.h.b16 %v2682
          %v3449 = vunpack.c.l.b16 %v2683
          %v3450 = vunpack.c.h.b16 %v2683
          %v3451 = vunpack.c.l.b16 %v2684
          %v3452 = vunpack.c.h.b16 %v2684
          %v3453 = vunpack.c.l.b16 %v2685
          %v3454 = vunpack.c.h.b16 %v2685
          %v3455 = vpack.c.b16 %v2947, %v2943
          %v3456 = vpack.c.b16 %v2948, %v2944
          %v3457 = vpack.c.b16 %v2949, %v2945
          %v3458 = vpack.c.b16 %v2950, %v2946
          %v3459 = vpack.c.b16 %v2955, %v2951
          %v3460 = vpack.c.b16 %v2956, %v2952
          %v3461 = vpack.c.b16 %v2957, %v2953
          %v3462 = vpack.c.b16 %v2958, %v2954
          %v3463 = vpack.c.b16 %v2963, %v2959
          %v3464 = vpack.c.b16 %v2964, %v2960
          %v3465 = vpack.c.b16 %v2965, %v2961
          %v3466 = vpack.c.b16 %v2966, %v2962
          %v3467 = vpack.c.b16 %v2971, %v2967
          %v3468 = vpack.c.b16 %v2972, %v2968
          %v3469 = vpack.c.b16 %v2973, %v2969
          %v3470 = vpack.c.b16 %v2974, %v2970
          %v3471 = vpack.c.b16 %v2979, %v2975
          %v3472 = vpack.c.b16 %v2980, %v2976
          %v3473 = vpack.c.b16 %v2981, %v2977
          %v3474 = vpack.c.b16 %v2982, %v2978
          %v3475 = vpack.c.b16 %v2987, %v2983
          %v3476 = vpack.c.b16 %v2988, %v2984
          %v3477 = vpack.c.b16 %v2989, %v2985
          %v3478 = vpack.c.b16 %v2990, %v2986
          %v3479 = vpack.c.b16 %v2995, %v2991
          %v3480 = vpack.c.b16 %v2996, %v2992
          %v3481 = vpack.c.b16 %v2997, %v2993
          %v3482 = vpack.c.b16 %v2998, %v2994
          %v3483 = vpack.c.b16 %v3003, %v2999
          %v3484 = vpack.c.b16 %v3004, %v3000
          %v3485 = vpack.c.b16 %v3005, %v3001
          %v3486 = vpack.c.b16 %v3006, %v3002
          %v3487 = vpack.c.b16 %v3011, %v3007
          %v3488 = vpack.c.b16 %v3012, %v3008
          %v3489 = vpack.c.b16 %v3013, %v3009
          %v3490 = vpack.c.b16 %v3014, %v3010
          %v3491 = vpack.c.b16 %v3019, %v3015
          %v3492 = vpack.c.b16 %v3020, %v3016
          %v3493 = vpack.c.b16 %v3021, %v3017
          %v3494 = vpack.c.b16 %v3022, %v3018
          %v3495 = vpack.c.b16 %v3027, %v3023
          %v3496 = vpack.c.b16 %v3028, %v3024
          %v3497 = vpack.c.b16 %v3029, %v3025
          %v3498 = vpack.c.b16 %v3030, %v3026
          %v3499 = vpack.c.b16 %v3035, %v3031
          %v3500 = vpack.c.b16 %v3036, %v3032
          %v3501 = vpack.c.b16 %v3037, %v3033
          %v3502 = vpack.c.b16 %v3038, %v3034
          %v3503 = vpack.c.b16 %v3043, %v3039
          %v3504 = vpack.c.b16 %v3044, %v3040
          %v3505 = vpack.c.b16 %v3045, %v3041
          %v3506 = vpack.c.b16 %v3046, %v3042
          %v3507 = vpack.c.b16 %v3051, %v3047
          %v3508 = vpack.c.b16 %v3052, %v3048
          %v3509 = vpack.c.b16 %v3053, %v3049
          %v3510 = vpack.c.b16 %v3054, %v3050
          %v3511 = vpack.c.b16 %v3059, %v3055
          %v3512 = vpack.c.b16 %v3060, %v3056
          %v3513 = vpack.c.b16 %v3061, %v3057
          %v3514 = vpack.c.b16 %v3062, %v3058
          %v3515 = vpack.c.b16 %v3067, %v3063
          %v3516 = vpack.c.b16 %v3068, %v3064
          %v3517 = vpack.c.b16 %v3069, %v3065
          %v3518 = vpack.c.b16 %v3070, %v3066
          %v3519 = vpack.c.b16 %v3075, %v3071
          %v3520 = vpack.c.b16 %v3076, %v3072
          %v3521 = vpack.c.b16 %v3077, %v3073
          %v3522 = vpack.c.b16 %v3078, %v3074
          %v3523 = vpack.c.b16 %v3083, %v3079
          %v3524 = vpack.c.b16 %v3084, %v3080
          %v3525 = vpack.c.b16 %v3085, %v3081
          %v3526 = vpack.c.b16 %v3086, %v3082
          %v3527 = vpack.c.b16 %v3091, %v3087
          %v3528 = vpack.c.b16 %v3092, %v3088
          %v3529 = vpack.c.b16 %v3093, %v3089
          %v3530 = vpack.c.b16 %v3094, %v3090
          %v3531 = vpack.c.b16 %v3099, %v3095
          %v3532 = vpack.c.b16 %v3100, %v3096
          %v3533 = vpack.c.b16 %v3101, %v3097
          %v3534 = vpack.c.b16 %v3102, %v3098
          %v3535 = vpack.c.b16 %v3107, %v3103
          %v3536 = vpack.c.b16 %v3108, %v3104
          %v3537 = vpack.c.b16 %v3109, %v3105
          %v3538 = vpack.c.b16 %v3110, %v3106
          %v3539 = vpack.c.b16 %v3115, %v3111
          %v3540 = vpack.c.b16 %v3116, %v3112
          %v3541 = vpack.c.b16 %v3117, %v3113
          %v3542 = vpack.c.b16 %v3118, %v3114
          %v3543 = vpack.c.b16 %v3123, %v3119
          %v3544 = vpack.c.b16 %v3124, %v3120
          %v3545 = vpack.c.b16 %v3125, %v3121
          %v3546 = vpack.c.b16 %v3126, %v3122
          %v3547 = vpack.c.b16 %v3131, %v3127
          %v3548 = vpack.c.b16 %v3132, %v3128
          %v3549 = vpack.c.b16 %v3133, %v3129
          %v3550 = vpack.c.b16 %v3134, %v3130
          %v3551 = vpack.c.b16 %v3139, %v3135
          %v3552 = vpack.c.b16 %v3140, %v3136
          %v3553 = vpack.c.b16 %v3141, %v3137
          %v3554 = vpack.c.b16 %v3142, %v3138
          %v3555 = vpack.c.b16 %v3147, %v3143
          %v3556 = vpack.c.b16 %v3148, %v3144
          %v3557 = vpack.c.b16 %v3149, %v3145
          %v3558 = vpack.c.b16 %v3150, %v3146
          %v3559 = vpack.c.b16 %v3155, %v3151
          %v3560 = vpack.c.b16 %v3156, %v3152
          %v3561 = vpack.c.b16 %v3157, %v3153
          %v3562 = vpack.c.b16 %v3158, %v3154
          %v3563 = vpack.c.b16 %v3163, %v3159
          %v3564 = vpack.c.b16 %v3164, %v3160
          %v3565 = vpack.c.b16 %v3165, %v3161
          %v3566 = vpack.c.b16 %v3166, %v3162
          %v3567 = vpack.c.b16 %v3171, %v3167
          %v3568 = vpack.c.b16 %v3172, %v3168
          %v3569 = vpack.c.b16 %v3173, %v3169
          %v3570 = vpack.c.b16 %v3174, %v3170
          %v3571 = vpack.c.b16 %v3179, %v3175
          %v3572 = vpack.c.b16 %v3180, %v3176
          %v3573 = vpack.c.b16 %v3181, %v3177
          %v3574 = vpack.c.b16 %v3182, %v3178
          %v3575 = vpack.c.b16 %v3187, %v3183
          %v3576 = vpack.c.b16 %v3188, %v3184
          %v3577 = vpack.c.b16 %v3189, %v3185
          %v3578 = vpack.c.b16 %v3190, %v3186
          %v3579 = vpack.c.b16 %v3195, %v3191
          %v3580 = vpack.c.b16 %v3196, %v3192
          %v3581 = vpack.c.b16 %v3197, %v3193
          %v3582 = vpack.c.b16 %v3198, %v3194
          %v3583 = vpack.c.b16 %v3203, %v3199
          %v3584 = vpack.c.b16 %v3204, %v3200
          %v3585 = vpack.c.b16 %v3205, %v3201
          %v3586 = vpack.c.b16 %v3206, %v3202
          %v3587 = vpack.c.b16 %v3211, %v3207
          %v3588 = vpack.c.b16 %v3212, %v3208
          %v3589 = vpack.c.b16 %v3213, %v3209
          %v3590 = vpack.c.b16 %v3214, %v3210
          %v3591 = vpack.c.b16 %v3219, %v3215
          %v3592 = vpack.c.b16 %v3220, %v3216
          %v3593 = vpack.c.b16 %v3221, %v3217
          %v3594 = vpack.c.b16 %v3222, %v3218
          %v3595 = vpack.c.b16 %v3227, %v3223
          %v3596 = vpack.c.b16 %v3228, %v3224
          %v3597 = vpack.c.b16 %v3229, %v3225
          %v3598 = vpack.c.b16 %v3230, %v3226
          %v3599 = vpack.c.b16 %v3235, %v3231
          %v3600 = vpack.c.b16 %v3236, %v3232
          %v3601 = vpack.c.b16 %v3237, %v3233
          %v3602 = vpack.c.b16 %v3238, %v3234
          %v3603 = vpack.c.b16 %v3243, %v3239
          %v3604 = vpack.c.b16 %v3244, %v3240
          %v3605 = vpack.c.b16 %v3245, %v3241
          %v3606 = vpack.c.b16 %v3246, %v3242
          %v3607 = vpack.c.b16 %v3251, %v3247
          %v3608 = vpack.c.b16 %v3252, %v3248
          %v3609 = vpack.c.b16 %v3253, %v3249
          %v3610 = vpack.c.b16 %v3254, %v3250
          %v3611 = vpack.c.b16 %v3259, %v3255
          %v3612 = vpack.c.b16 %v3260, %v3256
          %v3613 = vpack.c.b16 %v3261, %v3257
          %v3614 = vpack.c.b16 %v3262, %v3258
          %v3615 = vpack.c.b16 %v3267, %v3263
          %v3616 = vpack.c.b16 %v3268, %v3264
          %v3617 = vpack.c.b16 %v3269, %v3265
          %v3618 = vpack.c.b16 %v3270, %v3266
          %v3619 = vpack.c.b16 %v3275, %v3271
          %v3620 = vpack.c.b16 %v3276, %v3272
          %v3621 = vpack.c.b16 %v3277, %v3273
          %v3622 = vpack.c.b16 %v3278, %v3274
          %v3623 = vpack.c.b16 %v3283, %v3279
          %v3624 = vpack.c.b16 %v3284, %v3280
          %v3625 = vpack.c.b16 %v3285, %v3281
          %v3626 = vpack.c.b16 %v3286, %v3282
          %v3627 = vpack.c.b16 %v3291, %v3287
          %v3628 = vpack.c.b16 %v3292, %v3288
          %v3629 = vpack.c.b16 %v3293, %v3289
          %v3630 = vpack.c.b16 %v3294, %v3290
          %v3631 = vpack.c.b16 %v3299, %v3295
          %v3632 = vpack.c.b16 %v3300, %v3296
          %v3633 = vpack.c.b16 %v3301, %v3297
          %v3634 = vpack.c.b16 %v3302, %v3298
          %v3635 = vpack.c.b16 %v3307, %v3303
          %v3636 = vpack.c.b16 %v3308, %v3304
          %v3637 = vpack.c.b16 %v3309, %v3305
          %v3638 = vpack.c.b16 %v3310, %v3306
          %v3639 = vpack.c.b16 %v3315, %v3311
          %v3640 = vpack.c.b16 %v3316, %v3312
          %v3641 = vpack.c.b16 %v3317, %v3313
          %v3642 = vpack.c.b16 %v3318, %v3314
          %v3643 = vpack.c.b16 %v3323, %v3319
          %v3644 = vpack.c.b16 %v3324, %v3320
          %v3645 = vpack.c.b16 %v3325, %v3321
          %v3646 = vpack.c.b16 %v3326, %v3322
          %v3647 = vpack.c.b16 %v3331, %v3327
          %v3648 = vpack.c.b16 %v3332, %v3328
          %v3649 = vpack.c.b16 %v3333, %v3329
          %v3650 = vpack.c.b16 %v3334, %v3330
          %v3651 = vpack.c.b16 %v3339, %v3335
          %v3652 = vpack.c.b16 %v3340, %v3336
          %v3653 = vpack.c.b16 %v3341, %v3337
          %v3654 = vpack.c.b16 %v3342, %v3338
          %v3655 = vpack.c.b16 %v3347, %v3343
          %v3656 = vpack.c.b16 %v3348, %v3344
          %v3657 = vpack.c.b16 %v3349, %v3345
          %v3658 = vpack.c.b16 %v3350, %v3346
          %v3659 = vpack.c.b16 %v3355, %v3351
          %v3660 = vpack.c.b16 %v3356, %v3352
          %v3661 = vpack.c.b16 %v3357, %v3353
          %v3662 = vpack.c.b16 %v3358, %v3354
          %v3663 = vpack.c.b16 %v3363, %v3359
          %v3664 = vpack.c.b16 %v3364, %v3360
          %v3665 = vpack.c.b16 %v3365, %v3361
          %v3666 = vpack.c.b16 %v3366, %v3362
          %v3667 = vpack.c.b16 %v3371, %v3367
          %v3668 = vpack.c.b16 %v3372, %v3368
          %v3669 = vpack.c.b16 %v3373, %v3369
          %v3670 = vpack.c.b16 %v3374, %v3370
          %v3671 = vpack.c.b16 %v3379, %v3375
          %v3672 = vpack.c.b16 %v3380, %v3376
          %v3673 = vpack.c.b16 %v3381, %v3377
          %v3674 = vpack.c.b16 %v3382, %v3378
          %v3675 = vpack.c.b16 %v3387, %v3383
          %v3676 = vpack.c.b16 %v3388, %v3384
          %v3677 = vpack.c.b16 %v3389, %v3385
          %v3678 = vpack.c.b16 %v3390, %v3386
          %v3679 = vpack.c.b16 %v3395, %v3391
          %v3680 = vpack.c.b16 %v3396, %v3392
          %v3681 = vpack.c.b16 %v3397, %v3393
          %v3682 = vpack.c.b16 %v3398, %v3394
          %v3683 = vpack.c.b16 %v3403, %v3399
          %v3684 = vpack.c.b16 %v3404, %v3400
          %v3685 = vpack.c.b16 %v3405, %v3401
          %v3686 = vpack.c.b16 %v3406, %v3402
          %v3687 = vpack.c.b16 %v3411, %v3407
          %v3688 = vpack.c.b16 %v3412, %v3408
          %v3689 = vpack.c.b16 %v3413, %v3409
          %v3690 = vpack.c.b16 %v3414, %v3410
          %v3691 = vpack.c.b16 %v3419, %v3415
          %v3692 = vpack.c.b16 %v3420, %v3416
          %v3693 = vpack.c.b16 %v3421, %v3417
          %v3694 = vpack.c.b16 %v3422, %v3418
          %v3695 = vpack.c.b16 %v3427, %v3423
          %v3696 = vpack.c.b16 %v3428, %v3424
          %v3697 = vpack.c.b16 %v3429, %v3425
          %v3698 = vpack.c.b16 %v3430, %v3426
          %v3699 = vpack.c.b16 %v3435, %v3431
          %v3700 = vpack.c.b16 %v3436, %v3432
          %v3701 = vpack.c.b16 %v3437, %v3433
          %v3702 = vpack.c.b16 %v3438, %v3434
          %v3703 = vpack.c.b16 %v3443, %v3439
          %v3704 = vpack.c.b16 %v3444, %v3440
          %v3705 = vpack.c.b16 %v3445, %v3441
          %v3706 = vpack.c.b16 %v3446, %v3442
          %v3707 = vpack.c.b16 %v3451, %v3447
          %v3708 = vpack.c.b16 %v3452, %v3448
          %v3709 = vpack.c.b16 %v3453, %v3449
          %v3710 = vpack.c.b16 %v3454, %v3450
          %v3968 = vlaneseq
          %v3969 = vshrl.u32 %v3968, 7
          %v3970 = vsub.s32 0, %v3969
          %v3971 = vrot.slane %v2686, %v3970
          %v3972 = vlaneseq
          %v3973 = vshrl.u32 %v3972, 7
          %v3974 = vsub.s32 1, %v3973
          %v3975 = vrot.slane %v2686, %v3974
          %v3976 = vlaneseq
          %v3977 = vshrl.u32 %v3976, 7
          %v3978 = vsub.s32 2, %v3977
          %v3979 = vrot.slane %v2686, %v3978
          %v3980 = vlaneseq
          %v3981 = vshrl.u32 %v3980, 7
          %v3982 = vsub.s32 3, %v3981
          %v3983 = vrot.slane %v2686, %v3982
          %3988 = vmatprep.subr.bf16.mxu0 %v3456
          %3989 = vmatpush1.bf16.msra.mxu0 %v3455
          %3990 = vmatprep.subr.bf16.mxu0 %v3460
          %3991 = vmatpush1.bf16.msra.mxu0 %v3459
          %3992 = vmatprep.subr.bf16.mxu0 %v3464
          %3993 = vmatpush1.bf16.msra.mxu0 %v3463
          %3994 = vmatprep.subr.bf16.mxu0 %v3468
          %3995 = vmatpush1.bf16.msra.mxu0 %v3467
          %3996 = vmatprep.subr.bf16.mxu0 %v3472
          %3997 = vmatpush1.bf16.msra.mxu0 %v3471
          %3998 = vmatprep.subr.bf16.mxu0 %v3476
          %3999 = vmatpush1.bf16.msra.mxu0 %v3475
          %4000 = vmatprep.subr.bf16.mxu0 %v3480
          %4001 = vmatpush1.bf16.msra.mxu0 %v3479
          %4002 = vmatprep.subr.bf16.mxu0 %v3484
          %4003 = vmatpush1.bf16.msra.mxu0 %v3483
          %4004 = vmatprep.subr.bf16.mxu0 %v3488
          %4005 = vmatpush1.bf16.msra.mxu0 %v3487
          %4006 = vmatprep.subr.bf16.mxu0 %v3492
          %4007 = vmatpush1.bf16.msra.mxu0 %v3491
          %4008 = vmatprep.subr.bf16.mxu0 %v3496
          %4009 = vmatpush1.bf16.msra.mxu0 %v3495
          %4010 = vmatprep.subr.bf16.mxu0 %v3500
          %4011 = vmatpush1.bf16.msra.mxu0 %v3499
          %4012 = vmatprep.subr.bf16.mxu0 %v3504
          %4013 = vmatpush1.bf16.msra.mxu0 %v3503
          %4014 = vmatprep.subr.bf16.mxu0 %v3508
          %4015 = vmatpush1.bf16.msra.mxu0 %v3507
          %4016 = vmatprep.subr.bf16.mxu0 %v3512
          %4017 = vmatpush1.bf16.msra.mxu0 %v3511
          %4018 = vmatprep.subr.bf16.mxu0 %v3516
          %4019 = vmatpush1.bf16.msra.mxu0 %v3515
          %4020 = vmatprep.mubr.bf16.mxu0 %v2423
          %4021 = vmatmul.mubr.bf16.gmra.mrb[0].mxu0 %v2422
          %v4022 = vpop.f32.mrb[0].mxu0
          %v4023 = vadd.f32 %v3971, %v4022
          %v4024 = vpop.f32.mrb[0].mxu0
          %v4025 = vadd.f32 %v3975, %v4024
          %v4026 = vpop.f32.mrb[0].mxu0
          %v4027 = vpop.f32.mrb[0].mxu0
          %4028 = vdwg.mxu0
          %4029 = vmatprep.subr.bf16.mxu0 %v3520
          %4030 = vmatpush1.bf16.msra.mxu0 %v3519
          %4031 = vmatprep.subr.bf16.mxu0 %v3524
          %4032 = vmatpush1.bf16.msra.mxu0 %v3523
          %4033 = vmatprep.subr.bf16.mxu0 %v3528
          %4034 = vmatpush1.bf16.msra.mxu0 %v3527
          %4035 = vmatprep.subr.bf16.mxu0 %v3532
          %4036 = vmatpush1.bf16.msra.mxu0 %v3531
          %4037 = vmatprep.subr.bf16.mxu0 %v3536
          %4038 = vmatpush1.bf16.msra.mxu0 %v3535
          %4039 = vmatprep.subr.bf16.mxu0 %v3540
          %4040 = vmatpush1.bf16.msra.mxu0 %v3539
          %4041 = vmatprep.subr.bf16.mxu0 %v3544
          %4042 = vmatpush1.bf16.msra.mxu0 %v3543
          %4043 = vmatprep.subr.bf16.mxu0 %v3548
          %4044 = vmatpush1.bf16.msra.mxu0 %v3547
          %4045 = vmatprep.subr.bf16.mxu0 %v3552
          %4046 = vmatpush1.bf16.msra.mxu0 %v3551
          %4047 = vmatprep.subr.bf16.mxu0 %v3556
          %4048 = vmatpush1.bf16.msra.mxu0 %v3555
          %4049 = vmatprep.subr.bf16.mxu0 %v3560
          %4050 = vmatpush1.bf16.msra.mxu0 %v3559
          %4051 = vmatprep.subr.bf16.mxu0 %v3564
          %4052 = vmatpush1.bf16.msra.mxu0 %v3563
          %4053 = vmatprep.subr.bf16.mxu0 %v3568
          %4054 = vmatpush1.bf16.msra.mxu0 %v3567
          %4055 = vmatprep.subr.bf16.mxu0 %v3572
          %4056 = vmatpush1.bf16.msra.mxu0 %v3571
          %4057 = vmatprep.subr.bf16.mxu0 %v3576
          %4058 = vmatpush1.bf16.msra.mxu0 %v3575
          %4059 = vmatprep.subr.bf16.mxu0 %v3580
          %4060 = vmatpush1.bf16.msra.mxu0 %v3579
          %4061 = vmatprep.mubr.bf16.mxu0 %v2425
          %4062 = vmatmul.mubr.bf16.gmra.mrb[0].mxu0 %v2424
          %v4063 = vpop.f32.mrb[0].mxu0
          %v4064 = vadd.f32 %v4023, %v4063
          %v4065 = vpop.f32.mrb[0].mxu0
          %v4066 = vadd.f32 %v4025, %v4065
          %v4067 = vpop.f32.mrb[0].mxu0
          %v4068 = vpop.f32.mrb[0].mxu0
          %4069 = vdwg.mxu0
          %4070 = vmatprep.subr.bf16.mxu0 %v3584
          %4071 = vmatpush1.bf16.msra.mxu0 %v3583
          %4072 = vmatprep.subr.bf16.mxu0 %v3588
          %4073 = vmatpush1.bf16.msra.mxu0 %v3587
          %4074 = vmatprep.subr.bf16.mxu0 %v3592
          %4075 = vmatpush1.bf16.msra.mxu0 %v3591
          %4076 = vmatprep.subr.bf16.mxu0 %v3596
          %4077 = vmatpush1.bf16.msra.mxu0 %v3595
          %4078 = vmatprep.subr.bf16.mxu0 %v3600
          %4079 = vmatpush1.bf16.msra.mxu0 %v3599
          %4080 = vmatprep.subr.bf16.mxu0 %v3604
          %4081 = vmatpush1.bf16.msra.mxu0 %v3603
          %4082 = vmatprep.subr.bf16.mxu0 %v3608
          %4083 = vmatpush1.bf16.msra.mxu0 %v3607
          %4084 = vmatprep.subr.bf16.mxu0 %v3612
          %4085 = vmatpush1.bf16.msra.mxu0 %v3611
          %4086 = vmatprep.subr.bf16.mxu0 %v3616
          %4087 = vmatpush1.bf16.msra.mxu0 %v3615
          %4088 = vmatprep.subr.bf16.mxu0 %v3620
          %4089 = vmatpush1.bf16.msra.mxu0 %v3619
          %4090 = vmatprep.subr.bf16.mxu0 %v3624
          %4091 = vmatpush1.bf16.msra.mxu0 %v3623
          %4092 = vmatprep.subr.bf16.mxu0 %v3628
          %4093 = vmatpush1.bf16.msra.mxu0 %v3627
          %4094 = vmatprep.subr.bf16.mxu0 %v3632
          %4095 = vmatpush1.bf16.msra.mxu0 %v3631
          %4096 = vmatprep.subr.bf16.mxu0 %v3636
          %4097 = vmatpush1.bf16.msra.mxu0 %v3635
          %4098 = vmatprep.subr.bf16.mxu0 %v3640
          %4099 = vmatpush1.bf16.msra.mxu0 %v3639
          %4100 = vmatprep.subr.bf16.mxu0 %v3644
          %4101 = vmatpush1.bf16.msra.mxu0 %v3643
          %4102 = vmatprep.mubr.bf16.mxu0 %v2427
          %4103 = vmatmul.mubr.bf16.gmra.mrb[0].mxu0 %v2426
          %v4104 = vpop.f32.mrb[0].mxu0
          %v4105 = vadd.f32 %v4064, %v4104
          %v4106 = vpop.f32.mrb[0].mxu0
          %v4107 = vadd.f32 %v4066, %v4106
          %v4108 = vpop.f32.mrb[0].mxu0
          %v4109 = vpop.f32.mrb[0].mxu0
          %4110 = vdwg.mxu0
          %4111 = vmatprep.subr.bf16.mxu0 %v3648
          %4112 = vmatpush1.bf16.msra.mxu0 %v3647
          %4113 = vmatprep.subr.bf16.mxu0 %v3652
          %4114 = vmatpush1.bf16.msra.mxu0 %v3651
          %4115 = vmatprep.subr.bf16.mxu0 %v3656
          %4116 = vmatpush1.bf16.msra.mxu0 %v3655
          %4117 = vmatprep.subr.bf16.mxu0 %v3660
          %4118 = vmatpush1.bf16.msra.mxu0 %v3659
          %4119 = vmatprep.subr.bf16.mxu0 %v3664
          %4120 = vmatpush1.bf16.msra.mxu0 %v3663
          %4121 = vmatprep.subr.bf16.mxu0 %v3668
          %4122 = vmatpush1.bf16.msra.mxu0 %v3667
          %4123 = vmatprep.subr.bf16.mxu0 %v3672
          %4124 = vmatpush1.bf16.msra.mxu0 %v3671
          %4125 = vmatprep.subr.bf16.mxu0 %v3676
          %4126 = vmatpush1.bf16.msra.mxu0 %v3675
          %4127 = vmatprep.subr.bf16.mxu0 %v3680
          %4128 = vmatpush1.bf16.msra.mxu0 %v3679
          %4129 = vmatprep.subr.bf16.mxu0 %v3684
          %4130 = vmatpush1.bf16.msra.mxu0 %v3683
          %4131 = vmatprep.subr.bf16.mxu0 %v3688
          %4132 = vmatpush1.bf16.msra.mxu0 %v3687
          %4133 = vmatprep.subr.bf16.mxu0 %v3692
          %4134 = vmatpush1.bf16.msra.mxu0 %v3691
          %4135 = vmatprep.subr.bf16.mxu0 %v3696
          %4136 = vmatpush1.bf16.msra.mxu0 %v3695
          %4137 = vmatprep.subr.bf16.mxu0 %v3700
          %4138 = vmatpush1.bf16.msra.mxu0 %v3699
          %4139 = vmatprep.subr.bf16.mxu0 %v3704
          %4140 = vmatpush1.bf16.msra.mxu0 %v3703
          %4141 = vmatprep.subr.bf16.mxu0 %v3708
          %4142 = vmatpush1.bf16.msra.mxu0 %v3707
          %4143 = vmatprep.mubr.bf16.mxu0 %v2429
          %4144 = vmatmul.mubr.bf16.gmra.mrb[0].mxu0 %v2428
          %v4145 = vpop.f32.mrb[0].mxu0
          %v4146 = vadd.f32 %v4105, %v4145
          %v4147 = vpop.f32.mrb[0].mxu0
          %v4148 = vadd.f32 %v4107, %v4147
          %v4149 = vpop.f32.mrb[0].mxu0
          %v4150 = vpop.f32.mrb[0].mxu0
          %4151 = vdwg.mxu0
          %4152 = vmatprep.subr.bf16.mxu0 %v3458
          %4153 = vmatpush1.bf16.msra.mxu0 %v3457
          %4154 = vmatprep.subr.bf16.mxu0 %v3462
          %4155 = vmatpush1.bf16.msra.mxu0 %v3461
          %4156 = vmatprep.subr.bf16.mxu0 %v3466
          %4157 = vmatpush1.bf16.msra.mxu0 %v3465
          %4158 = vmatprep.subr.bf16.mxu0 %v3470
          %4159 = vmatpush1.bf16.msra.mxu0 %v3469
          %4160 = vmatprep.subr.bf16.mxu0 %v3474
          %4161 = vmatpush1.bf16.msra.mxu0 %v3473
          %4162 = vmatprep.subr.bf16.mxu0 %v3478
          %4163 = vmatpush1.bf16.msra.mxu0 %v3477
          %4164 = vmatprep.subr.bf16.mxu0 %v3482
          %4165 = vmatpush1.bf16.msra.mxu0 %v3481
          %4166 = vmatprep.subr.bf16.mxu0 %v3486
          %4167 = vmatpush1.bf16.msra.mxu0 %v3485
          %4168 = vmatprep.subr.bf16.mxu0 %v3490
          %4169 = vmatpush1.bf16.msra.mxu0 %v3489
          %4170 = vmatprep.subr.bf16.mxu0 %v3494
          %4171 = vmatpush1.bf16.msra.mxu0 %v3493
          %4172 = vmatprep.subr.bf16.mxu0 %v3498
          %4173 = vmatpush1.bf16.msra.mxu0 %v3497
          %4174 = vmatprep.subr.bf16.mxu0 %v3502
          %4175 = vmatpush1.bf16.msra.mxu0 %v3501
          %4176 = vmatprep.subr.bf16.mxu0 %v3506
          %4177 = vmatpush1.bf16.msra.mxu0 %v3505
          %4178 = vmatprep.subr.bf16.mxu0 %v3510
          %4179 = vmatpush1.bf16.msra.mxu0 %v3509
          %4180 = vmatprep.subr.bf16.mxu0 %v3514
          %4181 = vmatpush1.bf16.msra.mxu0 %v3513
          %4182 = vmatprep.subr.bf16.mxu0 %v3518
          %4183 = vmatpush1.bf16.msra.mxu0 %v3517
          %4184 = vmatprep.mubr.bf16.mxu0 %v2423
          %4185 = vmatmul.mubr.bf16.gmra.mrb[0].mxu0 %v2422
          %v4186 = vpop.f32.mrb[0].mxu0
          %v4187 = vadd.f32 %v3979, %v4186
          %v4188 = vpop.f32.mrb[0].mxu0
          %v4189 = vadd.f32 %v3983, %v4188
          %v4190 = vpop.f32.mrb[0].mxu0
          %v4191 = vpop.f32.mrb[0].mxu0
          %4192 = vdwg.mxu0
          %4193 = vmatprep.subr.bf16.mxu0 %v3522
          %4194 = vmatpush1.bf16.msra.mxu0 %v3521
          %4195 = vmatprep.subr.bf16.mxu0 %v3526
          %4196 = vmatpush1.bf16.msra.mxu0 %v3525
          %4197 = vmatprep.subr.bf16.mxu0 %v3530
          %4198 = vmatpush1.bf16.msra.mxu0 %v3529
          %4199 = vmatprep.subr.bf16.mxu0 %v3534
          %4200 = vmatpush1.bf16.msra.mxu0 %v3533
          %4201 = vmatprep.subr.bf16.mxu0 %v3538
          %4202 = vmatpush1.bf16.msra.mxu0 %v3537
          %4203 = vmatprep.subr.bf16.mxu0 %v3542
          %4204 = vmatpush1.bf16.msra.mxu0 %v3541
          %4205 = vmatprep.subr.bf16.mxu0 %v3546
          %4206 = vmatpush1.bf16.msra.mxu0 %v3545
          %4207 = vmatprep.subr.bf16.mxu0 %v3550
          %4208 = vmatpush1.bf16.msra.mxu0 %v3549
          %4209 = vmatprep.subr.bf16.mxu0 %v3554
          %4210 = vmatpush1.bf16.msra.mxu0 %v3553
          %4211 = vmatprep.subr.bf16.mxu0 %v3558
          %4212 = vmatpush1.bf16.msra.mxu0 %v3557
          %4213 = vmatprep.subr.bf16.mxu0 %v3562
          %4214 = vmatpush1.bf16.msra.mxu0 %v3561
          %4215 = vmatprep.subr.bf16.mxu0 %v3566
          %4216 = vmatpush1.bf16.msra.mxu0 %v3565
          %4217 = vmatprep.subr.bf16.mxu0 %v3570
          %4218 = vmatpush1.bf16.msra.mxu0 %v3569
          %4219 = vmatprep.subr.bf16.mxu0 %v3574
          %4220 = vmatpush1.bf16.msra.mxu0 %v3573
          %4221 = vmatprep.subr.bf16.mxu0 %v3578
          %4222 = vmatpush1.bf16.msra.mxu0 %v3577
          %4223 = vmatprep.subr.bf16.mxu0 %v3582
          %4224 = vmatpush1.bf16.msra.mxu0 %v3581
          %4225 = vmatprep.mubr.bf16.mxu0 %v2425
          %4226 = vmatmul.mubr.bf16.gmra.mrb[0].mxu0 %v2424
          %v4227 = vpop.f32.mrb[0].mxu0
          %v4228 = vadd.f32 %v4187, %v4227
          %v4229 = vpop.f32.mrb[0].mxu0
          %v4230 = vadd.f32 %v4189, %v4229
          %v4231 = vpop.f32.mrb[0].mxu0
          %v4232 = vpop.f32.mrb[0].mxu0
          %4233 = vdwg.mxu0
          %4234 = vmatprep.subr.bf16.mxu0 %v3586
          %4235 = vmatpush1.bf16.msra.mxu0 %v3585
          %4236 = vmatprep.subr.bf16.mxu0 %v3590
          %4237 = vmatpush1.bf16.msra.mxu0 %v3589
          %4238 = vmatprep.subr.bf16.mxu0 %v3594
          %4239 = vmatpush1.bf16.msra.mxu0 %v3593
          %4240 = vmatprep.subr.bf16.mxu0 %v3598
          %4241 = vmatpush1.bf16.msra.mxu0 %v3597
          %4242 = vmatprep.subr.bf16.mxu0 %v3602
          %4243 = vmatpush1.bf16.msra.mxu0 %v3601
          %4244 = vmatprep.subr.bf16.mxu0 %v3606
          %4245 = vmatpush1.bf16.msra.mxu0 %v3605
          %4246 = vmatprep.subr.bf16.mxu0 %v3610
          %4247 = vmatpush1.bf16.msra.mxu0 %v3609
          %4248 = vmatprep.subr.bf16.mxu0 %v3614
          %4249 = vmatpush1.bf16.msra.mxu0 %v3613
          %4250 = vmatprep.subr.bf16.mxu0 %v3618
          %4251 = vmatpush1.bf16.msra.mxu0 %v3617
          %4252 = vmatprep.subr.bf16.mxu0 %v3622
          %4253 = vmatpush1.bf16.msra.mxu0 %v3621
          %4254 = vmatprep.subr.bf16.mxu0 %v3626
          %4255 = vmatpush1.bf16.msra.mxu0 %v3625
          %4256 = vmatprep.subr.bf16.mxu0 %v3630
          %4257 = vmatpush1.bf16.msra.mxu0 %v3629
          %4258 = vmatprep.subr.bf16.mxu0 %v3634
          %4259 = vmatpush1.bf16.msra.mxu0 %v3633
          %4260 = vmatprep.subr.bf16.mxu0 %v3638
          %4261 = vmatpush1.bf16.msra.mxu0 %v3637
          %4262 = vmatprep.subr.bf16.mxu0 %v3642
          %4263 = vmatpush1.bf16.msra.mxu0 %v3641
          %4264 = vmatprep.subr.bf16.mxu0 %v3646
          %4265 = vmatpush1.bf16.msra.mxu0 %v3645
          %4266 = vmatprep.mubr.bf16.mxu0 %v2427
          %4267 = vmatmul.mubr.bf16.gmra.mrb[0].mxu0 %v2426
          %v4268 = vpop.f32.mrb[0].mxu0
          %v4269 = vadd.f32 %v4228, %v4268
          %v4270 = vpop.f32.mrb[0].mxu0
          %v4271 = vadd.f32 %v4230, %v4270
          %v4272 = vpop.f32.mrb[0].mxu0
          %v4273 = vpop.f32.mrb[0].mxu0
          %4274 = vdwg.mxu0
          %4275 = vmatprep.subr.bf16.mxu0 %v3650
          %4276 = vmatpush1.bf16.msra.mxu0 %v3649
          %4277 = vmatprep.subr.bf16.mxu0 %v3654
          %4278 = vmatpush1.bf16.msra.mxu0 %v3653
          %4279 = vmatprep.subr.bf16.mxu0 %v3658
          %4280 = vmatpush1.bf16.msra.mxu0 %v3657
          %4281 = vmatprep.subr.bf16.mxu0 %v3662
          %4282 = vmatpush1.bf16.msra.mxu0 %v3661
          %4283 = vmatprep.subr.bf16.mxu0 %v3666
          %4284 = vmatpush1.bf16.msra.mxu0 %v3665
          %4285 = vmatprep.subr.bf16.mxu0 %v3670
          %4286 = vmatpush1.bf16.msra.mxu0 %v3669
          %4287 = vmatprep.subr.bf16.mxu0 %v3674
          %4288 = vmatpush1.bf16.msra.mxu0 %v3673
          %4289 = vmatprep.subr.bf16.mxu0 %v3678
          %4290 = vmatpush1.bf16.msra.mxu0 %v3677
          %4291 = vmatprep.subr.bf16.mxu0 %v3682
          %4292 = vmatpush1.bf16.msra.mxu0 %v3681
          %4293 = vmatprep.subr.bf16.mxu0 %v3686
          %4294 = vmatpush1.bf16.msra.mxu0 %v3685
          %4295 = vmatprep.subr.bf16.mxu0 %v3690
          %4296 = vmatpush1.bf16.msra.mxu0 %v3689
          %4297 = vmatprep.subr.bf16.mxu0 %v3694
          %4298 = vmatpush1.bf16.msra.mxu0 %v3693
          %4299 = vmatprep.subr.bf16.mxu0 %v3698
          %4300 = vmatpush1.bf16.msra.mxu0 %v3697
          %4301 = vmatprep.subr.bf16.mxu0 %v3702
          %4302 = vmatpush1.bf16.msra.mxu0 %v3701
          %4303 = vmatprep.subr.bf16.mxu0 %v3706
          %4304 = vmatpush1.bf16.msra.mxu0 %v3705
          %4305 = vmatprep.subr.bf16.mxu0 %v3710
          %4306 = vmatpush1.bf16.msra.mxu0 %v3709
          %4307 = vmatprep.mubr.bf16.mxu0 %v2429
          %4308 = vmatmul.mubr.bf16.gmra.mrb[0].mxu0 %v2428
          %v4309 = vpop.f32.mrb[0].mxu0
          %v4310 = vadd.f32 %v4269, %v4309
          %v4311 = vpop.f32.mrb[0].mxu0
          %v4312 = vadd.f32 %v4271, %v4311
          %v4313 = vpop.f32.mrb[0].mxu0
          %v4314 = vpop.f32.mrb[0].mxu0
          %4315 = vdwg.mxu0
          %v4316 = vmax.f32 %v4146, 0.0
          %v4317 = vmax.f32 %v4148, 0.0
          %v4318 = vmax.f32 %v4310, 0.0
          %v4319 = vmax.f32 %v4312, 0.0
          %v4320 = vpack.c.bf16 %v4316, %v4316
          %v4321 = vpack.c.bf16 %v4317, %v4317
          %v4322 = vpack.c.bf16 %v4318, %v4318
          %v4323 = vpack.c.bf16 %v4319, %v4319
          %v4324 = vld [vmem:[#allocation14] sm:$0xff]
          %v4325 = vld [vmem:[#allocation14 + $0x8] sm:$0xff]
          %v4326 = vld [vmem:[#allocation14 + $0x10] sm:$0xff]
          %v4327 = vld [vmem:[#allocation14 + $0x18] sm:$0xff]
          %v4328 = vld [vmem:[#allocation14 + $0x20] sm:$0xff]
          %v4329 = vld [vmem:[#allocation14 + $0x28] sm:$0xff]
          %v4330 = vld [vmem:[#allocation14 + $0x30] sm:$0xff]
          %v4331 = vld [vmem:[#allocation14 + $0x38] sm:$0xff]
          %v4332 = vld [vmem:[#allocation14 + $0x40] sm:$0xff]
          %v4333 = vld [vmem:[#allocation14 + $0x48] sm:$0xff]
          %v4334 = vld [vmem:[#allocation14 + $0x50] sm:$0xff]
          %v4335 = vld [vmem:[#allocation14 + $0x58] sm:$0xff]
          %v4336 = vld [vmem:[#allocation14 + $0x60] sm:$0xff]
          %v4337 = vld [vmem:[#allocation14 + $0x68] sm:$0xff]
          %v4338 = vld [vmem:[#allocation14 + $0x70] sm:$0xff]
          %v4339 = vld [vmem:[#allocation14 + $0x78] sm:$0xff]
          %v4340 = vld [vmem:[#allocation14 + $0x80] sm:$0xff]
          %v4341 = vld [vmem:[#allocation14 + $0x88] sm:$0xff]
          %v4342 = vld [vmem:[#allocation14 + $0x90] sm:$0xff]
          %v4343 = vld [vmem:[#allocation14 + $0x98] sm:$0xff]
          %v4344 = vld [vmem:[#allocation14 + $0xa0] sm:$0xff]
          %v4345 = vld [vmem:[#allocation14 + $0xa8] sm:$0xff]
          %v4346 = vld [vmem:[#allocation14 + $0xb0] sm:$0xff]
          %v4347 = vld [vmem:[#allocation14 + $0xb8] sm:$0xff]
          %v4348 = vld [vmem:[#allocation14 + $0xc0] sm:$0xff]
          %v4349 = vld [vmem:[#allocation14 + $0xc8] sm:$0xff]
          %v4350 = vld [vmem:[#allocation14 + $0xd0] sm:$0xff]
          %v4351 = vld [vmem:[#allocation14 + $0xd8] sm:$0xff]
          %v4352 = vld [vmem:[#allocation14 + $0xe0] sm:$0xff]
          %v4353 = vld [vmem:[#allocation14 + $0xe8] sm:$0xff]
          %v4354 = vld [vmem:[#allocation14 + $0xf0] sm:$0xff]
          %v4355 = vld [vmem:[#allocation14 + $0xf8] sm:$0xff]
          %v4356 = vld [vmem:[#allocation14 + $0x100] sm:$0xff]
          %v4357 = vld [vmem:[#allocation14 + $0x108] sm:$0xff]
          %v4358 = vld [vmem:[#allocation14 + $0x110] sm:$0xff]
          %v4359 = vld [vmem:[#allocation14 + $0x118] sm:$0xff]
          %v4360 = vld [vmem:[#allocation14 + $0x120] sm:$0xff]
          %v4361 = vld [vmem:[#allocation14 + $0x128] sm:$0xff]
          %v4362 = vld [vmem:[#allocation14 + $0x130] sm:$0xff]
          %v4363 = vld [vmem:[#allocation14 + $0x138] sm:$0xff]
          %v4364 = vld [vmem:[#allocation14 + $0x140] sm:$0xff]
          %v4365 = vld [vmem:[#allocation14 + $0x148] sm:$0xff]
          %v4366 = vld [vmem:[#allocation14 + $0x150] sm:$0xff]
          %v4367 = vld [vmem:[#allocation14 + $0x158] sm:$0xff]
          %v4368 = vld [vmem:[#allocation14 + $0x160] sm:$0xff]
          %v4369 = vld [vmem:[#allocation14 + $0x168] sm:$0xff]
          %v4370 = vld [vmem:[#allocation14 + $0x170] sm:$0xff]
          %v4371 = vld [vmem:[#allocation14 + $0x178] sm:$0xff]
          %v4372 = vld [vmem:[#allocation14 + $0x180] sm:$0xff]
          %v4373 = vld [vmem:[#allocation14 + $0x188] sm:$0xff]
          %v4374 = vld [vmem:[#allocation14 + $0x190] sm:$0xff]
          %v4375 = vld [vmem:[#allocation14 + $0x198] sm:$0xff]
          %v4376 = vld [vmem:[#allocation14 + $0x1a0] sm:$0xff]
          %v4377 = vld [vmem:[#allocation14 + $0x1a8] sm:$0xff]
          %v4378 = vld [vmem:[#allocation14 + $0x1b0] sm:$0xff]
          %v4379 = vld [vmem:[#allocation14 + $0x1b8] sm:$0xff]
          %v4380 = vld [vmem:[#allocation14 + $0x1c0] sm:$0xff]
          %v4381 = vld [vmem:[#allocation14 + $0x1c8] sm:$0xff]
          %v4382 = vld [vmem:[#allocation14 + $0x1d0] sm:$0xff]
          %v4383 = vld [vmem:[#allocation14 + $0x1d8] sm:$0xff]
          %v4384 = vld [vmem:[#allocation14 + $0x1e0] sm:$0xff]
          %v4385 = vld [vmem:[#allocation14 + $0x1e8] sm:$0xff]
          %v4386 = vld [vmem:[#allocation14 + $0x1f0] sm:$0xff]
          %v4387 = vld [vmem:[#allocation14 + $0x1f8] sm:$0xff]
          %v4388 = vld [vmem:[%s10] sm:$0x3]
          %v4453 = vunpack.c.l.b16 %v4324
          %v4454 = vunpack.c.h.b16 %v4324
          %v4455 = vunpack.c.l.b16 %v4325
          %v4456 = vunpack.c.h.b16 %v4325
          %v4457 = vunpack.c.l.b16 %v4326
          %v4458 = vunpack.c.h.b16 %v4326
          %v4459 = vunpack.c.l.b16 %v4327
          %v4460 = vunpack.c.h.b16 %v4327
          %v4461 = vunpack.c.l.b16 %v4328
          %v4462 = vunpack.c.h.b16 %v4328
          %v4463 = vunpack.c.l.b16 %v4329
          %v4464 = vunpack.c.h.b16 %v4329
          %v4465 = vunpack.c.l.b16 %v4330
          %v4466 = vunpack.c.h.b16 %v4330
          %v4467 = vunpack.c.l.b16 %v4331
          %v4468 = vunpack.c.h.b16 %v4331
          %v4469 = vunpack.c.l.b16 %v4332
          %v4470 = vunpack.c.h.b16 %v4332
          %v4471 = vunpack.c.l.b16 %v4333
          %v4472 = vunpack.c.h.b16 %v4333
          %v4473 = vunpack.c.l.b16 %v4334
          %v4474 = vunpack.c.h.b16 %v4334
          %v4475 = vunpack.c.l.b16 %v4335
          %v4476 = vunpack.c.h.b16 %v4335
          %v4477 = vunpack.c.l.b16 %v4336
          %v4478 = vunpack.c.h.b16 %v4336
          %v4479 = vunpack.c.l.b16 %v4337
          %v4480 = vunpack.c.h.b16 %v4337
          %v4481 = vunpack.c.l.b16 %v4338
          %v4482 = vunpack.c.h.b16 %v4338
          %v4483 = vunpack.c.l.b16 %v4339
          %v4484 = vunpack.c.h.b16 %v4339
          %v4485 = vunpack.c.l.b16 %v4340
          %v4486 = vunpack.c.h.b16 %v4340
          %v4487 = vunpack.c.l.b16 %v4341
          %v4488 = vunpack.c.h.b16 %v4341
          %v4489 = vunpack.c.l.b16 %v4342
          %v4490 = vunpack.c.h.b16 %v4342
          %v4491 = vunpack.c.l.b16 %v4343
          %v4492 = vunpack.c.h.b16 %v4343
          %v4493 = vunpack.c.l.b16 %v4344
          %v4494 = vunpack.c.h.b16 %v4344
          %v4495 = vunpack.c.l.b16 %v4345
          %v4496 = vunpack.c.h.b16 %v4345
          %v4497 = vunpack.c.l.b16 %v4346
          %v4498 = vunpack.c.h.b16 %v4346
          %v4499 = vunpack.c.l.b16 %v4347
          %v4500 = vunpack.c.h.b16 %v4347
          %v4501 = vunpack.c.l.b16 %v4348
          %v4502 = vunpack.c.h.b16 %v4348
          %v4503 = vunpack.c.l.b16 %v4349
          %v4504 = vunpack.c.h.b16 %v4349
          %v4505 = vunpack.c.l.b16 %v4350
          %v4506 = vunpack.c.h.b16 %v4350
          %v4507 = vunpack.c.l.b16 %v4351
          %v4508 = vunpack.c.h.b16 %v4351
          %v4509 = vunpack.c.l.b16 %v4352
          %v4510 = vunpack.c.h.b16 %v4352
          %v4511 = vunpack.c.l.b16 %v4353
          %v4512 = vunpack.c.h.b16 %v4353
          %v4513 = vunpack.c.l.b16 %v4354
          %v4514 = vunpack.c.h.b16 %v4354
          %v4515 = vunpack.c.l.b16 %v4355
          %v4516 = vunpack.c.h.b16 %v4355
          %v4517 = vunpack.c.l.b16 %v4356
          %v4518 = vunpack.c.h.b16 %v4356
          %v4519 = vunpack.c.l.b16 %v4357
          %v4520 = vunpack.c.h.b16 %v4357
          %v4521 = vunpack.c.l.b16 %v4358
          %v4522 = vunpack.c.h.b16 %v4358
          %v4523 = vunpack.c.l.b16 %v4359
          %v4524 = vunpack.c.h.b16 %v4359
          %v4525 = vunpack.c.l.b16 %v4360
          %v4526 = vunpack.c.h.b16 %v4360
          %v4527 = vunpack.c.l.b16 %v4361
          %v4528 = vunpack.c.h.b16 %v4361
          %v4529 = vunpack.c.l.b16 %v4362
          %v4530 = vunpack.c.h.b16 %v4362
          %v4531 = vunpack.c.l.b16 %v4363
          %v4532 = vunpack.c.h.b16 %v4363
          %v4533 = vunpack.c.l.b16 %v4364
          %v4534 = vunpack.c.h.b16 %v4364
          %v4535 = vunpack.c.l.b16 %v4365
          %v4536 = vunpack.c.h.b16 %v4365
          %v4537 = vunpack.c.l.b16 %v4366
          %v4538 = vunpack.c.h.b16 %v4366
          %v4539 = vunpack.c.l.b16 %v4367
          %v4540 = vunpack.c.h.b16 %v4367
          %v4541 = vunpack.c.l.b16 %v4368
          %v4542 = vunpack.c.h.b16 %v4368
          %v4543 = vunpack.c.l.b16 %v4369
          %v4544 = vunpack.c.h.b16 %v4369
          %v4545 = vunpack.c.l.b16 %v4370
          %v4546 = vunpack.c.h.b16 %v4370
          %v4547 = vunpack.c.l.b16 %v4371
          %v4548 = vunpack.c.h.b16 %v4371
          %v4549 = vunpack.c.l.b16 %v4372
          %v4550 = vunpack.c.h.b16 %v4372
          %v4551 = vunpack.c.l.b16 %v4373
          %v4552 = vunpack.c.h.b16 %v4373
          %v4553 = vunpack.c.l.b16 %v4374
          %v4554 = vunpack.c.h.b16 %v4374
          %v4555 = vunpack.c.l.b16 %v4375
          %v4556 = vunpack.c.h.b16 %v4375
          %v4557 = vunpack.c.l.b16 %v4376
          %v4558 = vunpack.c.h.b16 %v4376
          %v4559 = vunpack.c.l.b16 %v4377
          %v4560 = vunpack.c.h.b16 %v4377
          %v4561 = vunpack.c.l.b16 %v4378
          %v4562 = vunpack.c.h.b16 %v4378
          %v4563 = vunpack.c.l.b16 %v4379
          %v4564 = vunpack.c.h.b16 %v4379
          %v4565 = vunpack.c.l.b16 %v4380
          %v4566 = vunpack.c.h.b16 %v4380
          %v4567 = vunpack.c.l.b16 %v4381
          %v4568 = vunpack.c.h.b16 %v4381
          %v4569 = vunpack.c.l.b16 %v4382
          %v4570 = vunpack.c.h.b16 %v4382
          %v4571 = vunpack.c.l.b16 %v4383
          %v4572 = vunpack.c.h.b16 %v4383
          %v4573 = vunpack.c.l.b16 %v4384
          %v4574 = vunpack.c.h.b16 %v4384
          %v4575 = vunpack.c.l.b16 %v4385
          %v4576 = vunpack.c.h.b16 %v4385
          %v4577 = vunpack.c.l.b16 %v4386
          %v4578 = vunpack.c.h.b16 %v4386
          %v4579 = vunpack.c.l.b16 %v4387
          %v4580 = vunpack.c.h.b16 %v4387
          %v4581 = vpack.c.b16 %v4455, %v4453
          %v4582 = vpack.c.b16 %v4456, %v4454
          %v4583 = vpack.c.b16 %v4459, %v4457
          %v4584 = vpack.c.b16 %v4460, %v4458
          %v4585 = vpack.c.b16 %v4463, %v4461
          %v4586 = vpack.c.b16 %v4464, %v4462
          %v4587 = vpack.c.b16 %v4467, %v4465
          %v4588 = vpack.c.b16 %v4468, %v4466
          %v4589 = vpack.c.b16 %v4471, %v4469
          %v4590 = vpack.c.b16 %v4472, %v4470
          %v4591 = vpack.c.b16 %v4475, %v4473
          %v4592 = vpack.c.b16 %v4476, %v4474
          %v4593 = vpack.c.b16 %v4479, %v4477
          %v4594 = vpack.c.b16 %v4480, %v4478
          %v4595 = vpack.c.b16 %v4483, %v4481
          %v4596 = vpack.c.b16 %v4484, %v4482
          %v4597 = vpack.c.b16 %v4487, %v4485
          %v4598 = vpack.c.b16 %v4488, %v4486
          %v4599 = vpack.c.b16 %v4491, %v4489
          %v4600 = vpack.c.b16 %v4492, %v4490
          %v4601 = vpack.c.b16 %v4495, %v4493
          %v4602 = vpack.c.b16 %v4496, %v4494
          %v4603 = vpack.c.b16 %v4499, %v4497
          %v4604 = vpack.c.b16 %v4500, %v4498
          %v4605 = vpack.c.b16 %v4503, %v4501
          %v4606 = vpack.c.b16 %v4504, %v4502
          %v4607 = vpack.c.b16 %v4507, %v4505
          %v4608 = vpack.c.b16 %v4508, %v4506
          %v4609 = vpack.c.b16 %v4511, %v4509
          %v4610 = vpack.c.b16 %v4512, %v4510
          %v4611 = vpack.c.b16 %v4515, %v4513
          %v4612 = vpack.c.b16 %v4516, %v4514
          %v4613 = vpack.c.b16 %v4519, %v4517
          %v4614 = vpack.c.b16 %v4520, %v4518
          %v4615 = vpack.c.b16 %v4523, %v4521
          %v4616 = vpack.c.b16 %v4524, %v4522
          %v4617 = vpack.c.b16 %v4527, %v4525
          %v4618 = vpack.c.b16 %v4528, %v4526
          %v4619 = vpack.c.b16 %v4531, %v4529
          %v4620 = vpack.c.b16 %v4532, %v4530
          %v4621 = vpack.c.b16 %v4535, %v4533
          %v4622 = vpack.c.b16 %v4536, %v4534
          %v4623 = vpack.c.b16 %v4539, %v4537
          %v4624 = vpack.c.b16 %v4540, %v4538
          %v4625 = vpack.c.b16 %v4543, %v4541
          %v4626 = vpack.c.b16 %v4544, %v4542
          %v4627 = vpack.c.b16 %v4547, %v4545
          %v4628 = vpack.c.b16 %v4548, %v4546
          %v4629 = vpack.c.b16 %v4551, %v4549
          %v4630 = vpack.c.b16 %v4552, %v4550
          %v4631 = vpack.c.b16 %v4555, %v4553
          %v4632 = vpack.c.b16 %v4556, %v4554
          %v4633 = vpack.c.b16 %v4559, %v4557
          %v4634 = vpack.c.b16 %v4560, %v4558
          %v4635 = vpack.c.b16 %v4563, %v4561
          %v4636 = vpack.c.b16 %v4564, %v4562
          %v4637 = vpack.c.b16 %v4567, %v4565
          %v4638 = vpack.c.b16 %v4568, %v4566
          %v4639 = vpack.c.b16 %v4571, %v4569
          %v4640 = vpack.c.b16 %v4572, %v4570
          %v4641 = vpack.c.b16 %v4575, %v4573
          %v4642 = vpack.c.b16 %v4576, %v4574
          %v4643 = vpack.c.b16 %v4579, %v4577
          %v4644 = vpack.c.b16 %v4580, %v4578
          %v4710 = vlaneseq
          %v4711 = vshrl.u32 %v4710, 7
          %v4712 = vsub.s32 0, %v4711
          %v4713 = vrot.slane %v4388, %v4712
          %v4714 = vlaneseq
          %v4715 = vshrl.u32 %v4714, 7
          %v4716 = vsub.s32 1, %v4715
          %v4717 = vrot.slane %v4388, %v4716
          %4720 = vmatprep.subr.bf16.mxu0 %v4582
          %4721 = vmatpush1.bf16.msra.mxu0 %v4581
          %4722 = vmatprep.subr.bf16.mxu0 %v4584
          %4723 = vmatpush1.bf16.msra.mxu0 %v4583
          %4724 = vmatprep.subr.bf16.mxu0 %v4586
          %4725 = vmatpush1.bf16.msra.mxu0 %v4585
          %4726 = vmatprep.subr.bf16.mxu0 %v4588
          %4727 = vmatpush1.bf16.msra.mxu0 %v4587
          %4728 = vmatprep.subr.bf16.mxu0 %v4590
          %4729 = vmatpush1.bf16.msra.mxu0 %v4589
          %4730 = vmatprep.subr.bf16.mxu0 %v4592
          %4731 = vmatpush1.bf16.msra.mxu0 %v4591
          %4732 = vmatprep.subr.bf16.mxu0 %v4594
          %4733 = vmatpush1.bf16.msra.mxu0 %v4593
          %4734 = vmatprep.subr.bf16.mxu0 %v4596
          %4735 = vmatpush1.bf16.msra.mxu0 %v4595
          %4736 = vmatprep.subr.bf16.mxu0 %v4598
          %4737 = vmatpush1.bf16.msra.mxu0 %v4597
          %4738 = vmatprep.subr.bf16.mxu0 %v4600
          %4739 = vmatpush1.bf16.msra.mxu0 %v4599
          %4740 = vmatprep.subr.bf16.mxu0 %v4602
          %4741 = vmatpush1.bf16.msra.mxu0 %v4601
          %4742 = vmatprep.subr.bf16.mxu0 %v4604
          %4743 = vmatpush1.bf16.msra.mxu0 %v4603
          %4744 = vmatprep.subr.bf16.mxu0 %v4606
          %4745 = vmatpush1.bf16.msra.mxu0 %v4605
          %4746 = vmatprep.subr.bf16.mxu0 %v4608
          %4747 = vmatpush1.bf16.msra.mxu0 %v4607
          %4748 = vmatprep.subr.bf16.mxu0 %v4610
          %4749 = vmatpush1.bf16.msra.mxu0 %v4609
          %4750 = vmatprep.subr.bf16.mxu0 %v4612
          %4751 = vmatpush1.bf16.msra.mxu0 %v4611
          %4752 = vmatprep.mubr.bf16.mxu0 %v4321
          %4753 = vmatmul.mubr.bf16.gmra.mrb[0].mxu0 %v4320
          %v4754 = vpop.f32.mrb[0].mxu0
          %v4755 = vadd.f32 %v4713, %v4754
          %v4756 = vpop.f32.mrb[0].mxu0
          %v4757 = vadd.f32 %v4717, %v4756
          %v4758 = vpop.f32.mrb[0].mxu0
          %v4759 = vpop.f32.mrb[0].mxu0
          %4760 = vdwg.mxu0
          %4761 = vmatprep.subr.bf16.mxu0 %v4614
          %4762 = vmatpush1.bf16.msra.mxu0 %v4613
          %4763 = vmatprep.subr.bf16.mxu0 %v4616
          %4764 = vmatpush1.bf16.msra.mxu0 %v4615
          %4765 = vmatprep.subr.bf16.mxu0 %v4618
          %4766 = vmatpush1.bf16.msra.mxu0 %v4617
          %4767 = vmatprep.subr.bf16.mxu0 %v4620
          %4768 = vmatpush1.bf16.msra.mxu0 %v4619
          %4769 = vmatprep.subr.bf16.mxu0 %v4622
          %4770 = vmatpush1.bf16.msra.mxu0 %v4621
          %4771 = vmatprep.subr.bf16.mxu0 %v4624
          %4772 = vmatpush1.bf16.msra.mxu0 %v4623
          %4773 = vmatprep.subr.bf16.mxu0 %v4626
          %4774 = vmatpush1.bf16.msra.mxu0 %v4625
          %4775 = vmatprep.subr.bf16.mxu0 %v4628
          %4776 = vmatpush1.bf16.msra.mxu0 %v4627
          %4777 = vmatprep.subr.bf16.mxu0 %v4630
          %4778 = vmatpush1.bf16.msra.mxu0 %v4629
          %4779 = vmatprep.subr.bf16.mxu0 %v4632
          %4780 = vmatpush1.bf16.msra.mxu0 %v4631
          %4781 = vmatprep.subr.bf16.mxu0 %v4634
          %4782 = vmatpush1.bf16.msra.mxu0 %v4633
          %4783 = vmatprep.subr.bf16.mxu0 %v4636
          %4784 = vmatpush1.bf16.msra.mxu0 %v4635
          %4785 = vmatprep.subr.bf16.mxu0 %v4638
          %4786 = vmatpush1.bf16.msra.mxu0 %v4637
          %4787 = vmatprep.subr.bf16.mxu0 %v4640
          %4788 = vmatpush1.bf16.msra.mxu0 %v4639
          %4789 = vmatprep.subr.bf16.mxu0 %v4642
          %4790 = vmatpush1.bf16.msra.mxu0 %v4641
          %4791 = vmatprep.subr.bf16.mxu0 %v4644
          %4792 = vmatpush1.bf16.msra.mxu0 %v4643
          %4793 = vmatprep.mubr.bf16.mxu0 %v4323
          %4794 = vmatmul.mubr.bf16.gmra.mrb[0].mxu0 %v4322
          %v4795 = vpop.f32.mrb[0].mxu0
          %v4796 = vadd.f32 %v4755, %v4795
          %v4797 = vpop.f32.mrb[0].mxu0
          %v4798 = vadd.f32 %v4757, %v4797
          %v4799 = vpop.f32.mrb[0].mxu0
          %v4800 = vpop.f32.mrb[0].mxu0
          %4801 = vdwg.mxu0
          %v4802 = vmax.f32 %v4796, 0.0
          %v4803 = vmax.f32 %v4798, 0.0
          %v4804 = vpack.c.bf16 %v4802, %v4802
          %v4805 = vpack.c.bf16 %v4803, %v4803
          %v4806 = vld [vmem:[#allocation15] sm:$0xf]
          %v4807 = vld [vmem:[#allocation15 + $0x4] sm:$0xf]
          %v4808 = vld [vmem:[#allocation15 + $0x8] sm:$0xf]
          %v4809 = vld [vmem:[#allocation15 + $0xc] sm:$0xf]
          %v4810 = vld [vmem:[#allocation15 + $0x10] sm:$0xf]
          %v4811 = vld [vmem:[#allocation15 + $0x14] sm:$0xf]
          %v4812 = vld [vmem:[#allocation15 + $0x18] sm:$0xf]
          %v4813 = vld [vmem:[#allocation15 + $0x1c] sm:$0xf]
          %v4814 = vld [vmem:[#allocation15 + $0x20] sm:$0xf]
          %v4815 = vld [vmem:[#allocation15 + $0x24] sm:$0xf]
          %v4816 = vld [vmem:[#allocation15 + $0x28] sm:$0xf]
          %v4817 = vld [vmem:[#allocation15 + $0x2c] sm:$0xf]
          %v4818 = vld [vmem:[#allocation15 + $0x30] sm:$0xf]
          %v4819 = vld [vmem:[#allocation15 + $0x34] sm:$0xf]
          %v4820 = vld [vmem:[#allocation15 + $0x38] sm:$0xf]
          %v4821 = vld [vmem:[#allocation15 + $0x3c] sm:$0xf]
          %v4822 = vld [vmem:[#allocation15 + $0x40] sm:$0xf]
          %v4823 = vld [vmem:[#allocation15 + $0x44] sm:$0xf]
          %v4824 = vld [vmem:[#allocation15 + $0x48] sm:$0xf]
          %v4825 = vld [vmem:[#allocation15 + $0x4c] sm:$0xf]
          %v4826 = vld [vmem:[#allocation15 + $0x50] sm:$0xf]
          %v4827 = vld [vmem:[#allocation15 + $0x54] sm:$0xf]
          %v4828 = vld [vmem:[#allocation15 + $0x58] sm:$0xf]
          %v4829 = vld [vmem:[#allocation15 + $0x5c] sm:$0xf]
          %v4830 = vld [vmem:[#allocation15 + $0x60] sm:$0xf]
          %v4831 = vld [vmem:[#allocation15 + $0x64] sm:$0xf]
          %v4832 = vld [vmem:[#allocation15 + $0x68] sm:$0xf]
          %v4833 = vld [vmem:[#allocation15 + $0x6c] sm:$0xf]
          %v4834 = vld [vmem:[#allocation15 + $0x70] sm:$0xf]
          %v4835 = vld [vmem:[#allocation15 + $0x74] sm:$0xf]
          %v4836 = vld [vmem:[#allocation15 + $0x78] sm:$0xf]
          %v4837 = vld [vmem:[#allocation15 + $0x7c] sm:$0xf]
          %v4838 = vld [vmem:[%s12] sm:$0x1]
          %v4871 = vunpack.c.l.b16 %v4806
          %v4872 = vunpack.c.l.b16 %v4807
          %v4873 = vunpack.c.l.b16 %v4808
          %v4874 = vunpack.c.l.b16 %v4809
          %v4875 = vunpack.c.l.b16 %v4810
          %v4876 = vunpack.c.l.b16 %v4811
          %v4877 = vunpack.c.l.b16 %v4812
          %v4878 = vunpack.c.l.b16 %v4813
          %v4879 = vunpack.c.l.b16 %v4814
          %v4880 = vunpack.c.l.b16 %v4815
          %v4881 = vunpack.c.l.b16 %v4816
          %v4882 = vunpack.c.l.b16 %v4817
          %v4883 = vunpack.c.l.b16 %v4818
          %v4884 = vunpack.c.l.b16 %v4819
          %v4885 = vunpack.c.l.b16 %v4820
          %v4886 = vunpack.c.l.b16 %v4821
          %v4887 = vunpack.c.l.b16 %v4822
          %v4888 = vunpack.c.l.b16 %v4823
          %v4889 = vunpack.c.l.b16 %v4824
          %v4890 = vunpack.c.l.b16 %v4825
          %v4891 = vunpack.c.l.b16 %v4826
          %v4892 = vunpack.c.l.b16 %v4827
          %v4893 = vunpack.c.l.b16 %v4828
          %v4894 = vunpack.c.l.b16 %v4829
          %v4895 = vunpack.c.l.b16 %v4830
          %v4896 = vunpack.c.l.b16 %v4831
          %v4897 = vunpack.c.l.b16 %v4832
          %v4898 = vunpack.c.l.b16 %v4833
          %v4899 = vunpack.c.l.b16 %v4834
          %v4900 = vunpack.c.l.b16 %v4835
          %v4901 = vunpack.c.l.b16 %v4836
          %v4902 = vunpack.c.l.b16 %v4837
          %v4903 = vpack.c.b16 %v4872, %v4871
          %v4904 = vpack.c.b16 %v4874, %v4873
          %v4905 = vpack.c.b16 %v4876, %v4875
          %v4906 = vpack.c.b16 %v4878, %v4877
          %v4907 = vpack.c.b16 %v4880, %v4879
          %v4908 = vpack.c.b16 %v4882, %v4881
          %v4909 = vpack.c.b16 %v4884, %v4883
          %v4910 = vpack.c.b16 %v4886, %v4885
          %v4911 = vpack.c.b16 %v4888, %v4887
          %v4912 = vpack.c.b16 %v4890, %v4889
          %v4913 = vpack.c.b16 %v4892, %v4891
          %v4914 = vpack.c.b16 %v4894, %v4893
          %v4915 = vpack.c.b16 %v4896, %v4895
          %v4916 = vpack.c.b16 %v4898, %v4897
          %v4917 = vpack.c.b16 %v4900, %v4899
          %v4918 = vpack.c.b16 %v4902, %v4901
          %4935 = vmatprep.subr.bf16.mxu0 0
          %4936 = vmatpush1.bf16.msra.mxu0 %v4903
          %4937 = vmatprep.subr.bf16.mxu0 0
          %4938 = vmatpush1.bf16.msra.mxu0 %v4904
          %4939 = vmatprep.subr.bf16.mxu0 0
          %4940 = vmatpush1.bf16.msra.mxu0 %v4905
          %4941 = vmatprep.subr.bf16.mxu0 0
          %4942 = vmatpush1.bf16.msra.mxu0 %v4906
          %4943 = vmatprep.subr.bf16.mxu0 0
          %4944 = vmatpush1.bf16.msra.mxu0 %v4907
          %4945 = vmatprep.subr.bf16.mxu0 0
          %4946 = vmatpush1.bf16.msra.mxu0 %v4908
          %4947 = vmatprep.subr.bf16.mxu0 0
          %4948 = vmatpush1.bf16.msra.mxu0 %v4909
          %4949 = vmatprep.subr.bf16.mxu0 0
          %4950 = vmatpush1.bf16.msra.mxu0 %v4910
          %4951 = vmatprep.subr.bf16.mxu0 0
          %4952 = vmatpush1.bf16.msra.mxu0 %v4911
          %4953 = vmatprep.subr.bf16.mxu0 0
          %4954 = vmatpush1.bf16.msra.mxu0 %v4912
          %4955 = vmatprep.subr.bf16.mxu0 0
          %4956 = vmatpush1.bf16.msra.mxu0 %v4913
          %4957 = vmatprep.subr.bf16.mxu0 0
          %4958 = vmatpush1.bf16.msra.mxu0 %v4914
          %4959 = vmatprep.subr.bf16.mxu0 0
          %4960 = vmatpush1.bf16.msra.mxu0 %v4915
          %4961 = vmatprep.subr.bf16.mxu0 0
          %4962 = vmatpush1.bf16.msra.mxu0 %v4916
          %4963 = vmatprep.subr.bf16.mxu0 0
          %4964 = vmatpush1.bf16.msra.mxu0 %v4917
          %4965 = vmatprep.subr.bf16.mxu0 0
          %4966 = vmatpush1.bf16.msra.mxu0 %v4918
          %4967 = vmatprep.mubr.bf16.mxu0 %v4805
          %4968 = vmatmul.mubr.bf16.gmra.mrb[0].mxu0 %v4804
          %v4969 = vpop.f32.mrb[0].mxu0
          %v4970 = vadd.f32 %v4838, %v4969
          %v4971 = vpop.f32.mrb[0].mxu0
          %v4972 = vpop.f32.mrb[0].mxu0
          %v4973 = vpop.f32.mrb[0].mxu0
          %4974 = vdwg.mxu0
          %4975 = vst [vmem:[%s567] sm:$0x1] %v4970
        $region112: #{tpu_custom_call.1} parent=71 // pred_fallthru
          _
        %s4976 = sand.u32 %s334, 1
        %s4977 = scalar_lea.sflag [#allocation5], %s4976
        %s4978 = sand.u32 %s334, 1
        %s4979 = scalar_lea.vmem [#allocation17], %s4978
        // Predicated region
        $region113: #{tpu_custom_call.1} parent=71 // pred_check
          %p4980 = pneg %p344
        $region114: #{tpu_custom_call.1} parent=71 // pred_check_branch
          %4982 = sbr.rel (%p4980) target = $region116
        $region115: #{tpu_custom_call.1} parent=71 // pred_region
          %s4984 = ssub.s32 16, 16
          %4985 = vsyncadd %s4977, %s4984
          %s4986 = smul.addr %s38, 16
          %s4987 = scalar_lea.hbm %s13, %s4986
          %s4989 = sshll.u32 %s4979, 4
          %s4990 = int_to_ptr.vmem [resolvable:$true] %s4989
          %4992 = dma.vmem_to_hbm [thread:$0]  %s4990, 16, %s4987, %s4977
        $region116: #{tpu_custom_call.1} parent=71 // pred_fallthru
          _
      $region72: #{tpu_custom_call.1} parent=5 // pred_fallthru
        _
      %p4993 = scmp.le.s32.totalorder 2, %s29
      // Predicated region
      $region117: #{tpu_custom_call.1} parent=5 // pred_check
        %p4994 = pneg %p4993
      $region118: #{tpu_custom_call.1} parent=5 // pred_check_branch
        %4996 = sbr.rel (%p4994) target = $region120
      $region119: #{tpu_custom_call.1} parent=5 // pred_region
        %s4997 = ssub.s32 %s29, 2
        // Predicated region
        $region121: #{tpu_custom_call.1} parent=119 // pred_check
          %p4998 = pneg %p350
        $region122: #{tpu_custom_call.1} parent=119 // pred_check_branch
          %5000 = sbr.rel (%p4998) target = $region124
        $region123: #{tpu_custom_call.1} parent=119 // pred_region
          %s5001 = sand.u32 %s335, 1
          %s5002 = scalar_lea.sflag [#allocation5], %s5001
          %s5003 = sand.u32 %s335, 1
          %s5004 = scalar_lea.vmem [#allocation17], %s5003
          %5005 = dma.done %s5002, 16
        $region124: #{tpu_custom_call.1} parent=119 // pred_fallthru
          _
      $region120: #{tpu_custom_call.1} parent=5 // pred_fallthru
        _
    $region6: #{tpu_custom_call.1} parent=1 // loop_footer
      %s33 = sadd.s32 1, %s29
    $region7: #{tpu_custom_call.1} parent=1 // loop_footer_branch
      %28 = sbr.rel target = $region3
    $region8: #{tpu_custom_call.1} parent=1 // loop_exit
      _
    %5006 = vsyncpa [#allocation4], 1
    %s5007 = scalar_lea.sflag [#allocation4], 1
    %5008 = vsyncpa %s5007, 1
    %5009 = vsyncpa [#allocation7], 1
    %5010 = vsyncpa [#allocation10], 1
    %5011 = vsyncpa [#allocation13], 1
    %5012 = vsyncpa [#allocation16], 1
    %5013 = vsyncpa [#allocation5], 1
    %s5014 = scalar_lea.sflag [#allocation5], 1
    %5015 = vsyncpa %s5014, 1

</llo_original>
